<compile_context>
chip_gen: v6e
topology: v6e:2x2x1
jax: 0.10.0
libtpu: 0.0.40
codegen_flags: <defaults>
</compile_context>

<pallas_src>
import math
import functools

import jax
import jax.numpy as jnp
from jax.experimental import pallas as pl
from jax.experimental.pallas import tpu as pltpu

BN_EPS = 1e-5
LANE = 128
GATE_HIDDEN = 10
GATE_HIDDEN_P = 128
# 48 MiB: ample on v5e/v6e (128 MiB physical VMEM) and still safe under v7x's 64 MiB.
VMEM_LIMIT = 48 * 1024 * 1024
MAX_ROW_TILE = 1024


def _round_up(x, m):
    return ((x + m - 1) // m) * m


def _pick_row_tile(total, max_tile=MAX_ROW_TILE):
    if total <= max_tile:
        return total
    for cand in range(max_tile, 7, -1):
        if cand % 8 == 0 and total % cand == 0:
            return cand
    # TODO(synk): ragged last tile (pl.cdiv grid + masked stats) for pathological extents.
    return total


def _full_spec(shape):
    nd = len(shape)
    return pl.BlockSpec(shape, lambda i, _nd=nd: (0,) * _nd)


# ---------------------------- Pallas kernels ----------------------------

def _finalize_bn(ss_ref, gb_ref, m_total):
    # ss_ref holds [sum; sumsq]; rewrite in place as [scale; shift] folded with gamma/beta.
    s = ss_ref[0:1, :]
    sq = ss_ref[1:2, :]
    mean = s * (1.0 / m_total)
    var = sq * (1.0 / m_total) - mean * mean
    scale = gb_ref[0:1, :] * jax.lax.rsqrt(var + BN_EPS)
    shift = gb_ref[1:2, :] - mean * scale
    ss_ref[0:1, :] = scale
    ss_ref[1:2, :] = shift


def _fused_conv1x1_kernel(xin_ref, ssb_ref, w_ref, gb_ref,
                          y_ref, ss_ref, gap_ref, *,
                          m_total, inv_hw, apply_prev_relu):
    # fused: apply(previous layer BN*gate [+ReLU]) -> 1x1 conv -> BN stats + gate GAP.
    b, t = pl.program_id(0), pl.program_id(1)
    nb, nt = pl.num_programs(0), pl.num_programs(1)

    @pl.when(jnp.logical_and(b == 0, t == 0))
    def _init_ss():
        ss_ref[...] = jnp.zeros_like(ss_ref)

    @pl.when(t == 0)
    def _init_gap():
        gap_ref[...] = jnp.zeros_like(gap_ref)

    sb = ssb_ref[0]                                                  # (2, cin_p) f32
    x = xin_ref[0].astype(jnp.float32) * sb[0:1, :] + sb[1:2, :]
    if apply_prev_relu:
        x = jnp.maximum(x, 0.0)

    # gate GAP(|applied input|) for THIS layer, from the already-resident input tile.
    gap_ref[0] += jnp.sum(jnp.abs(x), axis=0, keepdims=True) * inv_hw

    y = jnp.dot(x.astype(jnp.bfloat16), w_ref[...],
                preferred_element_type=jnp.float32)                  # (t_hw, cout_p) f32
    y_ref[0] = y.astype(y_ref.dtype)                                 # bf16 store

    # global BN statistics (training-mode batch stats over all N*H*W rows), from f32 acc.
    ss_ref[0:1, :] += jnp.sum(y, axis=0, keepdims=True)
    ss_ref[1:2, :] += jnp.sum(y * y, axis=0, keepdims=True)

    @pl.when(jnp.logical_and(b == nb - 1, t == nt - 1))
    def _finalize():
        _finalize_bn(ss_ref, gb_ref, m_total)


def _fused_conv3x3_kernel(xin_ref, ssb_ref, w_ref, gb_ref,
                          y_ref, ss_ref, gap_ref, *,
                          H, W, cin_p, m_total, inv_hw, apply_prev_relu):
    # fused: apply(previous BN*gate + ReLU) -> 3x3/stride-1/pad-1 conv -> stats + GAP.
    # No padding / im2col: each tap is an XLU sublane roll of the flat sample + boundary mask.
    b = pl.program_id(0)
    nb = pl.num_programs(0)
    HW = H * W

    @pl.when(b == 0)
    def _init():
        ss_ref[...] = jnp.zeros_like(ss_ref)

    sb = ssb_ref[0]                                                  # (2, cin_p) f32
    x = xin_ref[0].astype(jnp.float32) * sb[0:1, :] + sb[1:2, :]
    if apply_prev_relu:
        x = jnp.maximum(x, 0.0)

    gap_ref[0] = jnp.sum(jnp.abs(x), axis=0, keepdims=True) * inv_hw

    r = jax.lax.broadcasted_iota(jnp.int32, (HW, 1), 0)              # flat pixel index
    j = jnp.remainder(r, W)                                          # column index

    cout_p = y_ref.shape[2]
    acc = jnp.zeros((HW, cout_p), jnp.float32)
    for di in (-1, 0, 1):
        for dj in (-1, 0, 1):
            off = di * W + dj
            tap = (di + 1) * 3 + (dj + 1)
            shifted = x if off == 0 else pltpu.roll(x, shift=(-off) % HW, axis=0)
            if di == -1:
                row_ok = r >= W
            elif di == 1:
                row_ok = r < (HW - W)
            else:
                row_ok = None
            if dj == -1:
                col_ok = j >= 1
            elif dj == 1:
                col_ok = j < (W - 1)
            else:
                col_ok = None
            if row_ok is None and col_ok is None:
                masked = shifted
            else:
                if row_ok is None:
                    valid = col_ok
                elif col_ok is None:
                    valid = row_ok
                else:
                    valid = jnp.logical_and(row_ok, col_ok)
                masked = jnp.where(valid, shifted, 0.0)
            wt = w_ref[tap * cin_p:(tap + 1) * cin_p, :]             # (cin_p, cout_p) bf16
            acc = acc + jnp.dot(masked.astype(jnp.bfloat16), wt,
                                preferred_element_type=jnp.float32)

    y_ref[0] = acc.astype(y_ref.dtype)                               # compact bf16 store

    ss_ref[0:1, :] += jnp.sum(acc, axis=0, keepdims=True)
    ss_ref[1:2, :] += jnp.sum(acc * acc, axis=0, keepdims=True)

    @pl.when(b == nb - 1)
    def _finalize():
        _finalize_bn(ss_ref, gb_ref, m_total)


def _apply_kernel(y_ref, ssb_ref, res_ref, o_ref, *, apply_relu):
    # final: y * (scale*gate) + (shift*gate) + residual [+ relu]
    sb = ssb_ref[0]                                                  # (2, cout_p)
    y = y_ref[0].astype(jnp.float32) * sb[0:1, :] + sb[1:2, :]
    y = y + res_ref[0].astype(jnp.float32)
    if apply_relu:
        y = jnp.maximum(y, 0.0)
    o_ref[0] = y.astype(o_ref.dtype)


def _gate_mlp_kernel(gap_ref, w1_ref, b1_ref, w2_ref, b2_ref, o_ref):
    h = jnp.dot(gap_ref[...], w1_ref[...], preferred_element_type=jnp.float32) + b1_ref[...]
    h = jnp.maximum(h, 0.0)
    g = jnp.dot(h, w2_ref[...], preferred_element_type=jnp.float32) + b2_ref[...]
    o_ref[...] = 1.5 * jax.nn.sigmoid(g)


# -------------------------- pallas_call wrappers -------------------------

def _fused_conv1x1_call(x3, ssb, w, gb, apply_prev_relu):
    N, HW, cin_p = x3.shape
    cout_p = w.shape[1]
    t_hw = _pick_row_tile(HW)
    T = HW // t_hw

    kernel = functools.partial(_fused_conv1x1_kernel,
                               m_total=float(N * HW), inv_hw=1.0 / HW,
                               apply_prev_relu=apply_prev_relu)

    return pl.pallas_call(
        kernel,
        out_shape=(jax.ShapeDtypeStruct((N, HW, cout_p), jnp.bfloat16),
                   jax.ShapeDtypeStruct((2, cout_p), jnp.float32),
                   jax.ShapeDtypeStruct((N, 1, cin_p), jnp.float32)),
        grid=(N, T),
        in_specs=[pl.BlockSpec((1, t_hw, cin_p), lambda b, t: (b, t, 0)),
                  pl.BlockSpec((1, 2, cin_p), lambda b, t: (b, 0, 0)),
                  pl.BlockSpec((cin_p, cout_p), lambda b, t: (0, 0)),
                  pl.BlockSpec((2, cout_p), lambda b, t: (0, 0))],
        out_specs=(pl.BlockSpec((1, t_hw, cout_p), lambda b, t: (b, t, 0)),
                   pl.BlockSpec((2, cout_p), lambda b, t: (0, 0)),
                   pl.BlockSpec((1, 1, cin_p), lambda b, t: (b, 0, 0))),
        compiler_params=pltpu.CompilerParams(
            dimension_semantics=("arbitrary", "arbitrary"),
            vmem_limit_bytes=VMEM_LIMIT),
    )(x3, ssb, w, gb)


def _fused_conv3x3_call(x3, ssb, w, gb, H, W, apply_prev_relu):
    N, HW, cin_p = x3.shape
    assert HW == H * W
    cout_p = w.shape[1]

    kernel = functools.partial(_fused_conv3x3_kernel, H=H, W=W, cin_p=cin_p,
                               m_total=float(N * H * W), inv_hw=1.0 / (H * W),
                               apply_prev_relu=apply_prev_relu)

    return pl.pallas_call(
        kernel,
        out_shape=(jax.ShapeDtypeStruct((N, HW, cout_p), jnp.bfloat16),
                   jax.ShapeDtypeStruct((2, cout_p), jnp.float32),
                   jax.ShapeDtypeStruct((N, 1, cin_p), jnp.float32)),
        grid=(N,),
        in_specs=[pl.BlockSpec((1, HW, cin_p), lambda b: (b, 0, 0)),
                  pl.BlockSpec((1, 2, cin_p), lambda b: (b, 0, 0)),
                  pl.BlockSpec((9 * cin_p, cout_p), lambda b: (0, 0)),
                  pl.BlockSpec((2, cout_p), lambda b: (0, 0))],
        out_specs=(pl.BlockSpec((1, HW, cout_p), lambda b: (b, 0, 0)),
                   pl.BlockSpec((2, cout_p), lambda b: (0, 0)),
                   pl.BlockSpec((1, 1, cin_p), lambda b: (b, 0, 0))),
        compiler_params=pltpu.CompilerParams(
            dimension_semantics=("arbitrary",),
            vmem_limit_bytes=VMEM_LIMIT),
    )(x3, ssb, w, gb)


def _apply_call(y3, ssb, res3, apply_relu, out_dtype):
    N, HW, cout_p = y3.shape
    t_hw = _pick_row_tile(HW)
    T = HW // t_hw

    kernel = functools.partial(_apply_kernel, apply_relu=apply_relu)

    return pl.pallas_call(
        kernel,
        out_shape=jax.ShapeDtypeStruct((N, HW, cout_p), out_dtype),
        grid=(N, T),
        in_specs=[pl.BlockSpec((1, t_hw, cout_p), lambda b, t: (b, t, 0)),
                  pl.BlockSpec((1, 2, cout_p), lambda b, t: (b, 0, 0)),
                  pl.BlockSpec((1, t_hw, cout_p), lambda b, t: (b, t, 0))],
        out_specs=pl.BlockSpec((1, t_hw, cout_p), lambda b, t: (b, t, 0)),
        compiler_params=pltpu.CompilerParams(
            dimension_semantics=("parallel", "parallel"),
            vmem_limit_bytes=VMEM_LIMIT),
    )(y3, ssb, res3)


def gate_mlp(gap, w1, b1, w2, b2):
    N, cin_p = gap.shape
    hd = w1.shape[1]
    cout_p = w2.shape[1]
    return pl.pallas_call(
        _gate_mlp_kernel,
        out_shape=jax.ShapeDtypeStruct((N, cout_p), jnp.float32),
        grid=(1,),
        in_specs=[_full_spec((N, cin_p)), _full_spec((cin_p, hd)), _full_spec((1, hd)),
                  _full_spec((hd, cout_p)), _full_spec((1, cout_p))],
        out_specs=_full_spec((N, cout_p)),
        compiler_params=pltpu.CompilerParams(dimension_semantics=("arbitrary",),
                                             vmem_limit_bytes=VMEM_LIMIT),
    )(gap, w1, b1, w2, b2)


# ------------------------------ JAX glue ---------------------------------

def _gate_and_fold(gap, p, ratios, scale_shift):
    # gate MLP (Pallas) -> per-sample top-k channel mask -> fold with BN scale/shift.
    N = gap.shape[0]
    cout = p["cout"]
    cout_p = p["w_conv"].shape[-1]

    gate_out = gate_mlp(gap, p["w1"], p["b1"], p["w2"], p["b2"])[:, :cout]   # (N, cout)
    topk = jnp.round(ratios * cout).astype(jnp.int32)

    # rank of each channel in ascending order (single argsort + scatter; exact reference
    # semantics of argsort(argsort(x)) without a second full sort on the critical path).
    order = jnp.argsort(gate_out, axis=1)
    ranks = jnp.zeros((N, cout), jnp.int32).at[
        jnp.arange(N)[:, None], order].set(
        jnp.broadcast_to(jnp.arange(cout, dtype=jnp.int32), (N, cout)))
    mask = ranks > (cout - 1 - topk[:, None])
    active = gate_out * mask.astype(jnp.float32)
    active_p = jnp.pad(active, ((0, 0), (0, cout_p - cout)))                 # (N, cout_p)

    sc = active_p * scale_shift[0:1, :]
    sh = active_p * scale_shift[1:2, :]
    return jnp.stack([sc, sh], axis=1)                                       # (N, 2, cout_p)


def bottleneck_forward(x_nchw, ratios, params, stride=1):
    if stride != 1:
        raise NotImplementedError("Bottleneck residual path requires stride == 1")

    x = jnp.transpose(x_nchw, (0, 2, 3, 1)).astype(jnp.float32)              # NCHW -> NHWC
    N, H, W, cin = x.shape
    p1, p2, p3 = params["c1"], params["c2"], params["c3"]
    cin_p = p1["w_conv"].shape[0]
    cout3 = p3["cout"]
    cout3_p = p3["w_conv"].shape[1]
    assert cin_p == cout3_p, "residual path requires inplanes == planes * 4"

    x_pad = jnp.pad(x, ((0, 0), (0, 0), (0, 0), (0, cin_p - cin)))
    x3_bf = x_pad.astype(jnp.bfloat16).reshape(N, H * W, cin_p)              # conv input
    residual3 = x_pad.reshape(N, H * W, cin_p)                               # f32 residual

    # identity "previous apply" for the first layer (scale=1, shift=0, no relu)
    ssb0 = jnp.concatenate([jnp.ones((N, 1, cin_p), jnp.float32),
                            jnp.zeros((N, 1, cin_p), jnp.float32)], axis=1)

    # layer 1: 1x1 conv
    y1, ss1, gap1 = _fused_conv1x1_call(x3_bf, ssb0, p1["w_conv"], p1["gb"],
                                        apply_prev_relu=False)
    ssb1 = _gate_and_fold(gap1.reshape(N, -1), p1, ratios, ss1)

    # layer 2: apply(c1)+ReLU fused into the 3x3 conv
    y2, ss2, gap2 = _fused_conv3x3_call(y1, ssb1, p2["w_conv"], p2["gb"], H, W,
                                        apply_prev_relu=True)
    ssb2 = _gate_and_fold(gap2.reshape(N, -1), p2, ratios, ss2)

    # layer 3: apply(c2)+ReLU fused into the 1x1 conv
    y3, ss3, gap3 = _fused_conv1x1_call(y2, ssb2, p3["w_conv"], p3["gb"],
                                        apply_prev_relu=True)
    ssb3 = _gate_and_fold(gap3.reshape(N, -1), p3, ratios, ss3)

    # final apply of c3 (no ReLU) + residual
    out3 = _apply_call(y3, ssb3, residual3, apply_relu=False, out_dtype=jnp.float32)
    out = out3.reshape(N, H, W, cout3_p)[..., :cout3]                        # drop channel pad
    return jnp.transpose(out, (0, 3, 1, 2))                                  # NHWC -> NCHW


# ---------------------------- parameter init ------------------------------

def init_gated_conv_params(key, cin, cout, kh, kw):
    cin_p = _round_up(cin, LANE)
    cout_p = _round_up(cout, LANE)
    k1, k2, k3 = jax.random.split(key, 3)
    fan_in = kh * kw * cin

    w_real = jax.random.normal(k1, (kh * kw, cin, cout), jnp.float32) * math.sqrt(2.0 / fan_in)
    w_full = jnp.pad(w_real, ((0, 0), (0, cin_p - cin), (0, cout_p - cout)))
    w_full = w_full.reshape(kh * kw * cin_p, cout_p)

    w1 = jnp.pad(jax.random.normal(k2, (cin, GATE_HIDDEN), jnp.float32) * math.sqrt(2.0 / cin),
                 ((0, cin_p - cin), (0, GATE_HIDDEN_P - GATE_HIDDEN)))
    w2 = jnp.pad(jax.random.normal(k3, (GATE_HIDDEN, cout), jnp.float32) * math.sqrt(2.0 / GATE_HIDDEN),
                 ((0, GATE_HIDDEN_P - GATE_HIDDEN), (0, cout_p - cout)))

    return {
        "cin": cin, "cout": cout,
        "w_conv": w_full.astype(jnp.bfloat16),                  # (kh*kw*cin_p, cout_p) bf16
        "w1": w1, "b1": jnp.zeros((1, GATE_HIDDEN_P), jnp.float32),
        "w2": w2, "b2": jnp.zeros((1, cout_p), jnp.float32),
        "gb": jnp.concatenate([jnp.ones((1, cout_p), jnp.float32),
                               jnp.zeros((1, cout_p), jnp.float32)], axis=0),  # [gamma; beta]
    }


def init_bottleneck_params(key, inplanes, planes):
    k1, k2, k3 = jax.random.split(key, 3)
    return {
        "c1": init_gated_conv_params(k1, inplanes, planes, 1, 1),
        "c2": init_gated_conv_params(k2, planes, planes, 3, 3),
        "c3": init_gated_conv_params(k3, planes, planes * 4, 1, 1),
    }


# --------------------------------- main -----------------------------------

if __name__ == "__main__":
    key = jax.random.PRNGKey(0)
    kx, kp = jax.random.split(key)

    B, inplanes, planes, H, W = 2, 16, 4, 8, 8        # inplanes == planes*4 for residual
    x = jax.random.normal(kx, (B, inplanes, H, W), jnp.float32)   # NCHW like PyTorch
    ratios = jnp.array([0.5, 0.75], jnp.float32)                  # per-sample keep ratios

    params = init_bottleneck_params(kp, inplanes, planes)

    fwd = jax.jit(lambda xx, rr: bottleneck_forward(xx, rr, params, stride=1))
    out = jax.block_until_ready(fwd(x, ratios))

    assert out.shape == (B, planes * 4, H, W)
    assert bool(jnp.all(jnp.isfinite(out)))
    print("KERNEL_OK")
</pallas_src>

<mosaic_0001>
module attributes {stable_mosaic.version = 11 : i64} {
  func.func @_gate_mlp_kernel(%arg0: i32, %arg1: memref<2x128xf32, #tpu.memory_space<vmem>>, %arg2: memref<128x128xf32, #tpu.memory_space<vmem>>, %arg3: memref<1x128xf32, #tpu.memory_space<vmem>>, %arg4: memref<128x128xf32, #tpu.memory_space<vmem>>, %arg5: memref<1x128xf32, #tpu.memory_space<vmem>>, %arg6: memref<2x128xf32, #tpu.memory_space<vmem>>) attributes {dimension_semantics = [#tpu.dimension_semantics<arbitrary>], iteration_bounds = array<i64: 1>, scalar_prefetch = 0 : i64, scratch_operands = 0 : i64, tpu.core_type = #tpu.core_type<tc>, window_params = [{pipeline_mode = #tpu.pipeline_mode<synchronous>, transform_indices = @transform_0, window_bounds = array<i64: 2, 128>}, {pipeline_mode = #tpu.pipeline_mode<synchronous>, transform_indices = @transform_1, window_bounds = array<i64: 128, 128>}, {pipeline_mode = #tpu.pipeline_mode<synchronous>, transform_indices = @transform_2, window_bounds = array<i64: 1, 128>}, {pipeline_mode = #tpu.pipeline_mode<synchronous>, transform_indices = @transform_3, window_bounds = array<i64: 128, 128>}, {pipeline_mode = #tpu.pipeline_mode<synchronous>, transform_indices = @transform_4, window_bounds = array<i64: 1, 128>}, {pipeline_mode = #tpu.pipeline_mode<synchronous>, transform_indices = @transform_5, window_bounds = array<i64: 2, 128>}]} {
    %c0 = arith.constant 0 : index
    %c0_0 = arith.constant 0 : index
    %0 = vector.load %arg1[%c0, %c0_0] : memref<2x128xf32, #tpu.memory_space<vmem>>, vector<2x128xf32>
    %c0_1 = arith.constant 0 : index
    %c0_2 = arith.constant 0 : index
    %1 = vector.load %arg2[%c0_1, %c0_2] : memref<128x128xf32, #tpu.memory_space<vmem>>, vector<128x128xf32>
    %cst = arith.constant dense<0.000000e+00> : vector<2x128xf32>
    %2 = tpu.matmul %0, %1, %cst {dimension_numbers = #tpu.dot_dimension_numbers<[1], [0], [0], [1], [0, 0, 1, 1], [], []>} : vector<2x128xf32>, vector<128x128xf32>, vector<2x128xf32> -> vector<2x128xf32>
    %c0_3 = arith.constant 0 : index
    %c0_4 = arith.constant 0 : index
    %3 = vector.load %arg3[%c0_3, %c0_4] : memref<1x128xf32, #tpu.memory_space<vmem>>, vector<1x128xf32>
    %4 = vector.broadcast %3 : vector<1x128xf32> to vector<2x128xf32>
    %5 = arith.addf %2, %4 : vector<2x128xf32>
    %cst_5 = arith.constant 0.000000e+00 : f32
    %6 = vector.broadcast %cst_5 : f32 to vector<2x128xf32>
    %7 = arith.maximumf %5, %6 : vector<2x128xf32>
    %c0_6 = arith.constant 0 : index
    %c0_7 = arith.constant 0 : index
    %8 = vector.load %arg4[%c0_6, %c0_7] : memref<128x128xf32, #tpu.memory_space<vmem>>, vector<128x128xf32>
    %cst_8 = arith.constant dense<0.000000e+00> : vector<2x128xf32>
    %9 = tpu.matmul %7, %8, %cst_8 {dimension_numbers = #tpu.dot_dimension_numbers<[1], [0], [0], [1], [0, 0, 1, 1], [], []>} : vector<2x128xf32>, vector<128x128xf32>, vector<2x128xf32> -> vector<2x128xf32>
    %c0_9 = arith.constant 0 : index
    %c0_10 = arith.constant 0 : index
    %10 = vector.load %arg5[%c0_9, %c0_10] : memref<1x128xf32, #tpu.memory_space<vmem>>, vector<1x128xf32>
    %11 = vector.broadcast %10 : vector<1x128xf32> to vector<2x128xf32>
    %12 = arith.addf %9, %11 : vector<2x128xf32>
    %13 = arith.negf %12 : vector<2x128xf32>
    %14 = math.exp %13 : vector<2x128xf32>
    %cst_11 = arith.constant 1.000000e+00 : f32
    %15 = vector.broadcast %cst_11 : f32 to vector<2x128xf32>
    %16 = arith.addf %15, %14 : vector<2x128xf32>
    %17 = arith.divf %15, %16 : vector<2x128xf32>
    %cst_12 = arith.constant 1.500000e+00 : f32
    %18 = vector.broadcast %cst_12 : f32 to vector<2x128xf32>
    %19 = arith.mulf %18, %17 : vector<2x128xf32>
    %c0_13 = arith.constant 0 : index
    %c0_14 = arith.constant 0 : index
    %20 = vector.load %arg6[%c0_13, %c0_14] : memref<2x128xf32, #tpu.memory_space<vmem>>, vector<2x128xf32>
    tpu.vector_store %arg6[%c0_13, %c0_14], %19 {strides = array<i32>} : memref<2x128xf32, #tpu.memory_space<vmem>>, vector<2x128xf32>,
    return
  }
  func.func @transform_0(%arg0: i32) -> (i32, i32) {
    %c0_i32 = arith.constant 0 : i32
    %c0_i32_0 = arith.constant 0 : i32
    %c0_i32_1 = arith.constant 0 : i32
    return %c0_i32, %c0_i32_0 : i32, i32
  }
  func.func @transform_1(%arg0: i32) -> (i32, i32) {
    %c0_i32 = arith.constant 0 : i32
    %c0_i32_0 = arith.constant 0 : i32
    %c0_i32_1 = arith.constant 0 : i32
    return %c0_i32, %c0_i32_0 : i32, i32
  }
  func.func @transform_2(%arg0: i32) -> (i32, i32) {
    %c0_i32 = arith.constant 0 : i32
    %c0_i32_0 = arith.constant 0 : i32
    %c0_i32_1 = arith.constant 0 : i32
    return %c0_i32, %c0_i32_0 : i32, i32
  }
  func.func @transform_3(%arg0: i32) -> (i32, i32) {
    %c0_i32 = arith.constant 0 : i32
    %c0_i32_0 = arith.constant 0 : i32
    %c0_i32_1 = arith.constant 0 : i32
    return %c0_i32, %c0_i32_0 : i32, i32
  }
  func.func @transform_4(%arg0: i32) -> (i32, i32) {
    %c0_i32 = arith.constant 0 : i32
    %c0_i32_0 = arith.constant 0 : i32
    %c0_i32_1 = arith.constant 0 : i32
    return %c0_i32, %c0_i32_0 : i32, i32
  }
  func.func @transform_5(%arg0: i32) -> (i32, i32) {
    %c0_i32 = arith.constant 0 : i32
    %c0_i32_0 = arith.constant 0 : i32
    %c0_i32_1 = arith.constant 0 : i32
    return %c0_i32, %c0_i32_0 : i32, i32
  }
}

module attributes {stable_mosaic.version = 11 : i64} {
  func.func @_fused_conv1x1_kernel(%arg0: i32, %arg1: i32, %arg2: memref<1x64x128xbf16, #tpu.memory_space<vmem>>, %arg3: memref<1x2x128xf32, #tpu.memory_space<vmem>>, %arg4: memref<128x128xbf16, #tpu.memory_space<vmem>>, %arg5: memref<2x128xf32, #tpu.memory_space<vmem>>, %arg6: memref<1x64x128xbf16, #tpu.memory_space<vmem>>, %arg7: memref<2x128xf32, #tpu.memory_space<vmem>>, %arg8: memref<1x1x128xf32, #tpu.memory_space<vmem>>) attributes {dimension_semantics = [#tpu.dimension_semantics<arbitrary>, #tpu.dimension_semantics<arbitrary>], iteration_bounds = array<i64: 2, 1>, scalar_prefetch = 0 : i64, scratch_operands = 0 : i64, tpu.core_type = #tpu.core_type<tc>, window_params = [{transform_indices = @transform_0, window_bounds = array<i64: 1, 64, 128>}, {transform_indices = @transform_1, window_bounds = array<i64: 1, 2, 128>}, {pipeline_mode = #tpu.pipeline_mode<synchronous>, transform_indices = @transform_2, window_bounds = array<i64: 128, 128>}, {pipeline_mode = #tpu.pipeline_mode<synchronous>, transform_indices = @transform_3, window_bounds = array<i64: 2, 128>}, {transform_indices = @transform_4, window_bounds = array<i64: 1, 64, 128>}, {pipeline_mode = #tpu.pipeline_mode<synchronous>, transform_indices = @transform_5, window_bounds = array<i64: 2, 128>}, {transform_indices = @transform_6, window_bounds = array<i64: 1, 1, 128>}]} {
    %c0_i32 = arith.constant 0 : i32
    %0 = arith.cmpi eq, %arg0, %c0_i32 : i32
    %c0_i32_0 = arith.constant 0 : i32
    %1 = arith.cmpi eq, %arg1, %c0_i32_0 : i32
    %2 = arith.andi %0, %1 : i1
    %3 = arith.extui %2 : i1 to i32
    %c0_i32_1 = arith.constant 0 : i32
    %4 = arith.cmpi ne, %3, %c0_i32_1 : i32
    scf.if %4 {
      %cst_33 = arith.constant 0.000000e+00 : f32
      %53 = vector.broadcast %cst_33 : f32 to vector<2x128xf32>
      %c0_34 = arith.constant 0 : index
      %c0_35 = arith.constant 0 : index
      %54 = vector.load %arg7[%c0_34, %c0_35] : memref<2x128xf32, #tpu.memory_space<vmem>>, vector<2x128xf32>
      tpu.vector_store %arg7[%c0_34, %c0_35], %53 {strides = array<i32>} : memref<2x128xf32, #tpu.memory_space<vmem>>, vector<2x128xf32>,
    } else {
    }
    %c0_i32_2 = arith.constant 0 : i32
    %5 = arith.cmpi eq, %arg1, %c0_i32_2 : i32
    %6 = arith.extui %5 : i1 to i32
    %c0_i32_3 = arith.constant 0 : i32
    %7 = arith.cmpi ne, %6, %c0_i32_3 : i32
    scf.if %7 {
      %cst_33 = arith.constant 0.000000e+00 : f32
      %53 = vector.broadcast %cst_33 : f32 to vector<1x1x128xf32>
      %c0_34 = arith.constant 0 : index
      %c0_35 = arith.constant 0 : index
      %c0_36 = arith.constant 0 : index
      %54 = vector.load %arg8[%c0_34, %c0_35, %c0_36] : memref<1x1x128xf32, #tpu.memory_space<vmem>>, vector<1x1x128xf32>
      tpu.vector_store %arg8[%c0_34, %c0_35, %c0_36], %53 {strides = array<i32>} : memref<1x1x128xf32, #tpu.memory_space<vmem>>, vector<1x1x128xf32>,
    } else {
    }
    %c0 = arith.constant 0 : index
    %c0_4 = arith.constant 0 : index
    %c0_5 = arith.constant 0 : index
    %8 = vector.load %arg3[%c0, %c0_4, %c0_5] : memref<1x2x128xf32, #tpu.memory_space<vmem>>, vector<1x2x128xf32>
    %9 = vector.shape_cast %8 : vector<1x2x128xf32> to vector<2x128xf32>
    %c0_6 = arith.constant 0 : index
    %c0_7 = arith.constant 0 : index
    %c0_8 = arith.constant 0 : index
    %10 = vector.load %arg2[%c0_6, %c0_7, %c0_8] : memref<1x64x128xbf16, #tpu.memory_space<vmem>>, vector<1x64x128xbf16>
    %11 = vector.shape_cast %10 : vector<1x64x128xbf16> to vector<64x128xbf16>
    %12 = arith.extf %11 : vector<64x128xbf16> to vector<64x128xf32>
    %13 = vector.extract_strided_slice %9 {offsets = [0, 0], sizes = [1, 128], strides = [1, 1]} : vector<2x128xf32> to vector<1x128xf32>
    %14 = vector.broadcast %13 : vector<1x128xf32> to vector<64x128xf32>
    %15 = arith.mulf %12, %14 : vector<64x128xf32>
    %16 = vector.extract_strided_slice %9 {offsets = [1, 0], sizes = [1, 128], strides = [1, 1]} : vector<2x128xf32> to vector<1x128xf32>
    %17 = vector.broadcast %16 : vector<1x128xf32> to vector<64x128xf32>
    %18 = arith.addf %15, %17 : vector<64x128xf32>
    %c0_9 = arith.constant 0 : index
    %c0_10 = arith.constant 0 : index
    %c0_11 = arith.constant 0 : index
    %19 = vector.load %arg8[%c0_9, %c0_10, %c0_11] : memref<1x1x128xf32, #tpu.memory_space<vmem>>, vector<1x1x128xf32>
    %20 = vector.shape_cast %19 : vector<1x1x128xf32> to vector<1x128xf32>
    %21 = math.absf %18 : vector<64x128xf32>
    %cst = arith.constant dense<0.000000e+00> : vector<128xf32>
    %22 = vector.multi_reduction <add>, %21, %cst [0] : vector<64x128xf32> to vector<128xf32>
    %23 = vector.shape_cast %22 : vector<128xf32> to vector<1x128xf32>
    %cst_12 = arith.constant 1.562500e-02 : f32
    %24 = vector.broadcast %cst_12 : f32 to vector<1x128xf32>
    %25 = arith.mulf %23, %24 : vector<1x128xf32>
    %26 = arith.addf %20, %25 : vector<1x128xf32>
    %c0_13 = arith.constant 0 : index
    %c0_14 = arith.constant 0 : index
    %c0_15 = arith.constant 0 : index
    %27 = vector.load %arg8[%c0_13, %c0_14, %c0_15] : memref<1x1x128xf32, #tpu.memory_space<vmem>>, vector<1x1x128xf32>
    %28 = vector.shape_cast %27 : vector<1x1x128xf32> to vector<1x128xf32>
    %29 = vector.shape_cast %26 : vector<1x128xf32> to vector<1x1x128xf32>
    tpu.vector_store %arg8[%c0_13, %c0_14, %c0_15], %29 {strides = array<i32>} : memref<1x1x128xf32, #tpu.memory_space<vmem>>, vector<1x1x128xf32>,
    %30 = arith.truncf %18 : vector<64x128xf32> to vector<64x128xbf16>
    %c0_16 = arith.constant 0 : index
    %c0_17 = arith.constant 0 : index
    %31 = vector.load %arg4[%c0_16, %c0_17] : memref<128x128xbf16, #tpu.memory_space<vmem>>, vector<128x128xbf16>
    %cst_18 = arith.constant dense<0.000000e+00> : vector<64x128xf32>
    %32 = tpu.matmul %30, %31, %cst_18 {dimension_numbers = #tpu.dot_dimension_numbers<[1], [0], [0], [1], [0, 0, 1, 1], [], []>} : vector<64x128xbf16>, vector<128x128xbf16>, vector<64x128xf32> -> vector<64x128xf32>
    %33 = arith.truncf %32 : vector<64x128xf32> to vector<64x128xbf16>
    %c0_19 = arith.constant 0 : index
    %c0_20 = arith.constant 0 : index
    %c0_21 = arith.constant 0 : index
    %34 = vector.load %arg6[%c0_19, %c0_20, %c0_21] : memref<1x64x128xbf16, #tpu.memory_space<vmem>>, vector<1x64x128xbf16>
    %35 = vector.shape_cast %34 : vector<1x64x128xbf16> to vector<64x128xbf16>
    %36 = vector.shape_cast %33 : vector<64x128xbf16> to vector<1x64x128xbf16>
    tpu.vector_store %arg6[%c0_19, %c0_20, %c0_21], %36 {strides = array<i32>} : memref<1x64x128xbf16, #tpu.memory_space<vmem>>, vector<1x64x128xbf16>,
    %c0_22 = arith.constant 0 : index
    %c0_23 = arith.constant 0 : index
    %37 = vector.load %arg7[%c0_22, %c0_23] : memref<2x128xf32, #tpu.memory_space<vmem>>, vector<1x128xf32>
    %cst_24 = arith.constant dense<0.000000e+00> : vector<128xf32>
    %38 = vector.multi_reduction <add>, %32, %cst_24 [0] : vector<64x128xf32> to vector<128xf32>
    %39 = vector.shape_cast %38 : vector<128xf32> to vector<1x128xf32>
    %40 = arith.addf %37, %39 : vector<1x128xf32>
    %c0_25 = arith.constant 0 : index
    %c0_26 = arith.constant 0 : index
    %41 = vector.load %arg7[%c0_25, %c0_26] : memref<2x128xf32, #tpu.memory_space<vmem>>, vector<1x128xf32>
    tpu.vector_store %arg7[%c0_25, %c0_26], %40 {strides = array<i32>} : memref<2x128xf32, #tpu.memory_space<vmem>>, vector<1x128xf32>,
    %c1 = arith.constant 1 : index
    %c0_27 = arith.constant 0 : index
    %42 = vector.load %arg7[%c1, %c0_27] : memref<2x128xf32, #tpu.memory_space<vmem>>, vector<1x128xf32>
    %43 = arith.mulf %32, %32 : vector<64x128xf32>
    %cst_28 = arith.constant dense<0.000000e+00> : vector<128xf32>
    %44 = vector.multi_reduction <add>, %43, %cst_28 [0] : vector<64x128xf32> to vector<128xf32>
    %45 = vector.shape_cast %44 : vector<128xf32> to vector<1x128xf32>
    %46 = arith.addf %42, %45 : vector<1x128xf32>
    %c1_29 = arith.constant 1 : index
    %c0_30 = arith.constant 0 : index
    %47 = vector.load %arg7[%c1_29, %c0_30] : memref<2x128xf32, #tpu.memory_space<vmem>>, vector<1x128xf32>
    tpu.vector_store %arg7[%c1_29, %c0_30], %46 {strides = array<i32>} : memref<2x128xf32, #tpu.memory_space<vmem>>, vector<1x128xf32>,
    %c1_i32 = arith.constant 1 : i32
    %48 = arith.cmpi eq, %arg0, %c1_i32 : i32
    %c0_i32_31 = arith.constant 0 : i32
    %49 = arith.cmpi eq, %arg1, %c0_i32_31 : i32
    %50 = arith.andi %48, %49 : i1
    %51 = arith.extui %50 : i1 to i32
    %c0_i32_32 = arith.constant 0 : i32
    %52 = arith.cmpi ne, %51, %c0_i32_32 : i32
    scf.if %52 {
      %c0_33 = arith.constant 0 : index
      %c0_34 = arith.constant 0 : index
      %53 = vector.load %arg7[%c0_33, %c0_34] : memref<2x128xf32, #tpu.memory_space<vmem>>, vector<1x128xf32>
      %c1_35 = arith.constant 1 : index
      %c0_36 = arith.constant 0 : index
      %54 = vector.load %arg7[%c1_35, %c0_36] : memref<2x128xf32, #tpu.memory_space<vmem>>, vector<1x128xf32>
      %cst_37 = arith.constant 7.812500e-03 : f32
      %55 = vector.broadcast %cst_37 : f32 to vector<1x128xf32>
      %56 = arith.mulf %53, %55 : vector<1x128xf32>
      %cst_38 = arith.constant 7.812500e-03 : f32
      %57 = vector.broadcast %cst_38 : f32 to vector<1x128xf32>
      %58 = arith.mulf %54, %57 : vector<1x128xf32>
      %59 = arith.mulf %56, %56 : vector<1x128xf32>
      %60 = arith.subf %58, %59 : vector<1x128xf32>
      %c0_39 = arith.constant 0 : index
      %c0_40 = arith.constant 0 : index
      %61 = vector.load %arg5[%c0_39, %c0_40] : memref<2x128xf32, #tpu.memory_space<vmem>>, vector<1x128xf32>
      %cst_41 = arith.constant 9.99999974E-6 : f32
      %62 = vector.broadcast %cst_41 : f32 to vector<1x128xf32>
      %63 = arith.addf %60, %62 : vector<1x128xf32>
      %64 = math.rsqrt %63 : vector<1x128xf32>
      %65 = arith.mulf %61, %64 : vector<1x128xf32>
      %c1_42 = arith.constant 1 : index
      %c0_43 = arith.constant 0 : index
      %66 = vector.load %arg5[%c1_42, %c0_43] : memref<2x128xf32, #tpu.memory_space<vmem>>, vector<1x128xf32>
      %67 = arith.mulf %56, %65 : vector<1x128xf32>
      %68 = arith.subf %66, %67 : vector<1x128xf32>
      %c0_44 = arith.constant 0 : index
      %c0_45 = arith.constant 0 : index
      %69 = vector.load %arg7[%c0_44, %c0_45] : memref<2x128xf32, #tpu.memory_space<vmem>>, vector<1x128xf32>
      tpu.vector_store %arg7[%c0_44, %c0_45], %65 {strides = array<i32>} : memref<2x128xf32, #tpu.memory_space<vmem>>, vector<1x128xf32>,
      %c1_46 = arith.constant 1 : index
      %c0_47 = arith.constant 0 : index
      %70 = vector.load %arg7[%c1_46, %c0_47] : memref<2x128xf32, #tpu.memory_space<vmem>>, vector<1x128xf32>
      tpu.vector_store %arg7[%c1_46, %c0_47], %68 {strides = array<i32>} : memref<2x128xf32, #tpu.memory_space<vmem>>, vector<1x128xf32>,
    } else {
    }
    return
  }
  func.func @transform_0(%arg0: i32, %arg1: i32) -> (i32, i32, i32) {
    %c0_i32 = arith.constant 0 : i32
    %c0_i32_0 = arith.constant 0 : i32
    return %arg0, %arg1, %c0_i32 : i32, i32, i32
  }
  func.func @transform_1(%arg0: i32, %arg1: i32) -> (i32, i32, i32) {
    %c0_i32 = arith.constant 0 : i32
    %c0_i32_0 = arith.constant 0 : i32
    %c0_i32_1 = arith.constant 0 : i32
    return %arg0, %c0_i32, %c0_i32_0 : i32, i32, i32
  }
  func.func @transform_2(%arg0: i32, %arg1: i32) -> (i32, i32) {
    %c0_i32 = arith.constant 0 : i32
    %c0_i32_0 = arith.constant 0 : i32
    %c0_i32_1 = arith.constant 0 : i32
    return %c0_i32, %c0_i32_0 : i32, i32
  }
  func.func @transform_3(%arg0: i32, %arg1: i32) -> (i32, i32) {
    %c0_i32 = arith.constant 0 : i32
    %c0_i32_0 = arith.constant 0 : i32
    %c0_i32_1 = arith.constant 0 : i32
    return %c0_i32, %c0_i32_0 : i32, i32
  }
  func.func @transform_4(%arg0: i32, %arg1: i32) -> (i32, i32, i32) {
    %c0_i32 = arith.constant 0 : i32
    %c0_i32_0 = arith.constant 0 : i32
    return %arg0, %arg1, %c0_i32 : i32, i32, i32
  }
  func.func @transform_5(%arg0: i32, %arg1: i32) -> (i32, i32) {
    %c0_i32 = arith.constant 0 : i32
    %c0_i32_0 = arith.constant 0 : i32
    %c0_i32_1 = arith.constant 0 : i32
    return %c0_i32, %c0_i32_0 : i32, i32
  }
  func.func @transform_6(%arg0: i32, %arg1: i32) -> (i32, i32, i32) {
    %c0_i32 = arith.constant 0 : i32
    %c0_i32_0 = arith.constant 0 : i32
    %c0_i32_1 = arith.constant 0 : i32
    return %arg0, %c0_i32, %c0_i32_0 : i32, i32, i32
  }
}

module attributes {stable_mosaic.version = 11 : i64} {
  func.func @_fused_conv3x3_kernel(%arg0: i32, %arg1: memref<1x64x128xbf16, #tpu.memory_space<vmem>>, %arg2: memref<1x2x128xf32, #tpu.memory_space<vmem>>, %arg3: memref<1152x128xbf16, #tpu.memory_space<vmem>>, %arg4: memref<2x128xf32, #tpu.memory_space<vmem>>, %arg5: memref<1x64x128xbf16, #tpu.memory_space<vmem>>, %arg6: memref<2x128xf32, #tpu.memory_space<vmem>>, %arg7: memref<1x1x128xf32, #tpu.memory_space<vmem>>) attributes {dimension_semantics = [#tpu.dimension_semantics<arbitrary>], iteration_bounds = array<i64: 2>, scalar_prefetch = 0 : i64, scratch_operands = 0 : i64, tpu.core_type = #tpu.core_type<tc>, window_params = [{transform_indices = @transform_0, window_bounds = array<i64: 1, 64, 128>}, {transform_indices = @transform_1, window_bounds = array<i64: 1, 2, 128>}, {pipeline_mode = #tpu.pipeline_mode<synchronous>, transform_indices = @transform_2, window_bounds = array<i64: 1152, 128>}, {pipeline_mode = #tpu.pipeline_mode<synchronous>, transform_indices = @transform_3, window_bounds = array<i64: 2, 128>}, {transform_indices = @transform_4, window_bounds = array<i64: 1, 64, 128>}, {pipeline_mode = #tpu.pipeline_mode<synchronous>, transform_indices = @transform_5, window_bounds = array<i64: 2, 128>}, {transform_indices = @transform_6, window_bounds = array<i64: 1, 1, 128>}]} {
    %c0_i32 = arith.constant 0 : i32
    %0 = arith.cmpi eq, %arg0, %c0_i32 : i32
    %1 = arith.extui %0 : i1 to i32
    %c0_i32_0 = arith.constant 0 : i32
    %2 = arith.cmpi ne, %1, %c0_i32_0 : i32
    scf.if %2 {
      %cst_71 = arith.constant 0.000000e+00 : f32
      %164 = vector.broadcast %cst_71 : f32 to vector<2x128xf32>
      %c0_72 = arith.constant 0 : index
      %c0_73 = arith.constant 0 : index
      %165 = vector.load %arg6[%c0_72, %c0_73] : memref<2x128xf32, #tpu.memory_space<vmem>>, vector<2x128xf32>
      tpu.vector_store %arg6[%c0_72, %c0_73], %164 {strides = array<i32>} : memref<2x128xf32, #tpu.memory_space<vmem>>, vector<2x128xf32>,
    } else {
    }
    %c0 = arith.constant 0 : index
    %c0_1 = arith.constant 0 : index
    %c0_2 = arith.constant 0 : index
    %3 = vector.load %arg2[%c0, %c0_1, %c0_2] : memref<1x2x128xf32, #tpu.memory_space<vmem>>, vector<1x2x128xf32>
    %4 = vector.shape_cast %3 : vector<1x2x128xf32> to vector<2x128xf32>
    %c0_3 = arith.constant 0 : index
    %c0_4 = arith.constant 0 : index
    %c0_5 = arith.constant 0 : index
    %5 = vector.load %arg1[%c0_3, %c0_4, %c0_5] : memref<1x64x128xbf16, #tpu.memory_space<vmem>>, vector<1x64x128xbf16>
    %6 = vector.shape_cast %5 : vector<1x64x128xbf16> to vector<64x128xbf16>
    %7 = arith.extf %6 : vector<64x128xbf16> to vector<64x128xf32>
    %8 = vector.extract_strided_slice %4 {offsets = [0, 0], sizes = [1, 128], strides = [1, 1]} : vector<2x128xf32> to vector<1x128xf32>
    %9 = vector.broadcast %8 : vector<1x128xf32> to vector<64x128xf32>
    %10 = arith.mulf %7, %9 : vector<64x128xf32>
    %11 = vector.extract_strided_slice %4 {offsets = [1, 0], sizes = [1, 128], strides = [1, 1]} : vector<2x128xf32> to vector<1x128xf32>
    %12 = vector.broadcast %11 : vector<1x128xf32> to vector<64x128xf32>
    %13 = arith.addf %10, %12 : vector<64x128xf32>
    %cst = arith.constant 0.000000e+00 : f32
    %14 = vector.broadcast %cst : f32 to vector<64x128xf32>
    %15 = arith.maximumf %13, %14 : vector<64x128xf32>
    %16 = math.absf %15 : vector<64x128xf32>
    %cst_6 = arith.constant dense<0.000000e+00> : vector<128xf32>
    %17 = vector.multi_reduction <add>, %16, %cst_6 [0] : vector<64x128xf32> to vector<128xf32>
    %18 = vector.shape_cast %17 : vector<128xf32> to vector<1x128xf32>
    %cst_7 = arith.constant 1.562500e-02 : f32
    %19 = vector.broadcast %cst_7 : f32 to vector<1x128xf32>
    %20 = arith.mulf %18, %19 : vector<1x128xf32>
    %c0_8 = arith.constant 0 : index
    %c0_9 = arith.constant 0 : index
    %c0_10 = arith.constant 0 : index
    %21 = vector.load %arg7[%c0_8, %c0_9, %c0_10] : memref<1x1x128xf32, #tpu.memory_space<vmem>>, vector<1x1x128xf32>
    %22 = vector.shape_cast %21 : vector<1x1x128xf32> to vector<1x128xf32>
    %23 = vector.shape_cast %20 : vector<1x128xf32> to vector<1x1x128xf32>
    tpu.vector_store %arg7[%c0_8, %c0_9, %c0_10], %23 {strides = array<i32>} : memref<1x1x128xf32, #tpu.memory_space<vmem>>, vector<1x1x128xf32>,
    %24 = tpu.iota {dimensions = array<i32: 0>} : vector<64x1xi32>
    %c8_i32 = arith.constant 8 : i32
    %c0_i32_11 = arith.constant 0 : i32
    %25 = arith.cmpi eq, %c8_i32, %c0_i32_11 : i32
    %c1_i32 = arith.constant 1 : i32
    %26 = arith.select %25, %c1_i32, %c8_i32 : i32
    %27 = vector.broadcast %26 : i32 to vector<64x1xi32>
    %28 = arith.remsi %24, %27 : vector<64x1xi32>
    %c0_i32_12 = arith.constant 0 : i32
    %29 = vector.broadcast %c0_i32_12 : i32 to vector<64x1xi32>
    %30 = arith.cmpi ne, %28, %29 : vector<64x1xi32>
    %c0_i32_13 = arith.constant 0 : i32
    %31 = vector.broadcast %c0_i32_13 : i32 to vector<64x1xi32>
    %32 = arith.cmpi slt, %28, %31 : vector<64x1xi32>
    %c0_i32_14 = arith.constant 0 : i32
    %33 = arith.cmpi slt, %26, %c0_i32_14 : i32
    %34 = vector.broadcast %33 : i1 to vector<64x1xi1>
    %35 = vector.broadcast %34 : vector<64x1xi1> to vector<64x1xi1>
    %36 = arith.xori %32, %35 : vector<64x1xi1>
    %37 = arith.andi %36, %30 : vector<64x1xi1>
    %38 = vector.broadcast %26 : i32 to vector<64x1xi32>
    %39 = arith.addi %28, %38 : vector<64x1xi32>
    %40 = arith.select %37, %39, %28 : vector<64x1xi1>, vector<64x1xi32>
    %cst_15 = arith.constant 0.000000e+00 : f32
    %41 = vector.broadcast %cst_15 : f32 to vector<64x128xf32>
    %c9_i32 = arith.constant 9 : i32
    %42 = tpu.dynamic_rotate %15 by %c9_i32 dim 0 : vector<64x128xf32>, i32 -> vector<64x128xf32>
    %c8_i32_16 = arith.constant 8 : i32
    %43 = vector.broadcast %c8_i32_16 : i32 to vector<64x1xi32>
    %44 = arith.cmpi sge, %24, %43 : vector<64x1xi32>
    %c1_i32_17 = arith.constant 1 : i32
    %45 = vector.broadcast %c1_i32_17 : i32 to vector<64x1xi32>
    %46 = arith.cmpi sge, %40, %45 : vector<64x1xi32>
    %47 = arith.andi %44, %46 : vector<64x1xi1>
    %cst_18 = arith.constant 0.000000e+00 : f32
    %48 = vector.shape_cast %47 : vector<64x1xi1> to vector<64x1xi1>
    %49 = vector.broadcast %48 : vector<64x1xi1> to vector<64x128xi1>
    %50 = vector.broadcast %cst_18 : f32 to vector<64x128xf32>
    %51 = arith.select %49, %42, %50 : vector<64x128xi1>, vector<64x128xf32>
    %c0_19 = arith.constant 0 : index
    %c0_20 = arith.constant 0 : index
    %52 = vector.load %arg3[%c0_19, %c0_20] : memref<1152x128xbf16, #tpu.memory_space<vmem>>, vector<128x128xbf16>
    %53 = arith.truncf %51 : vector<64x128xf32> to vector<64x128xbf16>
    %cst_21 = arith.constant dense<0.000000e+00> : vector<64x128xf32>
    %54 = tpu.matmul %53, %52, %cst_21 {dimension_numbers = #tpu.dot_dimension_numbers<[1], [0], [0], [1], [0, 0, 1, 1], [], []>} : vector<64x128xbf16>, vector<128x128xbf16>, vector<64x128xf32> -> vector<64x128xf32>
    %55 = arith.addf %41, %54 : vector<64x128xf32>
    %c8_i32_22 = arith.constant 8 : i32
    %56 = tpu.dynamic_rotate %15 by %c8_i32_22 dim 0 : vector<64x128xf32>, i32 -> vector<64x128xf32>
    %c8_i32_23 = arith.constant 8 : i32
    %57 = vector.broadcast %c8_i32_23 : i32 to vector<64x1xi32>
    %58 = arith.cmpi sge, %24, %57 : vector<64x1xi32>
    %cst_24 = arith.constant 0.000000e+00 : f32
    %59 = vector.shape_cast %58 : vector<64x1xi1> to vector<64x1xi1>
    %60 = vector.broadcast %59 : vector<64x1xi1> to vector<64x128xi1>
    %61 = vector.broadcast %cst_24 : f32 to vector<64x128xf32>
    %62 = arith.select %60, %56, %61 : vector<64x128xi1>, vector<64x128xf32>
    %c128 = arith.constant 128 : index
    %c0_25 = arith.constant 0 : index
    %63 = vector.load %arg3[%c128, %c0_25] : memref<1152x128xbf16, #tpu.memory_space<vmem>>, vector<128x128xbf16>
    %64 = arith.truncf %62 : vector<64x128xf32> to vector<64x128xbf16>
    %cst_26 = arith.constant dense<0.000000e+00> : vector<64x128xf32>
    %65 = tpu.matmul %64, %63, %cst_26 {dimension_numbers = #tpu.dot_dimension_numbers<[1], [0], [0], [1], [0, 0, 1, 1], [], []>} : vector<64x128xbf16>, vector<128x128xbf16>, vector<64x128xf32> -> vector<64x128xf32>
    %66 = arith.addf %55, %65 : vector<64x128xf32>
    %c7_i32 = arith.constant 7 : i32
    %67 = tpu.dynamic_rotate %15 by %c7_i32 dim 0 : vector<64x128xf32>, i32 -> vector<64x128xf32>
    %c8_i32_27 = arith.constant 8 : i32
    %68 = vector.broadcast %c8_i32_27 : i32 to vector<64x1xi32>
    %69 = arith.cmpi sge, %24, %68 : vector<64x1xi32>
    %c7_i32_28 = arith.constant 7 : i32
    %70 = vector.broadcast %c7_i32_28 : i32 to vector<64x1xi32>
    %71 = arith.cmpi slt, %40, %70 : vector<64x1xi32>
    %72 = arith.andi %69, %71 : vector<64x1xi1>
    %cst_29 = arith.constant 0.000000e+00 : f32
    %73 = vector.shape_cast %72 : vector<64x1xi1> to vector<64x1xi1>
    %74 = vector.broadcast %73 : vector<64x1xi1> to vector<64x128xi1>
    %75 = vector.broadcast %cst_29 : f32 to vector<64x128xf32>
    %76 = arith.select %74, %67, %75 : vector<64x128xi1>, vector<64x128xf32>
    %c256 = arith.constant 256 : index
    %c0_30 = arith.constant 0 : index
    %77 = vector.load %arg3[%c256, %c0_30] : memref<1152x128xbf16, #tpu.memory_space<vmem>>, vector<128x128xbf16>
    %78 = arith.truncf %76 : vector<64x128xf32> to vector<64x128xbf16>
    %cst_31 = arith.constant dense<0.000000e+00> : vector<64x128xf32>
    %79 = tpu.matmul %78, %77, %cst_31 {dimension_numbers = #tpu.dot_dimension_numbers<[1], [0], [0], [1], [0, 0, 1, 1], [], []>} : vector<64x128xbf16>, vector<128x128xbf16>, vector<64x128xf32> -> vector<64x128xf32>
    %80 = arith.addf %66, %79 : vector<64x128xf32>
    %c1_i32_32 = arith.constant 1 : i32
    %81 = tpu.dynamic_rotate %15 by %c1_i32_32 dim 0 : vector<64x128xf32>, i32 -> vector<64x128xf32>
    %c1_i32_33 = arith.constant 1 : i32
    %82 = vector.broadcast %c1_i32_33 : i32 to vector<64x1xi32>
    %83 = arith.cmpi sge, %40, %82 : vector<64x1xi32>
    %cst_34 = arith.constant 0.000000e+00 : f32
    %84 = vector.shape_cast %83 : vector<64x1xi1> to vector<64x1xi1>
    %85 = vector.broadcast %84 : vector<64x1xi1> to vector<64x128xi1>
    %86 = vector.broadcast %cst_34 : f32 to vector<64x128xf32>
    %87 = arith.select %85, %81, %86 : vector<64x128xi1>, vector<64x128xf32>
    %c384 = arith.constant 384 : index
    %c0_35 = arith.constant 0 : index
    %88 = vector.load %arg3[%c384, %c0_35] : memref<1152x128xbf16, #tpu.memory_space<vmem>>, vector<128x128xbf16>
    %89 = arith.truncf %87 : vector<64x128xf32> to vector<64x128xbf16>
    %cst_36 = arith.constant dense<0.000000e+00> : vector<64x128xf32>
    %90 = tpu.matmul %89, %88, %cst_36 {dimension_numbers = #tpu.dot_dimension_numbers<[1], [0], [0], [1], [0, 0, 1, 1], [], []>} : vector<64x128xbf16>, vector<128x128xbf16>, vector<64x128xf32> -> vector<64x128xf32>
    %91 = arith.addf %80, %90 : vector<64x128xf32>
    %c512 = arith.constant 512 : index
    %c0_37 = arith.constant 0 : index
    %92 = vector.load %arg3[%c512, %c0_37] : memref<1152x128xbf16, #tpu.memory_space<vmem>>, vector<128x128xbf16>
    %93 = arith.truncf %15 : vector<64x128xf32> to vector<64x128xbf16>
    %cst_38 = arith.constant dense<0.000000e+00> : vector<64x128xf32>
    %94 = tpu.matmul %93, %92, %cst_38 {dimension_numbers = #tpu.dot_dimension_numbers<[1], [0], [0], [1], [0, 0, 1, 1], [], []>} : vector<64x128xbf16>, vector<128x128xbf16>, vector<64x128xf32> -> vector<64x128xf32>
    %95 = arith.addf %91, %94 : vector<64x128xf32>
    %c63_i32 = arith.constant 63 : i32
    %96 = tpu.dynamic_rotate %15 by %c63_i32 dim 0 : vector<64x128xf32>, i32 -> vector<64x128xf32>
    %c7_i32_39 = arith.constant 7 : i32
    %97 = vector.broadcast %c7_i32_39 : i32 to vector<64x1xi32>
    %98 = arith.cmpi slt, %40, %97 : vector<64x1xi32>
    %cst_40 = arith.constant 0.000000e+00 : f32
    %99 = vector.shape_cast %98 : vector<64x1xi1> to vector<64x1xi1>
    %100 = vector.broadcast %99 : vector<64x1xi1> to vector<64x128xi1>
    %101 = vector.broadcast %cst_40 : f32 to vector<64x128xf32>
    %102 = arith.select %100, %96, %101 : vector<64x128xi1>, vector<64x128xf32>
    %c640 = arith.constant 640 : index
    %c0_41 = arith.constant 0 : index
    %103 = vector.load %arg3[%c640, %c0_41] : memref<1152x128xbf16, #tpu.memory_space<vmem>>, vector<128x128xbf16>
    %104 = arith.truncf %102 : vector<64x128xf32> to vector<64x128xbf16>
    %cst_42 = arith.constant dense<0.000000e+00> : vector<64x128xf32>
    %105 = tpu.matmul %104, %103, %cst_42 {dimension_numbers = #tpu.dot_dimension_numbers<[1], [0], [0], [1], [0, 0, 1, 1], [], []>} : vector<64x128xbf16>, vector<128x128xbf16>, vector<64x128xf32> -> vector<64x128xf32>
    %106 = arith.addf %95, %105 : vector<64x128xf32>
    %c57_i32 = arith.constant 57 : i32
    %107 = tpu.dynamic_rotate %15 by %c57_i32 dim 0 : vector<64x128xf32>, i32 -> vector<64x128xf32>
    %c56_i32 = arith.constant 56 : i32
    %108 = vector.broadcast %c56_i32 : i32 to vector<64x1xi32>
    %109 = arith.cmpi slt, %24, %108 : vector<64x1xi32>
    %c1_i32_43 = arith.constant 1 : i32
    %110 = vector.broadcast %c1_i32_43 : i32 to vector<64x1xi32>
    %111 = arith.cmpi sge, %40, %110 : vector<64x1xi32>
    %112 = arith.andi %109, %111 : vector<64x1xi1>
    %cst_44 = arith.constant 0.000000e+00 : f32
    %113 = vector.shape_cast %112 : vector<64x1xi1> to vector<64x1xi1>
    %114 = vector.broadcast %113 : vector<64x1xi1> to vector<64x128xi1>
    %115 = vector.broadcast %cst_44 : f32 to vector<64x128xf32>
    %116 = arith.select %114, %107, %115 : vector<64x128xi1>, vector<64x128xf32>
    %c768 = arith.constant 768 : index
    %c0_45 = arith.constant 0 : index
    %117 = vector.load %arg3[%c768, %c0_45] : memref<1152x128xbf16, #tpu.memory_space<vmem>>, vector<128x128xbf16>
    %118 = arith.truncf %116 : vector<64x128xf32> to vector<64x128xbf16>
    %cst_46 = arith.constant dense<0.000000e+00> : vector<64x128xf32>
    %119 = tpu.matmul %118, %117, %cst_46 {dimension_numbers = #tpu.dot_dimension_numbers<[1], [0], [0], [1], [0, 0, 1, 1], [], []>} : vector<64x128xbf16>, vector<128x128xbf16>, vector<64x128xf32> -> vector<64x128xf32>
    %120 = arith.addf %106, %119 : vector<64x128xf32>
    %c56_i32_47 = arith.constant 56 : i32
    %121 = tpu.dynamic_rotate %15 by %c56_i32_47 dim 0 : vector<64x128xf32>, i32 -> vector<64x128xf32>
    %c56_i32_48 = arith.constant 56 : i32
    %122 = vector.broadcast %c56_i32_48 : i32 to vector<64x1xi32>
    %123 = arith.cmpi slt, %24, %122 : vector<64x1xi32>
    %cst_49 = arith.constant 0.000000e+00 : f32
    %124 = vector.shape_cast %123 : vector<64x1xi1> to vector<64x1xi1>
    %125 = vector.broadcast %124 : vector<64x1xi1> to vector<64x128xi1>
    %126 = vector.broadcast %cst_49 : f32 to vector<64x128xf32>
    %127 = arith.select %125, %121, %126 : vector<64x128xi1>, vector<64x128xf32>
    %c896 = arith.constant 896 : index
    %c0_50 = arith.constant 0 : index
    %128 = vector.load %arg3[%c896, %c0_50] : memref<1152x128xbf16, #tpu.memory_space<vmem>>, vector<128x128xbf16>
    %129 = arith.truncf %127 : vector<64x128xf32> to vector<64x128xbf16>
    %cst_51 = arith.constant dense<0.000000e+00> : vector<64x128xf32>
    %130 = tpu.matmul %129, %128, %cst_51 {dimension_numbers = #tpu.dot_dimension_numbers<[1], [0], [0], [1], [0, 0, 1, 1], [], []>} : vector<64x128xbf16>, vector<128x128xbf16>, vector<64x128xf32> -> vector<64x128xf32>
    %131 = arith.addf %120, %130 : vector<64x128xf32>
    %c55_i32 = arith.constant 55 : i32
    %132 = tpu.dynamic_rotate %15 by %c55_i32 dim 0 : vector<64x128xf32>, i32 -> vector<64x128xf32>
    %c56_i32_52 = arith.constant 56 : i32
    %133 = vector.broadcast %c56_i32_52 : i32 to vector<64x1xi32>
    %134 = arith.cmpi slt, %24, %133 : vector<64x1xi32>
    %c7_i32_53 = arith.constant 7 : i32
    %135 = vector.broadcast %c7_i32_53 : i32 to vector<64x1xi32>
    %136 = arith.cmpi slt, %40, %135 : vector<64x1xi32>
    %137 = arith.andi %134, %136 : vector<64x1xi1>
    %cst_54 = arith.constant 0.000000e+00 : f32
    %138 = vector.shape_cast %137 : vector<64x1xi1> to vector<64x1xi1>
    %139 = vector.broadcast %138 : vector<64x1xi1> to vector<64x128xi1>
    %140 = vector.broadcast %cst_54 : f32 to vector<64x128xf32>
    %141 = arith.select %139, %132, %140 : vector<64x128xi1>, vector<64x128xf32>
    %c1024 = arith.constant 1024 : index
    %c0_55 = arith.constant 0 : index
    %142 = vector.load %arg3[%c1024, %c0_55] : memref<1152x128xbf16, #tpu.memory_space<vmem>>, vector<128x128xbf16>
    %143 = arith.truncf %141 : vector<64x128xf32> to vector<64x128xbf16>
    %cst_56 = arith.constant dense<0.000000e+00> : vector<64x128xf32>
    %144 = tpu.matmul %143, %142, %cst_56 {dimension_numbers = #tpu.dot_dimension_numbers<[1], [0], [0], [1], [0, 0, 1, 1], [], []>} : vector<64x128xbf16>, vector<128x128xbf16>, vector<64x128xf32> -> vector<64x128xf32>
    %145 = arith.addf %131, %144 : vector<64x128xf32>
    %146 = arith.truncf %145 : vector<64x128xf32> to vector<64x128xbf16>
    %c0_57 = arith.constant 0 : index
    %c0_58 = arith.constant 0 : index
    %c0_59 = arith.constant 0 : index
    %147 = vector.load %arg5[%c0_57, %c0_58, %c0_59] : memref<1x64x128xbf16, #tpu.memory_space<vmem>>, vector<1x64x128xbf16>
    %148 = vector.shape_cast %147 : vector<1x64x128xbf16> to vector<64x128xbf16>
    %149 = vector.shape_cast %146 : vector<64x128xbf16> to vector<1x64x128xbf16>
    tpu.vector_store %arg5[%c0_57, %c0_58, %c0_59], %149 {strides = array<i32>} : memref<1x64x128xbf16, #tpu.memory_space<vmem>>, vector<1x64x128xbf16>,
    %c0_60 = arith.constant 0 : index
    %c0_61 = arith.constant 0 : index
    %150 = vector.load %arg6[%c0_60, %c0_61] : memref<2x128xf32, #tpu.memory_space<vmem>>, vector<1x128xf32>
    %cst_62 = arith.constant dense<0.000000e+00> : vector<128xf32>
    %151 = vector.multi_reduction <add>, %145, %cst_62 [0] : vector<64x128xf32> to vector<128xf32>
    %152 = vector.shape_cast %151 : vector<128xf32> to vector<1x128xf32>
    %153 = arith.addf %150, %152 : vector<1x128xf32>
    %c0_63 = arith.constant 0 : index
    %c0_64 = arith.constant 0 : index
    %154 = vector.load %arg6[%c0_63, %c0_64] : memref<2x128xf32, #tpu.memory_space<vmem>>, vector<1x128xf32>
    tpu.vector_store %arg6[%c0_63, %c0_64], %153 {strides = array<i32>} : memref<2x128xf32, #tpu.memory_space<vmem>>, vector<1x128xf32>,
    %c1 = arith.constant 1 : index
    %c0_65 = arith.constant 0 : index
    %155 = vector.load %arg6[%c1, %c0_65] : memref<2x128xf32, #tpu.memory_space<vmem>>, vector<1x128xf32>
    %156 = arith.mulf %145, %145 : vector<64x128xf32>
    %cst_66 = arith.constant dense<0.000000e+00> : vector<128xf32>
    %157 = vector.multi_reduction <add>, %156, %cst_66 [0] : vector<64x128xf32> to vector<128xf32>
    %158 = vector.shape_cast %157 : vector<128xf32> to vector<1x128xf32>
    %159 = arith.addf %155, %158 : vector<1x128xf32>
    %c1_67 = arith.constant 1 : index
    %c0_68 = arith.constant 0 : index
    %160 = vector.load %arg6[%c1_67, %c0_68] : memref<2x128xf32, #tpu.memory_space<vmem>>, vector<1x128xf32>
    tpu.vector_store %arg6[%c1_67, %c0_68], %159 {strides = array<i32>} : memref<2x128xf32, #tpu.memory_space<vmem>>, vector<1x128xf32>,
    %c1_i32_69 = arith.constant 1 : i32
    %161 = arith.cmpi eq, %arg0, %c1_i32_69 : i32
    %162 = arith.extui %161 : i1 to i32
    %c0_i32_70 = arith.constant 0 : i32
    %163 = arith.cmpi ne, %162, %c0_i32_70 : i32
    scf.if %163 {
      %c0_71 = arith.constant 0 : index
      %c0_72 = arith.constant 0 : index
      %164 = vector.load %arg6[%c0_71, %c0_72] : memref<2x128xf32, #tpu.memory_space<vmem>>, vector<1x128xf32>
      %c1_73 = arith.constant 1 : index
      %c0_74 = arith.constant 0 : index
      %165 = vector.load %arg6[%c1_73, %c0_74] : memref<2x128xf32, #tpu.memory_space<vmem>>, vector<1x128xf32>
      %cst_75 = arith.constant 7.812500e-03 : f32
      %166 = vector.broadcast %cst_75 : f32 to vector<1x128xf32>
      %167 = arith.mulf %164, %166 : vector<1x128xf32>
      %cst_76 = arith.constant 7.812500e-03 : f32
      %168 = vector.broadcast %cst_76 : f32 to vector<1x128xf32>
      %169 = arith.mulf %165, %168 : vector<1x128xf32>
      %170 = arith.mulf %167, %167 : vector<1x128xf32>
      %171 = arith.subf %169, %170 : vector<1x128xf32>
      %c0_77 = arith.constant 0 : index
      %c0_78 = arith.constant 0 : index
      %172 = vector.load %arg4[%c0_77, %c0_78] : memref<2x128xf32, #tpu.memory_space<vmem>>, vector<1x128xf32>
      %cst_79 = arith.constant 9.99999974E-6 : f32
      %173 = vector.broadcast %cst_79 : f32 to vector<1x128xf32>
      %174 = arith.addf %171, %173 : vector<1x128xf32>
      %175 = math.rsqrt %174 : vector<1x128xf32>
      %176 = arith.mulf %172, %175 : vector<1x128xf32>
      %c1_80 = arith.constant 1 : index
      %c0_81 = arith.constant 0 : index
      %177 = vector.load %arg4[%c1_80, %c0_81] : memref<2x128xf32, #tpu.memory_space<vmem>>, vector<1x128xf32>
      %178 = arith.mulf %167, %176 : vector<1x128xf32>
      %179 = arith.subf %177, %178 : vector<1x128xf32>
      %c0_82 = arith.constant 0 : index
      %c0_83 = arith.constant 0 : index
      %180 = vector.load %arg6[%c0_82, %c0_83] : memref<2x128xf32, #tpu.memory_space<vmem>>, vector<1x128xf32>
      tpu.vector_store %arg6[%c0_82, %c0_83], %176 {strides = array<i32>} : memref<2x128xf32, #tpu.memory_space<vmem>>, vector<1x128xf32>,
      %c1_84 = arith.constant 1 : index
      %c0_85 = arith.constant 0 : index
      %181 = vector.load %arg6[%c1_84, %c0_85] : memref<2x128xf32, #tpu.memory_space<vmem>>, vector<1x128xf32>
      tpu.vector_store %arg6[%c1_84, %c0_85], %179 {strides = array<i32>} : memref<2x128xf32, #tpu.memory_space<vmem>>, vector<1x128xf32>,
    } else {
    }
    return
  }
  func.func @transform_0(%arg0: i32) -> (i32, i32, i32) {
    %c0_i32 = arith.constant 0 : i32
    %c0_i32_0 = arith.constant 0 : i32
    %c0_i32_1 = arith.constant 0 : i32
    return %arg0, %c0_i32, %c0_i32_0 : i32, i32, i32
  }
  func.func @transform_1(%arg0: i32) -> (i32, i32, i32) {
    %c0_i32 = arith.constant 0 : i32
    %c0_i32_0 = arith.constant 0 : i32
    %c0_i32_1 = arith.constant 0 : i32
    return %arg0, %c0_i32, %c0_i32_0 : i32, i32, i32
  }
  func.func @transform_2(%arg0: i32) -> (i32, i32) {
    %c0_i32 = arith.constant 0 : i32
    %c0_i32_0 = arith.constant 0 : i32
    %c0_i32_1 = arith.constant 0 : i32
    return %c0_i32, %c0_i32_0 : i32, i32
  }
  func.func @transform_3(%arg0: i32) -> (i32, i32) {
    %c0_i32 = arith.constant 0 : i32
    %c0_i32_0 = arith.constant 0 : i32
    %c0_i32_1 = arith.constant 0 : i32
    return %c0_i32, %c0_i32_0 : i32, i32
  }
  func.func @transform_4(%arg0: i32) -> (i32, i32, i32) {
    %c0_i32 = arith.constant 0 : i32
    %c0_i32_0 = arith.constant 0 : i32
    %c0_i32_1 = arith.constant 0 : i32
    return %arg0, %c0_i32, %c0_i32_0 : i32, i32, i32
  }
  func.func @transform_5(%arg0: i32) -> (i32, i32) {
    %c0_i32 = arith.constant 0 : i32
    %c0_i32_0 = arith.constant 0 : i32
    %c0_i32_1 = arith.constant 0 : i32
    return %c0_i32, %c0_i32_0 : i32, i32
  }
  func.func @transform_6(%arg0: i32) -> (i32, i32, i32) {
    %c0_i32 = arith.constant 0 : i32
    %c0_i32_0 = arith.constant 0 : i32
    %c0_i32_1 = arith.constant 0 : i32
    return %arg0, %c0_i32, %c0_i32_0 : i32, i32, i32
  }
}

module attributes {stable_mosaic.version = 11 : i64} {
  func.func @_fused_conv1x1_kernel(%arg0: i32, %arg1: i32, %arg2: memref<1x64x128xbf16, #tpu.memory_space<vmem>>, %arg3: memref<1x2x128xf32, #tpu.memory_space<vmem>>, %arg4: memref<128x128xbf16, #tpu.memory_space<vmem>>, %arg5: memref<2x128xf32, #tpu.memory_space<vmem>>, %arg6: memref<1x64x128xbf16, #tpu.memory_space<vmem>>, %arg7: memref<2x128xf32, #tpu.memory_space<vmem>>, %arg8: memref<1x1x128xf32, #tpu.memory_space<vmem>>) attributes {dimension_semantics = [#tpu.dimension_semantics<arbitrary>, #tpu.dimension_semantics<arbitrary>], iteration_bounds = array<i64: 2, 1>, scalar_prefetch = 0 : i64, scratch_operands = 0 : i64, tpu.core_type = #tpu.core_type<tc>, window_params = [{transform_indices = @transform_0, window_bounds = array<i64: 1, 64, 128>}, {transform_indices = @transform_1, window_bounds = array<i64: 1, 2, 128>}, {pipeline_mode = #tpu.pipeline_mode<synchronous>, transform_indices = @transform_2, window_bounds = array<i64: 128, 128>}, {pipeline_mode = #tpu.pipeline_mode<synchronous>, transform_indices = @transform_3, window_bounds = array<i64: 2, 128>}, {transform_indices = @transform_4, window_bounds = array<i64: 1, 64, 128>}, {pipeline_mode = #tpu.pipeline_mode<synchronous>, transform_indices = @transform_5, window_bounds = array<i64: 2, 128>}, {transform_indices = @transform_6, window_bounds = array<i64: 1, 1, 128>}]} {
    %c0_i32 = arith.constant 0 : i32
    %0 = arith.cmpi eq, %arg0, %c0_i32 : i32
    %c0_i32_0 = arith.constant 0 : i32
    %1 = arith.cmpi eq, %arg1, %c0_i32_0 : i32
    %2 = arith.andi %0, %1 : i1
    %3 = arith.extui %2 : i1 to i32
    %c0_i32_1 = arith.constant 0 : i32
    %4 = arith.cmpi ne, %3, %c0_i32_1 : i32
    scf.if %4 {
      %cst_34 = arith.constant 0.000000e+00 : f32
      %55 = vector.broadcast %cst_34 : f32 to vector<2x128xf32>
      %c0_35 = arith.constant 0 : index
      %c0_36 = arith.constant 0 : index
      %56 = vector.load %arg7[%c0_35, %c0_36] : memref<2x128xf32, #tpu.memory_space<vmem>>, vector<2x128xf32>
      tpu.vector_store %arg7[%c0_35, %c0_36], %55 {strides = array<i32>} : memref<2x128xf32, #tpu.memory_space<vmem>>, vector<2x128xf32>,
    } else {
    }
    %c0_i32_2 = arith.constant 0 : i32
    %5 = arith.cmpi eq, %arg1, %c0_i32_2 : i32
    %6 = arith.extui %5 : i1 to i32
    %c0_i32_3 = arith.constant 0 : i32
    %7 = arith.cmpi ne, %6, %c0_i32_3 : i32
    scf.if %7 {
      %cst_34 = arith.constant 0.000000e+00 : f32
      %55 = vector.broadcast %cst_34 : f32 to vector<1x1x128xf32>
      %c0_35 = arith.constant 0 : index
      %c0_36 = arith.constant 0 : index
      %c0_37 = arith.constant 0 : index
      %56 = vector.load %arg8[%c0_35, %c0_36, %c0_37] : memref<1x1x128xf32, #tpu.memory_space<vmem>>, vector<1x1x128xf32>
      tpu.vector_store %arg8[%c0_35, %c0_36, %c0_37], %55 {strides = array<i32>} : memref<1x1x128xf32, #tpu.memory_space<vmem>>, vector<1x1x128xf32>,
    } else {
    }
    %c0 = arith.constant 0 : index
    %c0_4 = arith.constant 0 : index
    %c0_5 = arith.constant 0 : index
    %8 = vector.load %arg3[%c0, %c0_4, %c0_5] : memref<1x2x128xf32, #tpu.memory_space<vmem>>, vector<1x2x128xf32>
    %9 = vector.shape_cast %8 : vector<1x2x128xf32> to vector<2x128xf32>
    %c0_6 = arith.constant 0 : index
    %c0_7 = arith.constant 0 : index
    %c0_8 = arith.constant 0 : index
    %10 = vector.load %arg2[%c0_6, %c0_7, %c0_8] : memref<1x64x128xbf16, #tpu.memory_space<vmem>>, vector<1x64x128xbf16>
    %11 = vector.shape_cast %10 : vector<1x64x128xbf16> to vector<64x128xbf16>
    %12 = arith.extf %11 : vector<64x128xbf16> to vector<64x128xf32>
    %13 = vector.extract_strided_slice %9 {offsets = [0, 0], sizes = [1, 128], strides = [1, 1]} : vector<2x128xf32> to vector<1x128xf32>
    %14 = vector.broadcast %13 : vector<1x128xf32> to vector<64x128xf32>
    %15 = arith.mulf %12, %14 : vector<64x128xf32>
    %16 = vector.extract_strided_slice %9 {offsets = [1, 0], sizes = [1, 128], strides = [1, 1]} : vector<2x128xf32> to vector<1x128xf32>
    %17 = vector.broadcast %16 : vector<1x128xf32> to vector<64x128xf32>
    %18 = arith.addf %15, %17 : vector<64x128xf32>
    %cst = arith.constant 0.000000e+00 : f32
    %19 = vector.broadcast %cst : f32 to vector<64x128xf32>
    %20 = arith.maximumf %18, %19 : vector<64x128xf32>
    %c0_9 = arith.constant 0 : index
    %c0_10 = arith.constant 0 : index
    %c0_11 = arith.constant 0 : index
    %21 = vector.load %arg8[%c0_9, %c0_10, %c0_11] : memref<1x1x128xf32, #tpu.memory_space<vmem>>, vector<1x1x128xf32>
    %22 = vector.shape_cast %21 : vector<1x1x128xf32> to vector<1x128xf32>
    %23 = math.absf %20 : vector<64x128xf32>
    %cst_12 = arith.constant dense<0.000000e+00> : vector<128xf32>
    %24 = vector.multi_reduction <add>, %23, %cst_12 [0] : vector<64x128xf32> to vector<128xf32>
    %25 = vector.shape_cast %24 : vector<128xf32> to vector<1x128xf32>
    %cst_13 = arith.constant 1.562500e-02 : f32
    %26 = vector.broadcast %cst_13 : f32 to vector<1x128xf32>
    %27 = arith.mulf %25, %26 : vector<1x128xf32>
    %28 = arith.addf %22, %27 : vector<1x128xf32>
    %c0_14 = arith.constant 0 : index
    %c0_15 = arith.constant 0 : index
    %c0_16 = arith.constant 0 : index
    %29 = vector.load %arg8[%c0_14, %c0_15, %c0_16] : memref<1x1x128xf32, #tpu.memory_space<vmem>>, vector<1x1x128xf32>
    %30 = vector.shape_cast %29 : vector<1x1x128xf32> to vector<1x128xf32>
    %31 = vector.shape_cast %28 : vector<1x128xf32> to vector<1x1x128xf32>
    tpu.vector_store %arg8[%c0_14, %c0_15, %c0_16], %31 {strides = array<i32>} : memref<1x1x128xf32, #tpu.memory_space<vmem>>, vector<1x1x128xf32>,
    %32 = arith.truncf %20 : vector<64x128xf32> to vector<64x128xbf16>
    %c0_17 = arith.constant 0 : index
    %c0_18 = arith.constant 0 : index
    %33 = vector.load %arg4[%c0_17, %c0_18] : memref<128x128xbf16, #tpu.memory_space<vmem>>, vector<128x128xbf16>
    %cst_19 = arith.constant dense<0.000000e+00> : vector<64x128xf32>
    %34 = tpu.matmul %32, %33, %cst_19 {dimension_numbers = #tpu.dot_dimension_numbers<[1], [0], [0], [1], [0, 0, 1, 1], [], []>} : vector<64x128xbf16>, vector<128x128xbf16>, vector<64x128xf32> -> vector<64x128xf32>
    %35 = arith.truncf %34 : vector<64x128xf32> to vector<64x128xbf16>
    %c0_20 = arith.constant 0 : index
    %c0_21 = arith.constant 0 : index
    %c0_22 = arith.constant 0 : index
    %36 = vector.load %arg6[%c0_20, %c0_21, %c0_22] : memref<1x64x128xbf16, #tpu.memory_space<vmem>>, vector<1x64x128xbf16>
    %37 = vector.shape_cast %36 : vector<1x64x128xbf16> to vector<64x128xbf16>
    %38 = vector.shape_cast %35 : vector<64x128xbf16> to vector<1x64x128xbf16>
    tpu.vector_store %arg6[%c0_20, %c0_21, %c0_22], %38 {strides = array<i32>} : memref<1x64x128xbf16, #tpu.memory_space<vmem>>, vector<1x64x128xbf16>,
    %c0_23 = arith.constant 0 : index
    %c0_24 = arith.constant 0 : index
    %39 = vector.load %arg7[%c0_23, %c0_24] : memref<2x128xf32, #tpu.memory_space<vmem>>, vector<1x128xf32>
    %cst_25 = arith.constant dense<0.000000e+00> : vector<128xf32>
    %40 = vector.multi_reduction <add>, %34, %cst_25 [0] : vector<64x128xf32> to vector<128xf32>
    %41 = vector.shape_cast %40 : vector<128xf32> to vector<1x128xf32>
    %42 = arith.addf %39, %41 : vector<1x128xf32>
    %c0_26 = arith.constant 0 : index
    %c0_27 = arith.constant 0 : index
    %43 = vector.load %arg7[%c0_26, %c0_27] : memref<2x128xf32, #tpu.memory_space<vmem>>, vector<1x128xf32>
    tpu.vector_store %arg7[%c0_26, %c0_27], %42 {strides = array<i32>} : memref<2x128xf32, #tpu.memory_space<vmem>>, vector<1x128xf32>,
    %c1 = arith.constant 1 : index
    %c0_28 = arith.constant 0 : index
    %44 = vector.load %arg7[%c1, %c0_28] : memref<2x128xf32, #tpu.memory_space<vmem>>, vector<1x128xf32>
    %45 = arith.mulf %34, %34 : vector<64x128xf32>
    %cst_29 = arith.constant dense<0.000000e+00> : vector<128xf32>
    %46 = vector.multi_reduction <add>, %45, %cst_29 [0] : vector<64x128xf32> to vector<128xf32>
    %47 = vector.shape_cast %46 : vector<128xf32> to vector<1x128xf32>
    %48 = arith.addf %44, %47 : vector<1x128xf32>
    %c1_30 = arith.constant 1 : index
    %c0_31 = arith.constant 0 : index
    %49 = vector.load %arg7[%c1_30, %c0_31] : memref<2x128xf32, #tpu.memory_space<vmem>>, vector<1x128xf32>
    tpu.vector_store %arg7[%c1_30, %c0_31], %48 {strides = array<i32>} : memref<2x128xf32, #tpu.memory_space<vmem>>, vector<1x128xf32>,
    %c1_i32 = arith.constant 1 : i32
    %50 = arith.cmpi eq, %arg0, %c1_i32 : i32
    %c0_i32_32 = arith.constant 0 : i32
    %51 = arith.cmpi eq, %arg1, %c0_i32_32 : i32
    %52 = arith.andi %50, %51 : i1
    %53 = arith.extui %52 : i1 to i32
    %c0_i32_33 = arith.constant 0 : i32
    %54 = arith.cmpi ne, %53, %c0_i32_33 : i32
    scf.if %54 {
      %c0_34 = arith.constant 0 : index
      %c0_35 = arith.constant 0 : index
      %55 = vector.load %arg7[%c0_34, %c0_35] : memref<2x128xf32, #tpu.memory_space<vmem>>, vector<1x128xf32>
      %c1_36 = arith.constant 1 : index
      %c0_37 = arith.constant 0 : index
      %56 = vector.load %arg7[%c1_36, %c0_37] : memref<2x128xf32, #tpu.memory_space<vmem>>, vector<1x128xf32>
      %cst_38 = arith.constant 7.812500e-03 : f32
      %57 = vector.broadcast %cst_38 : f32 to vector<1x128xf32>
      %58 = arith.mulf %55, %57 : vector<1x128xf32>
      %cst_39 = arith.constant 7.812500e-03 : f32
      %59 = vector.broadcast %cst_39 : f32 to vector<1x128xf32>
      %60 = arith.mulf %56, %59 : vector<1x128xf32>
      %61 = arith.mulf %58, %58 : vector<1x128xf32>
      %62 = arith.subf %60, %61 : vector<1x128xf32>
      %c0_40 = arith.constant 0 : index
      %c0_41 = arith.constant 0 : index
      %63 = vector.load %arg5[%c0_40, %c0_41] : memref<2x128xf32, #tpu.memory_space<vmem>>, vector<1x128xf32>
      %cst_42 = arith.constant 9.99999974E-6 : f32
      %64 = vector.broadcast %cst_42 : f32 to vector<1x128xf32>
      %65 = arith.addf %62, %64 : vector<1x128xf32>
      %66 = math.rsqrt %65 : vector<1x128xf32>
      %67 = arith.mulf %63, %66 : vector<1x128xf32>
      %c1_43 = arith.constant 1 : index
      %c0_44 = arith.constant 0 : index
      %68 = vector.load %arg5[%c1_43, %c0_44] : memref<2x128xf32, #tpu.memory_space<vmem>>, vector<1x128xf32>
      %69 = arith.mulf %58, %67 : vector<1x128xf32>
      %70 = arith.subf %68, %69 : vector<1x128xf32>
      %c0_45 = arith.constant 0 : index
      %c0_46 = arith.constant 0 : index
      %71 = vector.load %arg7[%c0_45, %c0_46] : memref<2x128xf32, #tpu.memory_space<vmem>>, vector<1x128xf32>
      tpu.vector_store %arg7[%c0_45, %c0_46], %67 {strides = array<i32>} : memref<2x128xf32, #tpu.memory_space<vmem>>, vector<1x128xf32>,
      %c1_47 = arith.constant 1 : index
      %c0_48 = arith.constant 0 : index
      %72 = vector.load %arg7[%c1_47, %c0_48] : memref<2x128xf32, #tpu.memory_space<vmem>>, vector<1x128xf32>
      tpu.vector_store %arg7[%c1_47, %c0_48], %70 {strides = array<i32>} : memref<2x128xf32, #tpu.memory_space<vmem>>, vector<1x128xf32>,
    } else {
    }
    return
  }
  func.func @transform_0(%arg0: i32, %arg1: i32) -> (i32, i32, i32) {
    %c0_i32 = arith.constant 0 : i32
    %c0_i32_0 = arith.constant 0 : i32
    return %arg0, %arg1, %c0_i32 : i32, i32, i32
  }
  func.func @transform_1(%arg0: i32, %arg1: i32) -> (i32, i32, i32) {
    %c0_i32 = arith.constant 0 : i32
    %c0_i32_0 = arith.constant 0 : i32
    %c0_i32_1 = arith.constant 0 : i32
    return %arg0, %c0_i32, %c0_i32_0 : i32, i32, i32
  }
  func.func @transform_2(%arg0: i32, %arg1: i32) -> (i32, i32) {
    %c0_i32 = arith.constant 0 : i32
    %c0_i32_0 = arith.constant 0 : i32
    %c0_i32_1 = arith.constant 0 : i32
    return %c0_i32, %c0_i32_0 : i32, i32
  }
  func.func @transform_3(%arg0: i32, %arg1: i32) -> (i32, i32) {
    %c0_i32 = arith.constant 0 : i32
    %c0_i32_0 = arith.constant 0 : i32
    %c0_i32_1 = arith.constant 0 : i32
    return %c0_i32, %c0_i32_0 : i32, i32
  }
  func.func @transform_4(%arg0: i32, %arg1: i32) -> (i32, i32, i32) {
    %c0_i32 = arith.constant 0 : i32
    %c0_i32_0 = arith.constant 0 : i32
    return %arg0, %arg1, %c0_i32 : i32, i32, i32
  }
  func.func @transform_5(%arg0: i32, %arg1: i32) -> (i32, i32) {
    %c0_i32 = arith.constant 0 : i32
    %c0_i32_0 = arith.constant 0 : i32
    %c0_i32_1 = arith.constant 0 : i32
    return %c0_i32, %c0_i32_0 : i32, i32
  }
  func.func @transform_6(%arg0: i32, %arg1: i32) -> (i32, i32, i32) {
    %c0_i32 = arith.constant 0 : i32
    %c0_i32_0 = arith.constant 0 : i32
    %c0_i32_1 = arith.constant 0 : i32
    return %arg0, %c0_i32, %c0_i32_0 : i32, i32, i32
  }
}

module attributes {stable_mosaic.version = 11 : i64} {
  func.func @_apply_kernel(%arg0: i32, %arg1: i32, %arg2: memref<1x64x128xbf16, #tpu.memory_space<vmem>>, %arg3: memref<1x2x128xf32, #tpu.memory_space<vmem>>, %arg4: memref<1x64x128xf32, #tpu.memory_space<vmem>>, %arg5: memref<1x64x128xf32, #tpu.memory_space<vmem>>) attributes {dimension_semantics = [#tpu.dimension_semantics<parallel>, #tpu.dimension_semantics<parallel>], iteration_bounds = array<i64: 2, 1>, scalar_prefetch = 0 : i64, scratch_operands = 0 : i64, tpu.core_type = #tpu.core_type<tc>, window_params = [{transform_indices = @transform_0, window_bounds = array<i64: 1, 64, 128>}, {transform_indices = @transform_1, window_bounds = array<i64: 1, 2, 128>}, {transform_indices = @transform_2, window_bounds = array<i64: 1, 64, 128>}, {transform_indices = @transform_3, window_bounds = array<i64: 1, 64, 128>}]} {
    %c0 = arith.constant 0 : index
    %c0_0 = arith.constant 0 : index
    %c0_1 = arith.constant 0 : index
    %0 = vector.load %arg3[%c0, %c0_0, %c0_1] : memref<1x2x128xf32, #tpu.memory_space<vmem>>, vector<1x2x128xf32>
    %1 = vector.shape_cast %0 : vector<1x2x128xf32> to vector<2x128xf32>
    %c0_2 = arith.constant 0 : index
    %c0_3 = arith.constant 0 : index
    %c0_4 = arith.constant 0 : index
    %2 = vector.load %arg2[%c0_2, %c0_3, %c0_4] : memref<1x64x128xbf16, #tpu.memory_space<vmem>>, vector<1x64x128xbf16>
    %3 = vector.shape_cast %2 : vector<1x64x128xbf16> to vector<64x128xbf16>
    %4 = arith.extf %3 : vector<64x128xbf16> to vector<64x128xf32>
    %5 = vector.extract_strided_slice %1 {offsets = [0, 0], sizes = [1, 128], strides = [1, 1]} : vector<2x128xf32> to vector<1x128xf32>
    %6 = vector.broadcast %5 : vector<1x128xf32> to vector<64x128xf32>
    %7 = arith.mulf %4, %6 : vector<64x128xf32>
    %8 = vector.extract_strided_slice %1 {offsets = [1, 0], sizes = [1, 128], strides = [1, 1]} : vector<2x128xf32> to vector<1x128xf32>
    %9 = vector.broadcast %8 : vector<1x128xf32> to vector<64x128xf32>
    %10 = arith.addf %7, %9 : vector<64x128xf32>
    %c0_5 = arith.constant 0 : index
    %c0_6 = arith.constant 0 : index
    %c0_7 = arith.constant 0 : index
    %11 = vector.load %arg4[%c0_5, %c0_6, %c0_7] : memref<1x64x128xf32, #tpu.memory_space<vmem>>, vector<1x64x128xf32>
    %12 = vector.shape_cast %11 : vector<1x64x128xf32> to vector<64x128xf32>
    %13 = arith.addf %10, %12 : vector<64x128xf32>
    %c0_8 = arith.constant 0 : index
    %c0_9 = arith.constant 0 : index
    %c0_10 = arith.constant 0 : index
    %14 = vector.load %arg5[%c0_8, %c0_9, %c0_10] : memref<1x64x128xf32, #tpu.memory_space<vmem>>, vector<1x64x128xf32>
    %15 = vector.shape_cast %14 : vector<1x64x128xf32> to vector<64x128xf32>
    %16 = vector.shape_cast %13 : vector<64x128xf32> to vector<1x64x128xf32>
    tpu.vector_store %arg5[%c0_8, %c0_9, %c0_10], %16 {strides = array<i32>} : memref<1x64x128xf32, #tpu.memory_space<vmem>>, vector<1x64x128xf32>,
    return
  }
  func.func @transform_0(%arg0: i32, %arg1: i32) -> (i32, i32, i32) {
    %c0_i32 = arith.constant 0 : i32
    %c0_i32_0 = arith.constant 0 : i32
    return %arg0, %arg1, %c0_i32 : i32, i32, i32
  }
  func.func @transform_1(%arg0: i32, %arg1: i32) -> (i32, i32, i32) {
    %c0_i32 = arith.constant 0 : i32
    %c0_i32_0 = arith.constant 0 : i32
    %c0_i32_1 = arith.constant 0 : i32
    return %arg0, %c0_i32, %c0_i32_0 : i32, i32, i32
  }
  func.func @transform_2(%arg0: i32, %arg1: i32) -> (i32, i32, i32) {
    %c0_i32 = arith.constant 0 : i32
    %c0_i32_0 = arith.constant 0 : i32
    return %arg0, %arg1, %c0_i32 : i32, i32, i32
  }
  func.func @transform_3(%arg0: i32, %arg1: i32) -> (i32, i32, i32) {
    %c0_i32 = arith.constant 0 : i32
    %c0_i32_0 = arith.constant 0 : i32
    return %arg0, %arg1, %c0_i32 : i32, i32, i32
  }
}

</mosaic_0001>

<llo_original>
// kernel: _lambda_.8
$region0: #{_lambda_.8}
  #allocation0 [shape = 'u32[]', space=smem, size = 0x4, offset = 0x4, fixed_abs, tag = 'smem constant byte address 0x4 - core index']
  #allocation1 [shape = 'u32[144,128]{1,0:T(1,128)}', space=vmem, size = 0x12000, scoped, tag = 'internal scratch']
  %s0 = inlined_call_operand.vmem [shape: f32[2,128], index: 0, kind: input, shape index: {}]
  %s1 = inlined_call_operand.vmem [shape: f32[128,128], index: 1, kind: input, shape index: {}]
  %s2 = inlined_call_operand.vmem [shape: f32[1,128], index: 2, kind: input, shape index: {}, may-alias: {2,4}]
  %s3 = inlined_call_operand.vmem [shape: f32[128,128], index: 3, kind: input, shape index: {}]
  %s4 = inlined_call_operand.vmem [shape: f32[1,128], index: 4, kind: input, shape index: {}, may-alias: {2,4}]
  %s5 = inlined_call_operand.vmem [shape: f32[2,128], index: 5, kind: output, shape index: {}]
  %s6 = sld [smem:[#allocation0]]
  $region30: #{_lambda_.8} parent=0
    _
  %s8 = ssub.s32 1, %s6
  %s9 = scalar_select 0, %s8, %s6
  // Predicated region
  $region2: #{_lambda_.8} parent=0 // pred_check
    _
  $region3: #{_lambda_.8} parent=0 // pred_check_branch
    %11 = sbr.rel (0) target = $region5
  $region4: #{_lambda_.8} parent=0 // pred_region
    _
  $region5: #{_lambda_.8} parent=0 // pred_fallthru
    _
  // Predicated region
  $region6: #{_lambda_.8} parent=0 // pred_check
    _
  $region7: #{_lambda_.8} parent=0 // pred_check_branch
    %13 = sbr.rel (0) target = $region9
  $region8: #{_lambda_.8} parent=0 // pred_region
    _
  $region9: #{_lambda_.8} parent=0 // pred_fallthru
    _
  // Predicated region
  $region10: #{_lambda_.8} parent=0 // pred_check
    _
  $region11: #{_lambda_.8} parent=0 // pred_check_branch
    %15 = sbr.rel (0) target = $region13
  $region12: #{_lambda_.8} parent=0 // pred_region
    _
  $region13: #{_lambda_.8} parent=0 // pred_fallthru
    _
  // Predicated region
  $region14: #{_lambda_.8} parent=0 // pred_check
    _
  $region15: #{_lambda_.8} parent=0 // pred_check_branch
    %17 = sbr.rel (0) target = $region17
  $region16: #{_lambda_.8} parent=0 // pred_region
    _
  $region17: #{_lambda_.8} parent=0 // pred_fallthru
    _
  // Predicated region
  $region18: #{_lambda_.8} parent=0 // pred_check
    _
  $region19: #{_lambda_.8} parent=0 // pred_check_branch
    %19 = sbr.rel (0) target = $region21
  $region20: #{_lambda_.8} parent=0 // pred_region
    _
  $region21: #{_lambda_.8} parent=0 // pred_fallthru
    _
  %v20 = vld [vmem:[%s0] sm:$0x3]
  %v21 = vld [vmem:[%s1] sm:$0xff]
  %v22 = vld [vmem:[%s1 + $0x8] sm:$0xff]
  %v23 = vld [vmem:[%s1 + $0x10] sm:$0xff]
  %v24 = vld [vmem:[%s1 + $0x18] sm:$0xff]
  %v25 = vld [vmem:[%s1 + $0x20] sm:$0xff]
  %v26 = vld [vmem:[%s1 + $0x28] sm:$0xff]
  %v27 = vld [vmem:[%s1 + $0x30] sm:$0xff]
  %v28 = vld [vmem:[%s1 + $0x38] sm:$0xff]
  %v29 = vld [vmem:[%s1 + $0x40] sm:$0xff]
  %v30 = vld [vmem:[%s1 + $0x48] sm:$0xff]
  %v31 = vld [vmem:[%s1 + $0x50] sm:$0xff]
  %v32 = vld [vmem:[%s1 + $0x58] sm:$0xff]
  %v33 = vld [vmem:[%s1 + $0x60] sm:$0xff]
  %v34 = vld [vmem:[%s1 + $0x68] sm:$0xff]
  %v35 = vld [vmem:[%s1 + $0x70] sm:$0xff]
  %v36 = vld [vmem:[%s1 + $0x78] sm:$0xff]
  %v37 = vld [vmem:[%s2] sm:$0x1]
  %v39 = vlaneseq
  %v40 = vshrl.u32 %v39, 7
  %v41 = vsub.s32 0, %v40
  %v42 = vrot.slane %v37, %v41
  %44 = vmatprep.subr.mxu0 0.0
  %45 = vmatpush1.msra.mxu0 %v36
  %46 = vmatprep.subr.mxu0 0.0
  %47 = vmatpush1.msra.mxu0 %v35
  %48 = vmatprep.subr.mxu0 0.0
  %49 = vmatpush1.msra.mxu0 %v34
  %50 = vmatprep.subr.mxu0 0.0
  %51 = vmatpush1.msra.mxu0 %v33
  %52 = vmatprep.subr.mxu0 0.0
  %53 = vmatpush1.msra.mxu0 %v32
  %54 = vmatprep.subr.mxu0 0.0
  %55 = vmatpush1.msra.mxu0 %v31
  %56 = vmatprep.subr.mxu0 0.0
  %57 = vmatpush1.msra.mxu0 %v30
  %58 = vmatprep.subr.mxu0 0.0
  %59 = vmatpush1.msra.mxu0 %v29
  %60 = vmatprep.subr.mxu0 0.0
  %61 = vmatpush1.msra.mxu0 %v28
  %62 = vmatprep.subr.mxu0 0.0
  %63 = vmatpush1.msra.mxu0 %v27
  %64 = vmatprep.subr.mxu0 0.0
  %65 = vmatpush1.msra.mxu0 %v26
  %66 = vmatprep.subr.mxu0 0.0
  %67 = vmatpush1.msra.mxu0 %v25
  %68 = vmatprep.subr.mxu0 0.0
  %69 = vmatpush1.msra.mxu0 %v24
  %70 = vmatprep.subr.mxu0 0.0
  %71 = vmatpush1.msra.mxu0 %v23
  %72 = vmatprep.subr.mxu0 0.0
  %73 = vmatpush1.msra.mxu0 %v22
  %74 = vmatprep.subr.mxu0 0.0
  %75 = vmatpush1.msra.mxu0 %v21
  %76 = vmatprep.subr.mxu0 0.0
  %77 = vmatpush2.msra.mxu0 0.0
  %78 = vmatprep.subr.mxu0 0.0
  %79 = vmatpush2.msra.mxu0 0.0
  %80 = vmatprep.subr.mxu0 0.0
  %81 = vmatpush2.msra.mxu0 0.0
  %82 = vmatprep.subr.mxu0 0.0
  %83 = vmatpush2.msra.mxu0 0.0
  %84 = vmatprep.subr.mxu0 0.0
  %85 = vmatpush2.msra.mxu0 0.0
  %86 = vmatprep.subr.mxu0 0.0
  %87 = vmatpush2.msra.mxu0 0.0
  %88 = vmatprep.subr.mxu0 0.0
  %89 = vmatpush2.msra.mxu0 0.0
  %90 = vmatprep.subr.mxu0 0.0
  %91 = vmatpush2.msra.mxu0 0.0
  %92 = vmatprep.subr.mxu0 0.0
  %93 = vmatpush2.msra.mxu0 0.0
  %94 = vmatprep.subr.mxu0 0.0
  %95 = vmatpush2.msra.mxu0 0.0
  %96 = vmatprep.subr.mxu0 0.0
  %97 = vmatpush2.msra.mxu0 0.0
  %98 = vmatprep.subr.mxu0 0.0
  %99 = vmatpush2.msra.mxu0 0.0
  %100 = vmatprep.subr.mxu0 0.0
  %101 = vmatpush2.msra.mxu0 0.0
  %102 = vmatprep.subr.mxu0 0.0
  %103 = vmatpush2.msra.mxu0 0.0
  %104 = vmatprep.subr.mxu0 0.0
  %105 = vmatpush2.msra.mxu0 0.0
  %106 = vmatprep.subr.mxu0 0.0
  %107 = vmatpush2.msra.mxu0 0.0
  %108 = vmatprep.mubr.f32.mxu0 0.0
  %109 = vmatmul.mubr.f32.gmra.mxu0 %v20
  %v110 = vpop.f32.mrf.mxu0
  %v111 = vadd.f32 %v42, %v110
  %v112 = vpop.f32.mrf.mxu0
  %113 = vdwg.mxu0
  %v114 = vmax.f32 %v111, 0.0
  %v115 = vld [vmem:[%s3] sm:$0xff]
  %v116 = vld [vmem:[%s3 + $0x8] sm:$0xff]
  %v117 = vld [vmem:[%s3 + $0x10] sm:$0xff]
  %v118 = vld [vmem:[%s3 + $0x18] sm:$0xff]
  %v119 = vld [vmem:[%s3 + $0x20] sm:$0xff]
  %v120 = vld [vmem:[%s3 + $0x28] sm:$0xff]
  %v121 = vld [vmem:[%s3 + $0x30] sm:$0xff]
  %v122 = vld [vmem:[%s3 + $0x38] sm:$0xff]
  %v123 = vld [vmem:[%s3 + $0x40] sm:$0xff]
  %v124 = vld [vmem:[%s3 + $0x48] sm:$0xff]
  %v125 = vld [vmem:[%s3 + $0x50] sm:$0xff]
  %v126 = vld [vmem:[%s3 + $0x58] sm:$0xff]
  %v127 = vld [vmem:[%s3 + $0x60] sm:$0xff]
  %v128 = vld [vmem:[%s3 + $0x68] sm:$0xff]
  %v129 = vld [vmem:[%s3 + $0x70] sm:$0xff]
  %v130 = vld [vmem:[%s3 + $0x78] sm:$0xff]
  %v131 = vld [vmem:[%s4] sm:$0x1]
  %v133 = vlaneseq
  %v134 = vshrl.u32 %v133, 7
  %v135 = vsub.s32 0, %v134
  %v136 = vrot.slane %v131, %v135
  %138 = vmatprep.subr.mxu0 0.0
  %139 = vmatpush1.msra.mxu0 %v130
  %140 = vmatprep.subr.mxu0 0.0
  %141 = vmatpush1.msra.mxu0 %v129
  %142 = vmatprep.subr.mxu0 0.0
  %143 = vmatpush1.msra.mxu0 %v128
  %144 = vmatprep.subr.mxu0 0.0
  %145 = vmatpush1.msra.mxu0 %v127
  %146 = vmatprep.subr.mxu0 0.0
  %147 = vmatpush1.msra.mxu0 %v126
  %148 = vmatprep.subr.mxu0 0.0
  %149 = vmatpush1.msra.mxu0 %v125
  %150 = vmatprep.subr.mxu0 0.0
  %151 = vmatpush1.msra.mxu0 %v124
  %152 = vmatprep.subr.mxu0 0.0
  %153 = vmatpush1.msra.mxu0 %v123
  %154 = vmatprep.subr.mxu0 0.0
  %155 = vmatpush1.msra.mxu0 %v122
  %156 = vmatprep.subr.mxu0 0.0
  %157 = vmatpush1.msra.mxu0 %v121
  %158 = vmatprep.subr.mxu0 0.0
  %159 = vmatpush1.msra.mxu0 %v120
  %160 = vmatprep.subr.mxu0 0.0
  %161 = vmatpush1.msra.mxu0 %v119
  %162 = vmatprep.subr.mxu0 0.0
  %163 = vmatpush1.msra.mxu0 %v118
  %164 = vmatprep.subr.mxu0 0.0
  %165 = vmatpush1.msra.mxu0 %v117
  %166 = vmatprep.subr.mxu0 0.0
  %167 = vmatpush1.msra.mxu0 %v116
  %168 = vmatprep.subr.mxu0 0.0
  %169 = vmatpush1.msra.mxu0 %v115
  %170 = vmatprep.subr.mxu0 0.0
  %171 = vmatpush2.msra.mxu0 0.0
  %172 = vmatprep.subr.mxu0 0.0
  %173 = vmatpush2.msra.mxu0 0.0
  %174 = vmatprep.subr.mxu0 0.0
  %175 = vmatpush2.msra.mxu0 0.0
  %176 = vmatprep.subr.mxu0 0.0
  %177 = vmatpush2.msra.mxu0 0.0
  %178 = vmatprep.subr.mxu0 0.0
  %179 = vmatpush2.msra.mxu0 0.0
  %180 = vmatprep.subr.mxu0 0.0
  %181 = vmatpush2.msra.mxu0 0.0
  %182 = vmatprep.subr.mxu0 0.0
  %183 = vmatpush2.msra.mxu0 0.0
  %184 = vmatprep.subr.mxu0 0.0
  %185 = vmatpush2.msra.mxu0 0.0
  %186 = vmatprep.subr.mxu0 0.0
  %187 = vmatpush2.msra.mxu0 0.0
  %188 = vmatprep.subr.mxu0 0.0
  %189 = vmatpush2.msra.mxu0 0.0
  %190 = vmatprep.subr.mxu0 0.0
  %191 = vmatpush2.msra.mxu0 0.0
  %192 = vmatprep.subr.mxu0 0.0
  %193 = vmatpush2.msra.mxu0 0.0
  %194 = vmatprep.subr.mxu0 0.0
  %195 = vmatpush2.msra.mxu0 0.0
  %196 = vmatprep.subr.mxu0 0.0
  %197 = vmatpush2.msra.mxu0 0.0
  %198 = vmatprep.subr.mxu0 0.0
  %199 = vmatpush2.msra.mxu0 0.0
  %200 = vmatprep.subr.mxu0 0.0
  %201 = vmatpush2.msra.mxu0 0.0
  %202 = vmatprep.mubr.f32.mxu0 0.0
  %203 = vmatmul.mubr.f32.gmra.mxu0 %v114
  %v204 = vpop.f32.mrf.mxu0
  %v205 = vadd.f32 %v136, %v204
  %v206 = vpop.f32.mrf.mxu0
  %207 = vdwg.mxu0
  %v208 = vxor.u32 %v205, 2147483648
  %v209 = vmul.f32 %v208, 1.442695
  %v210 = vpow.pop %v209
  %v211 = vadd.f32 %v210, 1.0
  %v212 = vrcp.pop %v211
  %v213 = vmul.f32 1.0, %v212
  %v214 = vmul.f32 %v213, 1.5
  %215 = vst [vmem:[%s5] sm:$0x3] %v214
  // Predicated region
  $region22: #{_lambda_.8} parent=0 // pred_check
    _
  $region23: #{_lambda_.8} parent=0 // pred_check_branch
    %217 = sbr.rel (0) target = $region25
  $region24: #{_lambda_.8} parent=0 // pred_region
    _
  $region25: #{_lambda_.8} parent=0 // pred_fallthru
    _
  // Predicated region
  $region26: #{_lambda_.8} parent=0 // pred_check
    _
  $region27: #{_lambda_.8} parent=0 // pred_check_branch
    %219 = sbr.rel (0) target = $region29
  $region28: #{_lambda_.8} parent=0 // pred_region
    _
  $region29: #{_lambda_.8} parent=0 // pred_fallthru
    _

// kernel: _lambda_.7
$region0: #{_lambda_.7}
  #allocation0 [shape = 'u32[]', space=smem, size = 0x4, offset = 0x4, fixed_abs, tag = 'smem constant byte address 0x4 - core index']
  #allocation1 [shape = 'u32[144,128]{1,0:T(1,128)}', space=vmem, size = 0x12000, scoped, tag = 'internal scratch']
  %s0 = inlined_call_operand.vmem [shape: bf16[2,64,128], index: 0, kind: input, shape index: {}]
  %s1 = inlined_call_operand.vmem [shape: f32[2,2,128], index: 1, kind: input, shape index: {}]
  %s2 = inlined_call_operand.vmem [shape: bf16[128,128], index: 2, kind: input, shape index: {}]
  %s3 = inlined_call_operand.vmem [shape: f32[2,128], index: 3, kind: input, shape index: {}]
  %s4 = inlined_call_operand.vmem [shape: bf16[2,64,128], index: 4, kind: output, shape index: {0}]
  %s5 = inlined_call_operand.vmem [shape: f32[2,128], index: 5, kind: output, shape index: {1}]
  %s6 = inlined_call_operand.vmem [shape: f32[2,1,128], index: 6, kind: output, shape index: {2}]
  %7 = xla_tuple %s4, %s5, %s6
  %s8 = sld [smem:[#allocation0]]
  $region77: #{_lambda_.7} parent=0
    _
  %s10 = ssub.s32 1, %s8
  %s11 = scalar_select 0, %s10, %s8
  loop: start=0, step=1, limit=4
  $region2: #{_lambda_.7} parent=0 // loop_pre_header
    _
  $region3: #{_lambda_.7} parent=0 // loop_header
    %s13 = sphi 0, %s17
    %p14 = scmp.ge.s32.totalorder %s13, 4
    %s20 = sphi 0, %s32
    %s21 = sphi 0, %s28
    %s22 = sphi 0, %s20
    %s23 = sphi 0, %s21
    %s24 = sphi 0, %s22
    %s25 = sphi 0, %s23
    %s37 = sphi 0, %s39
    %s40 = sphi 0, %s37
    %s41 = sphi 0, %s40
    %s57 = sphi 0, %s41
    %s63 = sphi 0, %s65
    %s66 = sphi 0, %s63
    %s67 = sphi 0, %s66
    %s83 = sphi 0, %s67
    %s87 = sphi 0, %s87
    %s89 = sphi 0, %s87
    %s90 = sphi 0, %s89
    %s104 = sphi 0, %s90
    %s108 = sphi 0, %s108
    %s110 = sphi 0, %s108
    %s111 = sphi 0, %s110
    %s125 = sphi 0, %s111
    %s133 = sphi 0, %s135
    %s136 = sphi 0, %s133
    %s137 = sphi 0, %s136
    %s153 = sphi 0, %s137
    %s157 = sphi 0, %s157
    %s159 = sphi 0, %s157
    %s160 = sphi 0, %s159
    %s174 = sphi 0, %s160
    %s180 = sphi 0, %s182
    %s183 = sphi 0, %s180
    %s184 = sphi 0, %s183
    %s200 = sphi 0, %s184
  $region4: #{_lambda_.7} parent=0 // loop_header_branch
    %16 = sbr.rel (%p14) target = $region8
  $region5: #{_lambda_.7} parent=0 // loop_body
    %s18 = ssub.s32 %s13, 1
    %s19 = ssub.s32 %s13, 2
    %s26 = sadd.s32 1, %s21
    %p27 = scmp.ge.s32.totalorder %s26, 1
    %s28 = scalar_select %p27, 0, %s26
    %s29 = sadd.s32 1, %s20
    %s30 = scalar_select %p27, %s29, %s20
    %p31 = scmp.ge.s32.totalorder %s30, 2
    %s32 = scalar_select %p31, 0, %s30
    %s33 = ssub.s32 %s20, %s32
    %s34 = ssub.s32 %s21, %s28
    %s35 = sor.u32 %s33, %s34
    %p36 = scmp.eq.s32.totalorder %s35, 0
    %s38 = sadd.s32 %s37, 1
    %s39 = scalar_select %p36, %s37, %s38
    %p42 = pneg %p36
    %p43 = scmp.eq.s32.totalorder %s13, 1
    %p44 = por %p42, %p43
    %p45 = scmp.ne.s32.totalorder %s37, %s40
    %p46 = scmp.eq.s32.totalorder %s13, 0
    %p47 = por %p45, %p46
    %p48 = scmp.ne.s32.totalorder %s37, %s40
    %p49 = scmp.eq.s32.totalorder %s18, 1
    %p50 = por %p48, %p49
    %p51 = scmp.ne.s32.totalorder %s40, %s41
    %p52 = scmp.eq.s32.totalorder %s18, 0
    %p53 = por %p51, %p52
    %p54 = scmp.ne.s32.totalorder %s40, %s41
    %p55 = scmp.eq.s32.totalorder %s19, 1
    %p56 = por %p54, %p55
    %p58 = scmp.ne.s32.totalorder %s41, %s57
    %p59 = scmp.eq.s32.totalorder %s19, 0
    %p60 = por %p58, %p59
    %s61 = ssub.s32 %s20, %s32
    %p62 = scmp.eq.s32.totalorder %s61, 0
    %s64 = sadd.s32 %s63, 1
    %s65 = scalar_select %p62, %s63, %s64
    %p68 = pneg %p62
    %p69 = scmp.eq.s32.totalorder %s13, 1
    %p70 = por %p68, %p69
    %p71 = scmp.ne.s32.totalorder %s63, %s66
    %p72 = scmp.eq.s32.totalorder %s13, 0
    %p73 = por %p71, %p72
    %p74 = scmp.ne.s32.totalorder %s63, %s66
    %p75 = scmp.eq.s32.totalorder %s18, 1
    %p76 = por %p74, %p75
    %p77 = scmp.ne.s32.totalorder %s66, %s67
    %p78 = scmp.eq.s32.totalorder %s18, 0
    %p79 = por %p77, %p78
    %p80 = scmp.ne.s32.totalorder %s66, %s67
    %p81 = scmp.eq.s32.totalorder %s19, 1
    %p82 = por %p80, %p81
    %p84 = scmp.ne.s32.totalorder %s67, %s83
    %p85 = scmp.eq.s32.totalorder %s19, 0
    %p86 = por %p84, %p85
    %s88 = sadd.s32 %s87, 1
    %p91 = scmp.eq.s32.totalorder %s13, 1
    %p92 = scmp.ne.s32.totalorder %s87, %s89
    %p93 = scmp.eq.s32.totalorder %s13, 0
    %p94 = por %p92, %p93
    %p95 = scmp.ne.s32.totalorder %s87, %s89
    %p96 = scmp.eq.s32.totalorder %s18, 1
    %p97 = por %p95, %p96
    %p98 = scmp.ne.s32.totalorder %s89, %s90
    %p99 = scmp.eq.s32.totalorder %s18, 0
    %p100 = por %p98, %p99
    %p101 = scmp.ne.s32.totalorder %s89, %s90
    %p102 = scmp.eq.s32.totalorder %s19, 1
    %p103 = por %p101, %p102
    %p105 = scmp.ne.s32.totalorder %s90, %s104
    %p106 = scmp.eq.s32.totalorder %s19, 0
    %p107 = por %p105, %p106
    %s109 = sadd.s32 %s108, 1
    %p112 = scmp.eq.s32.totalorder %s13, 1
    %p113 = scmp.ne.s32.totalorder %s108, %s110
    %p114 = scmp.eq.s32.totalorder %s13, 0
    %p115 = por %p113, %p114
    %p116 = scmp.ne.s32.totalorder %s108, %s110
    %p117 = scmp.eq.s32.totalorder %s18, 1
    %p118 = por %p116, %p117
    %p119 = scmp.ne.s32.totalorder %s110, %s111
    %p120 = scmp.eq.s32.totalorder %s18, 0
    %p121 = por %p119, %p120
    %p122 = scmp.ne.s32.totalorder %s110, %s111
    %p123 = scmp.eq.s32.totalorder %s19, 1
    %p124 = por %p122, %p123
    %p126 = scmp.ne.s32.totalorder %s111, %s125
    %p127 = scmp.eq.s32.totalorder %s19, 0
    %p128 = por %p126, %p127
    %s129 = ssub.s32 %s20, %s32
    %s130 = ssub.s32 %s21, %s28
    %s131 = sor.u32 %s129, %s130
    %p132 = scmp.eq.s32.totalorder %s131, 0
    %s134 = sadd.s32 %s133, 1
    %s135 = scalar_select %p132, %s133, %s134
    %p138 = pneg %p132
    %p139 = scmp.eq.s32.totalorder %s13, 1
    %p140 = por %p138, %p139
    %p141 = scmp.ne.s32.totalorder %s133, %s136
    %p142 = scmp.eq.s32.totalorder %s13, 0
    %p143 = por %p141, %p142
    %p144 = scmp.ne.s32.totalorder %s133, %s136
    %p145 = scmp.eq.s32.totalorder %s18, 1
    %p146 = por %p144, %p145
    %p147 = scmp.ne.s32.totalorder %s136, %s137
    %p148 = scmp.eq.s32.totalorder %s18, 0
    %p149 = por %p147, %p148
    %p150 = scmp.ne.s32.totalorder %s136, %s137
    %p151 = scmp.eq.s32.totalorder %s19, 1
    %p152 = por %p150, %p151
    %p154 = scmp.ne.s32.totalorder %s137, %s153
    %p155 = scmp.eq.s32.totalorder %s19, 0
    %p156 = por %p154, %p155
    %s158 = sadd.s32 %s157, 1
    %p161 = scmp.eq.s32.totalorder %s13, 1
    %p162 = scmp.ne.s32.totalorder %s157, %s159
    %p163 = scmp.eq.s32.totalorder %s13, 0
    %p164 = por %p162, %p163
    %p165 = scmp.ne.s32.totalorder %s157, %s159
    %p166 = scmp.eq.s32.totalorder %s18, 1
    %p167 = por %p165, %p166
    %p168 = scmp.ne.s32.totalorder %s159, %s160
    %p169 = scmp.eq.s32.totalorder %s18, 0
    %p170 = por %p168, %p169
    %p171 = scmp.ne.s32.totalorder %s159, %s160
    %p172 = scmp.eq.s32.totalorder %s19, 1
    %p173 = por %p171, %p172
    %p175 = scmp.ne.s32.totalorder %s160, %s174
    %p176 = scmp.eq.s32.totalorder %s19, 0
    %p177 = por %p175, %p176
    %s178 = ssub.s32 %s20, %s32
    %p179 = scmp.eq.s32.totalorder %s178, 0
    %s181 = sadd.s32 %s180, 1
    %s182 = scalar_select %p179, %s180, %s181
    %p185 = pneg %p179
    %p186 = scmp.eq.s32.totalorder %s13, 1
    %p187 = por %p185, %p186
    %p188 = scmp.ne.s32.totalorder %s180, %s183
    %p189 = scmp.eq.s32.totalorder %s13, 0
    %p190 = por %p188, %p189
    %p191 = scmp.ne.s32.totalorder %s180, %s183
    %p192 = scmp.eq.s32.totalorder %s18, 1
    %p193 = por %p191, %p192
    %p194 = scmp.ne.s32.totalorder %s183, %s184
    %p195 = scmp.eq.s32.totalorder %s18, 0
    %p196 = por %p194, %p195
    %p197 = scmp.ne.s32.totalorder %s183, %s184
    %p198 = scmp.eq.s32.totalorder %s19, 1
    %p199 = por %p197, %p198
    %p201 = scmp.ne.s32.totalorder %s184, %s200
    %p202 = scmp.eq.s32.totalorder %s19, 0
    %p203 = por %p201, %p202
    %p204 = scmp.le.s32.totalorder 1, %s13
    %p205 = scmp.lt.s32.totalorder %s13, 3
    %p206 = pnand %p204, %p205
    %p207 = pneg %p206
    // Predicated region
    $region9: #{_lambda_.7} parent=5 // pred_check
      _
    $region10: #{_lambda_.7} parent=5 // pred_check_branch
      %209 = sbr.rel (%p206) target = $region12
    $region11: #{_lambda_.7} parent=5 // pred_region
      %s210 = ssub.s32 %s13, 1
      // Predicated region
      $region13: #{_lambda_.7} parent=11 // pred_check
        %p211 = pneg %p100
      $region14: #{_lambda_.7} parent=11 // pred_check_branch
        %213 = sbr.rel (%p211) target = $region16
      $region15: #{_lambda_.7} parent=11 // pred_region
        _
      $region16: #{_lambda_.7} parent=11 // pred_fallthru
        _
      // Predicated region
      $region17: #{_lambda_.7} parent=11 // pred_check
        %p214 = pneg %p121
      $region18: #{_lambda_.7} parent=11 // pred_check_branch
        %216 = sbr.rel (%p214) target = $region20
      $region19: #{_lambda_.7} parent=11 // pred_region
        _
      $region20: #{_lambda_.7} parent=11 // pred_fallthru
        _
    $region12: #{_lambda_.7} parent=5 // pred_fallthru
      _
    %p217 = scmp.lt.s32.totalorder %s13, 2
    // Predicated region
    $region21: #{_lambda_.7} parent=5 // pred_check
      %p218 = pneg %p217
    $region22: #{_lambda_.7} parent=5 // pred_check_branch
      %220 = sbr.rel (%p218) target = $region24
    $region23: #{_lambda_.7} parent=5 // pred_region
      // Predicated region
      $region25: #{_lambda_.7} parent=23 // pred_check
        %p221 = pneg %p47
      $region26: #{_lambda_.7} parent=23 // pred_check_branch
        %223 = sbr.rel (%p221) target = $region28
      $region27: #{_lambda_.7} parent=23 // pred_region
        %s224 = smul.u32 8, %s21
        %p225 = scmp.lt.s32.totalorder %s20, 1
        %s226 = scalar_select %p225, %s20, 1
        %p227 = scmp.lt.s32.totalorder %s224, 7
        %s228 = scalar_select %p227, %s224, 7
        %s229 = smul.addr %s226, 8
        %s230 = sadd.s32 %s228, %s229
        %s231 = smul.addr %s230, 4
        %s232 = scalar_lea.vmem %s0, %s231
        %s233 = smul.u32 8, %s21
      $region28: #{_lambda_.7} parent=23 // pred_fallthru
        _
      // Predicated region
      $region29: #{_lambda_.7} parent=23 // pred_check
        %p234 = pneg %p73
      $region30: #{_lambda_.7} parent=23 // pred_check_branch
        %236 = sbr.rel (%p234) target = $region32
      $region31: #{_lambda_.7} parent=23 // pred_region
        %p237 = scmp.lt.s32.totalorder %s20, 1
        %s238 = scalar_select %p237, %s20, 1
        %s239 = smul.addr %s238, 2
        %s240 = scalar_lea.vmem %s1, %s239
      $region32: #{_lambda_.7} parent=23 // pred_fallthru
        _
    $region24: #{_lambda_.7} parent=5 // pred_fallthru
      _
    %p241 = scmp.le.s32.totalorder 1, %s13
    %p242 = scmp.lt.s32.totalorder %s13, 3
    %p243 = pnand %p241, %p242
    %p244 = pneg %p243
    // Predicated region
    $region33: #{_lambda_.7} parent=5 // pred_check
      _
    $region34: #{_lambda_.7} parent=5 // pred_check_branch
      %246 = sbr.rel (%p243) target = $region36
    $region35: #{_lambda_.7} parent=5 // pred_region
      %s247 = ssub.s32 %s13, 1
      %s248 = smul.u32 8, %s23
      %p249 = scmp.lt.s32.totalorder %s22, 1
      %s250 = scalar_select %p249, %s22, 1
      %p251 = scmp.lt.s32.totalorder %s248, 7
      %s252 = scalar_select %p251, %s248, 7
      %s253 = smul.addr %s250, 8
      %s254 = sadd.s32 %s252, %s253
      %s255 = smul.addr %s254, 4
      %s256 = scalar_lea.vmem %s0, %s255
      %p257 = pneg %p53
      %p258 = pneg %p50
      %p259 = scmp.lt.s32.totalorder %s22, 1
      %s260 = scalar_select %p259, %s22, 1
      %s261 = smul.addr %s260, 2
      %s262 = scalar_lea.vmem %s1, %s261
      %p263 = pneg %p79
      %p264 = pneg %p76
      %p265 = pneg %p100
      %p266 = pneg %p97
      %p267 = pneg %p121
      %p268 = pneg %p118
      %p269 = pneg %p149
      %p270 = pneg %p146
      %s271 = smul.u32 8, %s23
      %p272 = scmp.lt.s32.totalorder %s22, 1
      %s273 = scalar_select %p272, %s22, 1
      %p274 = scmp.lt.s32.totalorder %s271, 7
      %s275 = scalar_select %p274, %s271, 7
      %s276 = smul.addr %s273, 8
      %s277 = sadd.s32 %s275, %s276
      %s278 = smul.addr %s277, 4
      %s279 = scalar_lea.vmem %s4, %s278
      %p280 = pneg %p170
      %p281 = pneg %p167
      %p282 = pneg %p196
      %p283 = pneg %p193
      %p284 = scmp.lt.s32.totalorder %s22, 1
      %s285 = scalar_select %p284, %s22, 1
      %s286 = scalar_lea.vmem %s6, %s285
      %s287 = smul.u32 8, %s23
      %p288 = scmp.lt.s32.totalorder %s22, 1
      %s289 = scalar_select %p288, %s22, 1
      %p290 = scmp.lt.s32.totalorder %s287, 7
      %s291 = scalar_select %p290, %s287, 7
      %s292 = smul.addr %s289, 8
      %s293 = sadd.s32 %s291, %s292
      %s294 = smul.addr %s293, 4
      %s295 = scalar_lea.vmem %s0, %s294
      %s296 = smul.u32 8, %s23
      %p297 = scmp.lt.s32.totalorder %s22, 1
      %s298 = scalar_select %p297, %s22, 1
      %s299 = smul.addr %s298, 2
      %s300 = scalar_lea.vmem %s1, %s299
      %s301 = smul.u32 8, %s23
      %p302 = scmp.lt.s32.totalorder %s22, 1
      %s303 = scalar_select %p302, %s22, 1
      %p304 = scmp.lt.s32.totalorder %s301, 7
      %s305 = scalar_select %p304, %s301, 7
      %s306 = smul.addr %s303, 8
      %s307 = sadd.s32 %s305, %s306
      %s308 = smul.addr %s307, 4
      %s309 = scalar_lea.vmem %s4, %s308
      %s310 = smul.u32 8, %s23
      %p311 = scmp.lt.s32.totalorder %s22, 1
      %s312 = scalar_select %p311, %s22, 1
      %s313 = scalar_lea.vmem %s6, %s312
      %p315 = scmp.eq.s32.totalorder %s22, 0
      %p316 = scmp.eq.s32.totalorder %s23, 0
      %p317 = pnand %p315, %p316
      %p318 = pneg %p317
      // Predicated region
      $region37: #{_lambda_.7} parent=35 // pred_check
        _
      $region38: #{_lambda_.7} parent=35 // pred_check_branch
        %320 = sbr.rel (%p317) target = $region40
      $region39: #{_lambda_.7} parent=35 // pred_region
        %321 = vst [vmem:[%s5] sm:$0x3] 0.0
      $region40: #{_lambda_.7} parent=35 // pred_fallthru
        _
      // Predicated region
      $region41: #{_lambda_.7} parent=35 // pred_check
        %p322 = pneg %p316
      $region42: #{_lambda_.7} parent=35 // pred_check_branch
        %324 = sbr.rel (%p322) target = $region44
      $region43: #{_lambda_.7} parent=35 // pred_region
        %325 = vst [vmem:[%s313] sm:$0x1] 0.0
      $region44: #{_lambda_.7} parent=35 // pred_fallthru
        _
      %v326 = vld [vmem:[%s300] sm:$0x3]
      %v327 = vld [vmem:[%s295] sm:$0xf]
      %v328 = vld [vmem:[%s295 + $0x4] sm:$0xf]
      %v329 = vld [vmem:[%s295 + $0x8] sm:$0xf]
      %v330 = vld [vmem:[%s295 + $0xc] sm:$0xf]
      %v331 = vld [vmem:[%s295 + $0x10] sm:$0xf]
      %v332 = vld [vmem:[%s295 + $0x14] sm:$0xf]
      %v333 = vld [vmem:[%s295 + $0x18] sm:$0xf]
      %v334 = vld [vmem:[%s295 + $0x1c] sm:$0xf]
      %v335 = vunpack.c.l.bf16 %v327
      %v336 = vunpack.c.l.bf16 %v328
      %v337 = vunpack.c.l.bf16 %v329
      %v338 = vunpack.c.l.bf16 %v330
      %v339 = vunpack.c.l.bf16 %v331
      %v340 = vunpack.c.l.bf16 %v332
      %v341 = vunpack.c.l.bf16 %v333
      %v342 = vunpack.c.l.bf16 %v334
      %v343 = vlaneseq
      %v344 = vshrl.u32 %v343, 7
      %v345 = vsub.s32 0, %v344
      %v346 = vrot.slane %v326, %v345
      %v347 = vmul.f32 %v335, %v346
      %v348 = vmul.f32 %v336, %v346
      %v349 = vmul.f32 %v337, %v346
      %v350 = vmul.f32 %v338, %v346
      %v351 = vmul.f32 %v339, %v346
      %v352 = vmul.f32 %v340, %v346
      %v353 = vmul.f32 %v341, %v346
      %v354 = vmul.f32 %v342, %v346
      %v355 = vlaneseq
      %v356 = vshrl.u32 %v355, 7
      %v357 = vsub.s32 1, %v356
      %v358 = vrot.slane %v326, %v357
      %v359 = vadd.f32 %v347, %v358
      %v360 = vadd.f32 %v348, %v358
      %v361 = vadd.f32 %v349, %v358
      %v362 = vadd.f32 %v350, %v358
      %v363 = vadd.f32 %v351, %v358
      %v364 = vadd.f32 %v352, %v358
      %v365 = vadd.f32 %v353, %v358
      %v366 = vadd.f32 %v354, %v358
      %v367 = vld [vmem:[%s313] sm:$0x1]
      %v368 = vand.u32 2147483647, %v359
      %v369 = vand.u32 2147483647, %v360
      %v370 = vand.u32 2147483647, %v361
      %v371 = vand.u32 2147483647, %v362
      %v372 = vand.u32 2147483647, %v363
      %v373 = vand.u32 2147483647, %v364
      %v374 = vand.u32 2147483647, %v365
      %v375 = vand.u32 2147483647, %v366
      %v376 = vadd.f32 %v368, %v369
      %v377 = vadd.f32 %v376, %v370
      %v378 = vadd.f32 %v377, %v371
      %v379 = vadd.f32 %v378, %v372
      %v380 = vadd.f32 %v379, %v373
      %v381 = vadd.f32 %v380, %v374
      %v382 = vadd.f32 %v381, %v375
      %v383 = vrot.slane %v382, 4
      %v384 = vadd.f32 %v382, %v383
      %v385 = vrot.slane %v384, 2
      %v386 = vadd.f32 %v384, %v385
      %v387 = vrot.slane %v386, 1
      %v388 = vadd.f32 %v386, %v387
      %v389 = vmul.f32 %v388, 0.015625
      %v390 = vadd.f32 %v367, %v389
      %391 = vst [vmem:[%s313] sm:$0x1] %v390
      %v392 = vpack.c.bf16 %v360, %v359
      %v393 = vpack.c.bf16 %v362, %v361
      %v394 = vpack.c.bf16 %v364, %v363
      %v395 = vpack.c.bf16 %v366, %v365
      %v396 = vld [vmem:[%s2] sm:$0xf]
      %v397 = vld [vmem:[%s2 + $0x4] sm:$0xf]
      %v398 = vld [vmem:[%s2 + $0x8] sm:$0xf]
      %v399 = vld [vmem:[%s2 + $0xc] sm:$0xf]
      %v400 = vld [vmem:[%s2 + $0x10] sm:$0xf]
      %v401 = vld [vmem:[%s2 + $0x14] sm:$0xf]
      %v402 = vld [vmem:[%s2 + $0x18] sm:$0xf]
      %v403 = vld [vmem:[%s2 + $0x1c] sm:$0xf]
      %v404 = vld [vmem:[%s2 + $0x20] sm:$0xf]
      %v405 = vld [vmem:[%s2 + $0x24] sm:$0xf]
      %v406 = vld [vmem:[%s2 + $0x28] sm:$0xf]
      %v407 = vld [vmem:[%s2 + $0x2c] sm:$0xf]
      %v408 = vld [vmem:[%s2 + $0x30] sm:$0xf]
      %v409 = vld [vmem:[%s2 + $0x34] sm:$0xf]
      %v410 = vld [vmem:[%s2 + $0x38] sm:$0xf]
      %v411 = vld [vmem:[%s2 + $0x3c] sm:$0xf]
      %v428 = vunpack.c.l.b16 %v396
      %v429 = vunpack.c.l.b16 %v397
      %v430 = vunpack.c.l.b16 %v398
      %v431 = vunpack.c.l.b16 %v399
      %v432 = vunpack.c.l.b16 %v400
      %v433 = vunpack.c.l.b16 %v401
      %v434 = vunpack.c.l.b16 %v402
      %v435 = vunpack.c.l.b16 %v403
      %v436 = vunpack.c.l.b16 %v404
      %v437 = vunpack.c.l.b16 %v405
      %v438 = vunpack.c.l.b16 %v406
      %v439 = vunpack.c.l.b16 %v407
      %v440 = vunpack.c.l.b16 %v408
      %v441 = vunpack.c.l.b16 %v409
      %v442 = vunpack.c.l.b16 %v410
      %v443 = vunpack.c.l.b16 %v411
      %v444 = vpack.c.b16 %v429, %v428
      %v445 = vpack.c.b16 %v431, %v430
      %v446 = vpack.c.b16 %v433, %v432
      %v447 = vpack.c.b16 %v435, %v434
      %v448 = vpack.c.b16 %v437, %v436
      %v449 = vpack.c.b16 %v439, %v438
      %v450 = vpack.c.b16 %v441, %v440
      %v451 = vpack.c.b16 %v443, %v442
      %460 = vmatprep.subr.bf16.mxu0 0
      %461 = vmatpush1.bf16.msra.mxu0 %v451
      %462 = vmatprep.subr.bf16.mxu0 0
      %463 = vmatpush1.bf16.msra.mxu0 %v450
      %464 = vmatprep.subr.bf16.mxu0 0
      %465 = vmatpush1.bf16.msra.mxu0 %v449
      %466 = vmatprep.subr.bf16.mxu0 0
      %467 = vmatpush1.bf16.msra.mxu0 %v448
      %468 = vmatprep.subr.bf16.mxu0 0
      %469 = vmatpush1.bf16.msra.mxu0 %v447
      %470 = vmatprep.subr.bf16.mxu0 0
      %471 = vmatpush1.bf16.msra.mxu0 %v446
      %472 = vmatprep.subr.bf16.mxu0 0
      %473 = vmatpush1.bf16.msra.mxu0 %v445
      %474 = vmatprep.subr.bf16.mxu0 0
      %475 = vmatpush1.bf16.msra.mxu0 %v444
      %476 = vmatprep.subr.bf16.mxu0 0
      %477 = vmatpush2.bf16.msra.mxu0 0
      %478 = vmatprep.subr.bf16.mxu0 0
      %479 = vmatpush2.bf16.msra.mxu0 0
      %480 = vmatprep.subr.bf16.mxu0 0
      %481 = vmatpush2.bf16.msra.mxu0 0
      %482 = vmatprep.subr.bf16.mxu0 0
      %483 = vmatpush2.bf16.msra.mxu0 0
      %484 = vmatprep.subr.bf16.mxu0 0
      %485 = vmatpush2.bf16.msra.mxu0 0
      %486 = vmatprep.subr.bf16.mxu0 0
      %487 = vmatpush2.bf16.msra.mxu0 0
      %488 = vmatprep.subr.bf16.mxu0 0
      %489 = vmatpush2.bf16.msra.mxu0 0
      %490 = vmatprep.subr.bf16.mxu0 0
      %491 = vmatpush2.bf16.msra.mxu0 0
      %492 = vmatprep.mubr.bf16.mxu0 0
      %493 = vmatmul.mubr.bf16.gmra.mxu0 %v392
      %v494 = vpop.f32.mrf.mxu0
      %v495 = vadd.f32 0.0, %v494
      %v496 = vpop.f32.mrf.mxu0
      %v497 = vpop.f32.mrf.mxu0
      %v498 = vadd.f32 0.0, %v497
      %v499 = vpop.f32.mrf.mxu0
      %500 = vmatprep.mubr.bf16.mxu0 0
      %501 = vmatmul.mubr.bf16.gmra.mxu0 %v393
      %v502 = vpop.f32.mrf.mxu0
      %v503 = vadd.f32 0.0, %v502
      %v504 = vpop.f32.mrf.mxu0
      %v505 = vpop.f32.mrf.mxu0
      %v506 = vadd.f32 0.0, %v505
      %v507 = vpop.f32.mrf.mxu0
      %508 = vmatprep.mubr.bf16.mxu0 0
      %509 = vmatmul.mubr.bf16.gmra.mxu0 %v394
      %v510 = vpop.f32.mrf.mxu0
      %v511 = vadd.f32 0.0, %v510
      %v512 = vpop.f32.mrf.mxu0
      %v513 = vpop.f32.mrf.mxu0
      %v514 = vadd.f32 0.0, %v513
      %v515 = vpop.f32.mrf.mxu0
      %516 = vmatprep.mubr.bf16.mxu0 0
      %517 = vmatmul.mubr.bf16.gmra.mxu0 %v395
      %v518 = vpop.f32.mrf.mxu0
      %v519 = vadd.f32 0.0, %v518
      %v520 = vpop.f32.mrf.mxu0
      %v521 = vpop.f32.mrf.mxu0
      %v522 = vadd.f32 0.0, %v521
      %v523 = vpop.f32.mrf.mxu0
      %524 = vdwg.mxu0
      %v525 = vpack.c.bf16 %v498, %v495
      %v526 = vpack.c.bf16 %v506, %v503
      %v527 = vpack.c.bf16 %v514, %v511
      %v528 = vpack.c.bf16 %v522, %v519
      %v533 = vunpack.c.l.b16 %v525
      %v534 = vunpack.c.h.b16 %v525
      %v535 = vunpack.c.l.b16 %v526
      %v536 = vunpack.c.h.b16 %v526
      %v537 = vunpack.c.l.b16 %v527
      %v538 = vunpack.c.h.b16 %v527
      %v539 = vunpack.c.l.b16 %v528
      %v540 = vunpack.c.h.b16 %v528
      %v541 = vpack.c.b16 %v533, %v533
      %v542 = vpack.c.b16 %v534, %v534
      %v543 = vpack.c.b16 %v535, %v535
      %v544 = vpack.c.b16 %v536, %v536
      %v545 = vpack.c.b16 %v537, %v537
      %v546 = vpack.c.b16 %v538, %v538
      %v547 = vpack.c.b16 %v539, %v539
      %v548 = vpack.c.b16 %v540, %v540
      %557 = vst [vmem:[%s309] sm:$0xf] %v541
      %558 = vst [vmem:[%s309 + $0x4] sm:$0xf] %v542
      %559 = vst [vmem:[%s309 + $0x8] sm:$0xf] %v543
      %560 = vst [vmem:[%s309 + $0xc] sm:$0xf] %v544
      %561 = vst [vmem:[%s309 + $0x10] sm:$0xf] %v545
      %562 = vst [vmem:[%s309 + $0x14] sm:$0xf] %v546
      %563 = vst [vmem:[%s309 + $0x18] sm:$0xf] %v547
      %564 = vst [vmem:[%s309 + $0x1c] sm:$0xf] %v548
      %v565 = vld [vmem:[%s5] sm:$0x1]
      %v566 = vadd.f32 %v495, %v498
      %v567 = vadd.f32 %v566, %v503
      %v568 = vadd.f32 %v567, %v506
      %v569 = vadd.f32 %v568, %v511
      %v570 = vadd.f32 %v569, %v514
      %v571 = vadd.f32 %v570, %v519
      %v572 = vadd.f32 %v571, %v522
      %v573 = vrot.slane %v572, 4
      %v574 = vadd.f32 %v572, %v573
      %v575 = vrot.slane %v574, 2
      %v576 = vadd.f32 %v574, %v575
      %v577 = vrot.slane %v576, 1
      %v578 = vadd.f32 %v576, %v577
      %v579 = vadd.f32 %v565, %v578
      %580 = vst [vmem:[%s5] sm:$0x1] %v579
      %v581 = vld [vmem:[%s5 + $0x1] sm:$0x1]
      %v582 = vmul.f32 %v495, %v495
      %v583 = vmul.f32 %v498, %v498
      %v584 = vmul.f32 %v503, %v503
      %v585 = vmul.f32 %v506, %v506
      %v586 = vmul.f32 %v511, %v511
      %v587 = vmul.f32 %v514, %v514
      %v588 = vmul.f32 %v519, %v519
      %v589 = vmul.f32 %v522, %v522
      %v590 = vadd.f32 %v582, %v583
      %v591 = vadd.f32 %v590, %v584
      %v592 = vadd.f32 %v591, %v585
      %v593 = vadd.f32 %v592, %v586
      %v594 = vadd.f32 %v593, %v587
      %v595 = vadd.f32 %v594, %v588
      %v596 = vadd.f32 %v595, %v589
      %v597 = vrot.slane %v596, 4
      %v598 = vadd.f32 %v596, %v597
      %v599 = vrot.slane %v598, 2
      %v600 = vadd.f32 %v598, %v599
      %v601 = vrot.slane %v600, 1
      %v602 = vadd.f32 %v600, %v601
      %v603 = vadd.f32 %v581, %v602
      %604 = vst [vmem:[%s5 + $0x1] sm:$0x1] %v603
      %p605 = scmp.eq.s32.totalorder %s22, 1
      %p606 = pnand %p605, %p316
      %p607 = pneg %p606
      // Predicated region
      $region45: #{_lambda_.7} parent=35 // pred_check
        _
      $region46: #{_lambda_.7} parent=35 // pred_check_branch
        %609 = sbr.rel (%p606) target = $region48
      $region47: #{_lambda_.7} parent=35 // pred_region
        %v610 = vld [vmem:[%s5] sm:$0x1]
        %v611 = vld [vmem:[%s5 + $0x1] sm:$0x1]
        %v612 = vmul.f32 %v610, 0.0078125
        %v613 = vmul.f32 %v611, 0.0078125
        %v614 = vmul.f32 %v612, %v612
        %v615 = vsub.f32 %v613, %v614
        %v616 = vld [vmem:[%s3] sm:$0x1]
        %v617 = vadd.f32 %v615, 1e-05
        %v618 = vrsqrt.pop %v617
        %v619 = vmul.f32 %v616, %v618
        %v620 = vld [vmem:[%s3 + $0x1] sm:$0x1]
        %v621 = vmul.f32 %v612, %v619
        %v622 = vsub.f32 %v620, %v621
        %623 = vst [vmem:[%s5] sm:$0x1] %v619
        %624 = vst [vmem:[%s5 + $0x1] sm:$0x1] %v622
      $region48: #{_lambda_.7} parent=35 // pred_fallthru
        _
      %s625 = smul.u32 8, %s23
      %p626 = scmp.lt.s32.totalorder %s22, 1
      %s627 = scalar_select %p626, %s22, 1
      %p628 = scmp.lt.s32.totalorder %s625, 7
      %s629 = scalar_select %p628, %s625, 7
      %s630 = smul.addr %s627, 8
      %s631 = sadd.s32 %s629, %s630
      %s632 = smul.addr %s631, 4
      %s633 = scalar_lea.vmem %s4, %s632
      %p634 = scmp.lt.s32.totalorder %s22, 1
      %s635 = scalar_select %p634, %s22, 1
      %s636 = scalar_lea.vmem %s6, %s635
      // Predicated region
      $region49: #{_lambda_.7} parent=35 // pred_check
        %p637 = pneg %p146
      $region50: #{_lambda_.7} parent=35 // pred_check_branch
        %639 = sbr.rel (%p637) target = $region52
      $region51: #{_lambda_.7} parent=35 // pred_region
        %s640 = smul.u32 8, %s23
      $region52: #{_lambda_.7} parent=35 // pred_fallthru
        _
      // Predicated region
      $region53: #{_lambda_.7} parent=35 // pred_check
        %p641 = pneg %p167
      $region54: #{_lambda_.7} parent=35 // pred_check_branch
        %643 = sbr.rel (%p641) target = $region56
      $region55: #{_lambda_.7} parent=35 // pred_region
        _
      $region56: #{_lambda_.7} parent=35 // pred_fallthru
        _
      // Predicated region
      $region57: #{_lambda_.7} parent=35 // pred_check
        %p644 = pneg %p193
      $region58: #{_lambda_.7} parent=35 // pred_check_branch
        %646 = sbr.rel (%p644) target = $region60
      $region59: #{_lambda_.7} parent=35 // pred_region
        _
      $region60: #{_lambda_.7} parent=35 // pred_fallthru
        _
      // Predicated region
      $region61: #{_lambda_.7} parent=35 // pred_check
        %p647 = pneg %p167
      $region62: #{_lambda_.7} parent=35 // pred_check_branch
        %649 = sbr.rel (%p647) target = $region64
      $region63: #{_lambda_.7} parent=35 // pred_region
        _
      $region64: #{_lambda_.7} parent=35 // pred_fallthru
        _
    $region36: #{_lambda_.7} parent=5 // pred_fallthru
      _
    %p650 = scmp.le.s32.totalorder 2, %s13
    // Predicated region
    $region65: #{_lambda_.7} parent=5 // pred_check
      %p651 = pneg %p650
    $region66: #{_lambda_.7} parent=5 // pred_check_branch
      %653 = sbr.rel (%p651) target = $region68
    $region67: #{_lambda_.7} parent=5 // pred_region
      %s654 = ssub.s32 %s13, 2
      // Predicated region
      $region69: #{_lambda_.7} parent=67 // pred_check
        %p655 = pneg %p152
      $region70: #{_lambda_.7} parent=67 // pred_check_branch
        %657 = sbr.rel (%p655) target = $region72
      $region71: #{_lambda_.7} parent=67 // pred_region
        %s658 = smul.u32 8, %s25
        %p659 = scmp.lt.s32.totalorder %s24, 1
        %s660 = scalar_select %p659, %s24, 1
        %p661 = scmp.lt.s32.totalorder %s658, 7
        %s662 = scalar_select %p661, %s658, 7
        %s663 = smul.addr %s660, 8
        %s664 = sadd.s32 %s662, %s663
        %s665 = smul.addr %s664, 4
        %s666 = scalar_lea.vmem %s4, %s665
      $region72: #{_lambda_.7} parent=67 // pred_fallthru
        _
      // Predicated region
      $region73: #{_lambda_.7} parent=67 // pred_check
        %p667 = pneg %p199
      $region74: #{_lambda_.7} parent=67 // pred_check_branch
        %669 = sbr.rel (%p667) target = $region76
      $region75: #{_lambda_.7} parent=67 // pred_region
        %p670 = scmp.lt.s32.totalorder %s24, 1
        %s671 = scalar_select %p670, %s24, 1
        %s672 = scalar_lea.vmem %s6, %s671
      $region76: #{_lambda_.7} parent=67 // pred_fallthru
        _
    $region68: #{_lambda_.7} parent=5 // pred_fallthru
      _
  $region6: #{_lambda_.7} parent=0 // loop_footer
    %s17 = sadd.s32 1, %s13
  $region7: #{_lambda_.7} parent=0 // loop_footer_branch
    %12 = sbr.rel target = $region3
  $region8: #{_lambda_.7} parent=0 // loop_exit
    _

// kernel: _lambda_.11
$region0: #{_lambda_.11}
  #allocation0 [shape = 'u32[]', space=smem, size = 0x4, offset = 0x4, fixed_abs, tag = 'smem constant byte address 0x4 - core index']
  #allocation1 [shape = 'u32[144,128]{1,0:T(1,128)}', space=vmem, size = 0x12000, scoped, tag = 'internal scratch']
  %s0 = inlined_call_operand.vmem [shape: bf16[2,64,128], index: 0, kind: input, shape index: {}]
  %s1 = inlined_call_operand.vmem [shape: f32[2,2,128], index: 1, kind: input, shape index: {}]
  %s2 = inlined_call_operand.vmem [shape: bf16[128,128], index: 2, kind: input, shape index: {}]
  %s3 = inlined_call_operand.vmem [shape: f32[2,128], index: 3, kind: input, shape index: {}]
  %s4 = inlined_call_operand.vmem [shape: bf16[2,64,128], index: 4, kind: output, shape index: {0}]
  %s5 = inlined_call_operand.vmem [shape: f32[2,128], index: 5, kind: output, shape index: {1}]
  %s6 = inlined_call_operand.vmem [shape: f32[2,1,128], index: 6, kind: output, shape index: {2}]
  %7 = xla_tuple %s4, %s5, %s6
  %s8 = sld [smem:[#allocation0]]
  $region77: #{_lambda_.11} parent=0
    _
  %s10 = ssub.s32 1, %s8
  %s11 = scalar_select 0, %s10, %s8
  loop: start=0, step=1, limit=4
  $region2: #{_lambda_.11} parent=0 // loop_pre_header
    _
  $region3: #{_lambda_.11} parent=0 // loop_header
    %s13 = sphi 0, %s17
    %p14 = scmp.ge.s32.totalorder %s13, 4
    %s20 = sphi 0, %s32
    %s21 = sphi 0, %s28
    %s22 = sphi 0, %s20
    %s23 = sphi 0, %s21
    %s24 = sphi 0, %s22
    %s25 = sphi 0, %s23
    %s37 = sphi 0, %s39
    %s40 = sphi 0, %s37
    %s41 = sphi 0, %s40
    %s57 = sphi 0, %s41
    %s63 = sphi 0, %s65
    %s66 = sphi 0, %s63
    %s67 = sphi 0, %s66
    %s83 = sphi 0, %s67
    %s87 = sphi 0, %s87
    %s89 = sphi 0, %s87
    %s90 = sphi 0, %s89
    %s104 = sphi 0, %s90
    %s108 = sphi 0, %s108
    %s110 = sphi 0, %s108
    %s111 = sphi 0, %s110
    %s125 = sphi 0, %s111
    %s133 = sphi 0, %s135
    %s136 = sphi 0, %s133
    %s137 = sphi 0, %s136
    %s153 = sphi 0, %s137
    %s157 = sphi 0, %s157
    %s159 = sphi 0, %s157
    %s160 = sphi 0, %s159
    %s174 = sphi 0, %s160
    %s180 = sphi 0, %s182
    %s183 = sphi 0, %s180
    %s184 = sphi 0, %s183
    %s200 = sphi 0, %s184
  $region4: #{_lambda_.11} parent=0 // loop_header_branch
    %16 = sbr.rel (%p14) target = $region8
  $region5: #{_lambda_.11} parent=0 // loop_body
    %s18 = ssub.s32 %s13, 1
    %s19 = ssub.s32 %s13, 2
    %s26 = sadd.s32 1, %s21
    %p27 = scmp.ge.s32.totalorder %s26, 1
    %s28 = scalar_select %p27, 0, %s26
    %s29 = sadd.s32 1, %s20
    %s30 = scalar_select %p27, %s29, %s20
    %p31 = scmp.ge.s32.totalorder %s30, 2
    %s32 = scalar_select %p31, 0, %s30
    %s33 = ssub.s32 %s20, %s32
    %s34 = ssub.s32 %s21, %s28
    %s35 = sor.u32 %s33, %s34
    %p36 = scmp.eq.s32.totalorder %s35, 0
    %s38 = sadd.s32 %s37, 1
    %s39 = scalar_select %p36, %s37, %s38
    %p42 = pneg %p36
    %p43 = scmp.eq.s32.totalorder %s13, 1
    %p44 = por %p42, %p43
    %p45 = scmp.ne.s32.totalorder %s37, %s40
    %p46 = scmp.eq.s32.totalorder %s13, 0
    %p47 = por %p45, %p46
    %p48 = scmp.ne.s32.totalorder %s37, %s40
    %p49 = scmp.eq.s32.totalorder %s18, 1
    %p50 = por %p48, %p49
    %p51 = scmp.ne.s32.totalorder %s40, %s41
    %p52 = scmp.eq.s32.totalorder %s18, 0
    %p53 = por %p51, %p52
    %p54 = scmp.ne.s32.totalorder %s40, %s41
    %p55 = scmp.eq.s32.totalorder %s19, 1
    %p56 = por %p54, %p55
    %p58 = scmp.ne.s32.totalorder %s41, %s57
    %p59 = scmp.eq.s32.totalorder %s19, 0
    %p60 = por %p58, %p59
    %s61 = ssub.s32 %s20, %s32
    %p62 = scmp.eq.s32.totalorder %s61, 0
    %s64 = sadd.s32 %s63, 1
    %s65 = scalar_select %p62, %s63, %s64
    %p68 = pneg %p62
    %p69 = scmp.eq.s32.totalorder %s13, 1
    %p70 = por %p68, %p69
    %p71 = scmp.ne.s32.totalorder %s63, %s66
    %p72 = scmp.eq.s32.totalorder %s13, 0
    %p73 = por %p71, %p72
    %p74 = scmp.ne.s32.totalorder %s63, %s66
    %p75 = scmp.eq.s32.totalorder %s18, 1
    %p76 = por %p74, %p75
    %p77 = scmp.ne.s32.totalorder %s66, %s67
    %p78 = scmp.eq.s32.totalorder %s18, 0
    %p79 = por %p77, %p78
    %p80 = scmp.ne.s32.totalorder %s66, %s67
    %p81 = scmp.eq.s32.totalorder %s19, 1
    %p82 = por %p80, %p81
    %p84 = scmp.ne.s32.totalorder %s67, %s83
    %p85 = scmp.eq.s32.totalorder %s19, 0
    %p86 = por %p84, %p85
    %s88 = sadd.s32 %s87, 1
    %p91 = scmp.eq.s32.totalorder %s13, 1
    %p92 = scmp.ne.s32.totalorder %s87, %s89
    %p93 = scmp.eq.s32.totalorder %s13, 0
    %p94 = por %p92, %p93
    %p95 = scmp.ne.s32.totalorder %s87, %s89
    %p96 = scmp.eq.s32.totalorder %s18, 1
    %p97 = por %p95, %p96
    %p98 = scmp.ne.s32.totalorder %s89, %s90
    %p99 = scmp.eq.s32.totalorder %s18, 0
    %p100 = por %p98, %p99
    %p101 = scmp.ne.s32.totalorder %s89, %s90
    %p102 = scmp.eq.s32.totalorder %s19, 1
    %p103 = por %p101, %p102
    %p105 = scmp.ne.s32.totalorder %s90, %s104
    %p106 = scmp.eq.s32.totalorder %s19, 0
    %p107 = por %p105, %p106
    %s109 = sadd.s32 %s108, 1
    %p112 = scmp.eq.s32.totalorder %s13, 1
    %p113 = scmp.ne.s32.totalorder %s108, %s110
    %p114 = scmp.eq.s32.totalorder %s13, 0
    %p115 = por %p113, %p114
    %p116 = scmp.ne.s32.totalorder %s108, %s110
    %p117 = scmp.eq.s32.totalorder %s18, 1
    %p118 = por %p116, %p117
    %p119 = scmp.ne.s32.totalorder %s110, %s111
    %p120 = scmp.eq.s32.totalorder %s18, 0
    %p121 = por %p119, %p120
    %p122 = scmp.ne.s32.totalorder %s110, %s111
    %p123 = scmp.eq.s32.totalorder %s19, 1
    %p124 = por %p122, %p123
    %p126 = scmp.ne.s32.totalorder %s111, %s125
    %p127 = scmp.eq.s32.totalorder %s19, 0
    %p128 = por %p126, %p127
    %s129 = ssub.s32 %s20, %s32
    %s130 = ssub.s32 %s21, %s28
    %s131 = sor.u32 %s129, %s130
    %p132 = scmp.eq.s32.totalorder %s131, 0
    %s134 = sadd.s32 %s133, 1
    %s135 = scalar_select %p132, %s133, %s134
    %p138 = pneg %p132
    %p139 = scmp.eq.s32.totalorder %s13, 1
    %p140 = por %p138, %p139
    %p141 = scmp.ne.s32.totalorder %s133, %s136
    %p142 = scmp.eq.s32.totalorder %s13, 0
    %p143 = por %p141, %p142
    %p144 = scmp.ne.s32.totalorder %s133, %s136
    %p145 = scmp.eq.s32.totalorder %s18, 1
    %p146 = por %p144, %p145
    %p147 = scmp.ne.s32.totalorder %s136, %s137
    %p148 = scmp.eq.s32.totalorder %s18, 0
    %p149 = por %p147, %p148
    %p150 = scmp.ne.s32.totalorder %s136, %s137
    %p151 = scmp.eq.s32.totalorder %s19, 1
    %p152 = por %p150, %p151
    %p154 = scmp.ne.s32.totalorder %s137, %s153
    %p155 = scmp.eq.s32.totalorder %s19, 0
    %p156 = por %p154, %p155
    %s158 = sadd.s32 %s157, 1
    %p161 = scmp.eq.s32.totalorder %s13, 1
    %p162 = scmp.ne.s32.totalorder %s157, %s159
    %p163 = scmp.eq.s32.totalorder %s13, 0
    %p164 = por %p162, %p163
    %p165 = scmp.ne.s32.totalorder %s157, %s159
    %p166 = scmp.eq.s32.totalorder %s18, 1
    %p167 = por %p165, %p166
    %p168 = scmp.ne.s32.totalorder %s159, %s160
    %p169 = scmp.eq.s32.totalorder %s18, 0
    %p170 = por %p168, %p169
    %p171 = scmp.ne.s32.totalorder %s159, %s160
    %p172 = scmp.eq.s32.totalorder %s19, 1
    %p173 = por %p171, %p172
    %p175 = scmp.ne.s32.totalorder %s160, %s174
    %p176 = scmp.eq.s32.totalorder %s19, 0
    %p177 = por %p175, %p176
    %s178 = ssub.s32 %s20, %s32
    %p179 = scmp.eq.s32.totalorder %s178, 0
    %s181 = sadd.s32 %s180, 1
    %s182 = scalar_select %p179, %s180, %s181
    %p185 = pneg %p179
    %p186 = scmp.eq.s32.totalorder %s13, 1
    %p187 = por %p185, %p186
    %p188 = scmp.ne.s32.totalorder %s180, %s183
    %p189 = scmp.eq.s32.totalorder %s13, 0
    %p190 = por %p188, %p189
    %p191 = scmp.ne.s32.totalorder %s180, %s183
    %p192 = scmp.eq.s32.totalorder %s18, 1
    %p193 = por %p191, %p192
    %p194 = scmp.ne.s32.totalorder %s183, %s184
    %p195 = scmp.eq.s32.totalorder %s18, 0
    %p196 = por %p194, %p195
    %p197 = scmp.ne.s32.totalorder %s183, %s184
    %p198 = scmp.eq.s32.totalorder %s19, 1
    %p199 = por %p197, %p198
    %p201 = scmp.ne.s32.totalorder %s184, %s200
    %p202 = scmp.eq.s32.totalorder %s19, 0
    %p203 = por %p201, %p202
    %p204 = scmp.le.s32.totalorder 1, %s13
    %p205 = scmp.lt.s32.totalorder %s13, 3
    %p206 = pnand %p204, %p205
    %p207 = pneg %p206
    // Predicated region
    $region9: #{_lambda_.11} parent=5 // pred_check
      _
    $region10: #{_lambda_.11} parent=5 // pred_check_branch
      %209 = sbr.rel (%p206) target = $region12
    $region11: #{_lambda_.11} parent=5 // pred_region
      %s210 = ssub.s32 %s13, 1
      // Predicated region
      $region13: #{_lambda_.11} parent=11 // pred_check
        %p211 = pneg %p100
      $region14: #{_lambda_.11} parent=11 // pred_check_branch
        %213 = sbr.rel (%p211) target = $region16
      $region15: #{_lambda_.11} parent=11 // pred_region
        _
      $region16: #{_lambda_.11} parent=11 // pred_fallthru
        _
      // Predicated region
      $region17: #{_lambda_.11} parent=11 // pred_check
        %p214 = pneg %p121
      $region18: #{_lambda_.11} parent=11 // pred_check_branch
        %216 = sbr.rel (%p214) target = $region20
      $region19: #{_lambda_.11} parent=11 // pred_region
        _
      $region20: #{_lambda_.11} parent=11 // pred_fallthru
        _
    $region12: #{_lambda_.11} parent=5 // pred_fallthru
      _
    %p217 = scmp.lt.s32.totalorder %s13, 2
    // Predicated region
    $region21: #{_lambda_.11} parent=5 // pred_check
      %p218 = pneg %p217
    $region22: #{_lambda_.11} parent=5 // pred_check_branch
      %220 = sbr.rel (%p218) target = $region24
    $region23: #{_lambda_.11} parent=5 // pred_region
      // Predicated region
      $region25: #{_lambda_.11} parent=23 // pred_check
        %p221 = pneg %p47
      $region26: #{_lambda_.11} parent=23 // pred_check_branch
        %223 = sbr.rel (%p221) target = $region28
      $region27: #{_lambda_.11} parent=23 // pred_region
        %s224 = smul.u32 8, %s21
        %p225 = scmp.lt.s32.totalorder %s20, 1
        %s226 = scalar_select %p225, %s20, 1
        %p227 = scmp.lt.s32.totalorder %s224, 7
        %s228 = scalar_select %p227, %s224, 7
        %s229 = smul.addr %s226, 8
        %s230 = sadd.s32 %s228, %s229
        %s231 = smul.addr %s230, 4
        %s232 = scalar_lea.vmem %s0, %s231
        %s233 = smul.u32 8, %s21
      $region28: #{_lambda_.11} parent=23 // pred_fallthru
        _
      // Predicated region
      $region29: #{_lambda_.11} parent=23 // pred_check
        %p234 = pneg %p73
      $region30: #{_lambda_.11} parent=23 // pred_check_branch
        %236 = sbr.rel (%p234) target = $region32
      $region31: #{_lambda_.11} parent=23 // pred_region
        %p237 = scmp.lt.s32.totalorder %s20, 1
        %s238 = scalar_select %p237, %s20, 1
        %s239 = smul.addr %s238, 2
        %s240 = scalar_lea.vmem %s1, %s239
      $region32: #{_lambda_.11} parent=23 // pred_fallthru
        _
    $region24: #{_lambda_.11} parent=5 // pred_fallthru
      _
    %p241 = scmp.le.s32.totalorder 1, %s13
    %p242 = scmp.lt.s32.totalorder %s13, 3
    %p243 = pnand %p241, %p242
    %p244 = pneg %p243
    // Predicated region
    $region33: #{_lambda_.11} parent=5 // pred_check
      _
    $region34: #{_lambda_.11} parent=5 // pred_check_branch
      %246 = sbr.rel (%p243) target = $region36
    $region35: #{_lambda_.11} parent=5 // pred_region
      %s247 = ssub.s32 %s13, 1
      %s248 = smul.u32 8, %s23
      %p249 = scmp.lt.s32.totalorder %s22, 1
      %s250 = scalar_select %p249, %s22, 1
      %p251 = scmp.lt.s32.totalorder %s248, 7
      %s252 = scalar_select %p251, %s248, 7
      %s253 = smul.addr %s250, 8
      %s254 = sadd.s32 %s252, %s253
      %s255 = smul.addr %s254, 4
      %s256 = scalar_lea.vmem %s0, %s255
      %p257 = pneg %p53
      %p258 = pneg %p50
      %p259 = scmp.lt.s32.totalorder %s22, 1
      %s260 = scalar_select %p259, %s22, 1
      %s261 = smul.addr %s260, 2
      %s262 = scalar_lea.vmem %s1, %s261
      %p263 = pneg %p79
      %p264 = pneg %p76
      %p265 = pneg %p100
      %p266 = pneg %p97
      %p267 = pneg %p121
      %p268 = pneg %p118
      %p269 = pneg %p149
      %p270 = pneg %p146
      %s271 = smul.u32 8, %s23
      %p272 = scmp.lt.s32.totalorder %s22, 1
      %s273 = scalar_select %p272, %s22, 1
      %p274 = scmp.lt.s32.totalorder %s271, 7
      %s275 = scalar_select %p274, %s271, 7
      %s276 = smul.addr %s273, 8
      %s277 = sadd.s32 %s275, %s276
      %s278 = smul.addr %s277, 4
      %s279 = scalar_lea.vmem %s4, %s278
      %p280 = pneg %p170
      %p281 = pneg %p167
      %p282 = pneg %p196
      %p283 = pneg %p193
      %p284 = scmp.lt.s32.totalorder %s22, 1
      %s285 = scalar_select %p284, %s22, 1
      %s286 = scalar_lea.vmem %s6, %s285
      %s287 = smul.u32 8, %s23
      %p288 = scmp.lt.s32.totalorder %s22, 1
      %s289 = scalar_select %p288, %s22, 1
      %p290 = scmp.lt.s32.totalorder %s287, 7
      %s291 = scalar_select %p290, %s287, 7
      %s292 = smul.addr %s289, 8
      %s293 = sadd.s32 %s291, %s292
      %s294 = smul.addr %s293, 4
      %s295 = scalar_lea.vmem %s0, %s294
      %s296 = smul.u32 8, %s23
      %p297 = scmp.lt.s32.totalorder %s22, 1
      %s298 = scalar_select %p297, %s22, 1
      %s299 = smul.addr %s298, 2
      %s300 = scalar_lea.vmem %s1, %s299
      %s301 = smul.u32 8, %s23
      %p302 = scmp.lt.s32.totalorder %s22, 1
      %s303 = scalar_select %p302, %s22, 1
      %p304 = scmp.lt.s32.totalorder %s301, 7
      %s305 = scalar_select %p304, %s301, 7
      %s306 = smul.addr %s303, 8
      %s307 = sadd.s32 %s305, %s306
      %s308 = smul.addr %s307, 4
      %s309 = scalar_lea.vmem %s4, %s308
      %s310 = smul.u32 8, %s23
      %p311 = scmp.lt.s32.totalorder %s22, 1
      %s312 = scalar_select %p311, %s22, 1
      %s313 = scalar_lea.vmem %s6, %s312
      %p315 = scmp.eq.s32.totalorder %s22, 0
      %p316 = scmp.eq.s32.totalorder %s23, 0
      %p317 = pnand %p315, %p316
      %p318 = pneg %p317
      // Predicated region
      $region37: #{_lambda_.11} parent=35 // pred_check
        _
      $region38: #{_lambda_.11} parent=35 // pred_check_branch
        %320 = sbr.rel (%p317) target = $region40
      $region39: #{_lambda_.11} parent=35 // pred_region
        %321 = vst [vmem:[%s5] sm:$0x3] 0.0
      $region40: #{_lambda_.11} parent=35 // pred_fallthru
        _
      // Predicated region
      $region41: #{_lambda_.11} parent=35 // pred_check
        %p322 = pneg %p316
      $region42: #{_lambda_.11} parent=35 // pred_check_branch
        %324 = sbr.rel (%p322) target = $region44
      $region43: #{_lambda_.11} parent=35 // pred_region
        %325 = vst [vmem:[%s313] sm:$0x1] 0.0
      $region44: #{_lambda_.11} parent=35 // pred_fallthru
        _
      %v326 = vld [vmem:[%s300] sm:$0x3]
      %v327 = vld [vmem:[%s295] sm:$0xf]
      %v328 = vld [vmem:[%s295 + $0x4] sm:$0xf]
      %v329 = vld [vmem:[%s295 + $0x8] sm:$0xf]
      %v330 = vld [vmem:[%s295 + $0xc] sm:$0xf]
      %v331 = vld [vmem:[%s295 + $0x10] sm:$0xf]
      %v332 = vld [vmem:[%s295 + $0x14] sm:$0xf]
      %v333 = vld [vmem:[%s295 + $0x18] sm:$0xf]
      %v334 = vld [vmem:[%s295 + $0x1c] sm:$0xf]
      %v335 = vunpack.c.l.bf16 %v327
      %v336 = vunpack.c.l.bf16 %v328
      %v337 = vunpack.c.l.bf16 %v329
      %v338 = vunpack.c.l.bf16 %v330
      %v339 = vunpack.c.l.bf16 %v331
      %v340 = vunpack.c.l.bf16 %v332
      %v341 = vunpack.c.l.bf16 %v333
      %v342 = vunpack.c.l.bf16 %v334
      %v343 = vlaneseq
      %v344 = vshrl.u32 %v343, 7
      %v345 = vsub.s32 0, %v344
      %v346 = vrot.slane %v326, %v345
      %v347 = vmul.f32 %v335, %v346
      %v348 = vmul.f32 %v336, %v346
      %v349 = vmul.f32 %v337, %v346
      %v350 = vmul.f32 %v338, %v346
      %v351 = vmul.f32 %v339, %v346
      %v352 = vmul.f32 %v340, %v346
      %v353 = vmul.f32 %v341, %v346
      %v354 = vmul.f32 %v342, %v346
      %v355 = vlaneseq
      %v356 = vshrl.u32 %v355, 7
      %v357 = vsub.s32 1, %v356
      %v358 = vrot.slane %v326, %v357
      %v359 = vadd.f32 %v347, %v358
      %v360 = vadd.f32 %v348, %v358
      %v361 = vadd.f32 %v349, %v358
      %v362 = vadd.f32 %v350, %v358
      %v363 = vadd.f32 %v351, %v358
      %v364 = vadd.f32 %v352, %v358
      %v365 = vadd.f32 %v353, %v358
      %v366 = vadd.f32 %v354, %v358
      %v367 = vmax.f32 %v359, 0.0
      %v368 = vmax.f32 %v360, 0.0
      %v369 = vmax.f32 %v361, 0.0
      %v370 = vmax.f32 %v362, 0.0
      %v371 = vmax.f32 %v363, 0.0
      %v372 = vmax.f32 %v364, 0.0
      %v373 = vmax.f32 %v365, 0.0
      %v374 = vmax.f32 %v366, 0.0
      %v375 = vld [vmem:[%s313] sm:$0x1]
      %v376 = vand.u32 2147483647, %v367
      %v377 = vand.u32 2147483647, %v368
      %v378 = vand.u32 2147483647, %v369
      %v379 = vand.u32 2147483647, %v370
      %v380 = vand.u32 2147483647, %v371
      %v381 = vand.u32 2147483647, %v372
      %v382 = vand.u32 2147483647, %v373
      %v383 = vand.u32 2147483647, %v374
      %v384 = vadd.f32 %v376, %v377
      %v385 = vadd.f32 %v384, %v378
      %v386 = vadd.f32 %v385, %v379
      %v387 = vadd.f32 %v386, %v380
      %v388 = vadd.f32 %v387, %v381
      %v389 = vadd.f32 %v388, %v382
      %v390 = vadd.f32 %v389, %v383
      %v391 = vrot.slane %v390, 4
      %v392 = vadd.f32 %v390, %v391
      %v393 = vrot.slane %v392, 2
      %v394 = vadd.f32 %v392, %v393
      %v395 = vrot.slane %v394, 1
      %v396 = vadd.f32 %v394, %v395
      %v397 = vmul.f32 %v396, 0.015625
      %v398 = vadd.f32 %v375, %v397
      %399 = vst [vmem:[%s313] sm:$0x1] %v398
      %v400 = vpack.c.bf16 %v368, %v367
      %v401 = vpack.c.bf16 %v370, %v369
      %v402 = vpack.c.bf16 %v372, %v371
      %v403 = vpack.c.bf16 %v374, %v373
      %v404 = vld [vmem:[%s2] sm:$0xf]
      %v405 = vld [vmem:[%s2 + $0x4] sm:$0xf]
      %v406 = vld [vmem:[%s2 + $0x8] sm:$0xf]
      %v407 = vld [vmem:[%s2 + $0xc] sm:$0xf]
      %v408 = vld [vmem:[%s2 + $0x10] sm:$0xf]
      %v409 = vld [vmem:[%s2 + $0x14] sm:$0xf]
      %v410 = vld [vmem:[%s2 + $0x18] sm:$0xf]
      %v411 = vld [vmem:[%s2 + $0x1c] sm:$0xf]
      %v412 = vld [vmem:[%s2 + $0x20] sm:$0xf]
      %v413 = vld [vmem:[%s2 + $0x24] sm:$0xf]
      %v414 = vld [vmem:[%s2 + $0x28] sm:$0xf]
      %v415 = vld [vmem:[%s2 + $0x2c] sm:$0xf]
      %v416 = vld [vmem:[%s2 + $0x30] sm:$0xf]
      %v417 = vld [vmem:[%s2 + $0x34] sm:$0xf]
      %v418 = vld [vmem:[%s2 + $0x38] sm:$0xf]
      %v419 = vld [vmem:[%s2 + $0x3c] sm:$0xf]
      %v436 = vunpack.c.l.b16 %v404
      %v437 = vunpack.c.l.b16 %v405
      %v438 = vunpack.c.l.b16 %v406
      %v439 = vunpack.c.l.b16 %v407
      %v440 = vunpack.c.l.b16 %v408
      %v441 = vunpack.c.l.b16 %v409
      %v442 = vunpack.c.l.b16 %v410
      %v443 = vunpack.c.l.b16 %v411
      %v444 = vunpack.c.l.b16 %v412
      %v445 = vunpack.c.l.b16 %v413
      %v446 = vunpack.c.l.b16 %v414
      %v447 = vunpack.c.l.b16 %v415
      %v448 = vunpack.c.l.b16 %v416
      %v449 = vunpack.c.l.b16 %v417
      %v450 = vunpack.c.l.b16 %v418
      %v451 = vunpack.c.l.b16 %v419
      %v452 = vpack.c.b16 %v437, %v436
      %v453 = vpack.c.b16 %v439, %v438
      %v454 = vpack.c.b16 %v441, %v440
      %v455 = vpack.c.b16 %v443, %v442
      %v456 = vpack.c.b16 %v445, %v444
      %v457 = vpack.c.b16 %v447, %v446
      %v458 = vpack.c.b16 %v449, %v448
      %v459 = vpack.c.b16 %v451, %v450
      %468 = vmatprep.subr.bf16.mxu0 0
      %469 = vmatpush1.bf16.msra.mxu0 %v459
      %470 = vmatprep.subr.bf16.mxu0 0
      %471 = vmatpush1.bf16.msra.mxu0 %v458
      %472 = vmatprep.subr.bf16.mxu0 0
      %473 = vmatpush1.bf16.msra.mxu0 %v457
      %474 = vmatprep.subr.bf16.mxu0 0
      %475 = vmatpush1.bf16.msra.mxu0 %v456
      %476 = vmatprep.subr.bf16.mxu0 0
      %477 = vmatpush1.bf16.msra.mxu0 %v455
      %478 = vmatprep.subr.bf16.mxu0 0
      %479 = vmatpush1.bf16.msra.mxu0 %v454
      %480 = vmatprep.subr.bf16.mxu0 0
      %481 = vmatpush1.bf16.msra.mxu0 %v453
      %482 = vmatprep.subr.bf16.mxu0 0
      %483 = vmatpush1.bf16.msra.mxu0 %v452
      %484 = vmatprep.subr.bf16.mxu0 0
      %485 = vmatpush2.bf16.msra.mxu0 0
      %486 = vmatprep.subr.bf16.mxu0 0
      %487 = vmatpush2.bf16.msra.mxu0 0
      %488 = vmatprep.subr.bf16.mxu0 0
      %489 = vmatpush2.bf16.msra.mxu0 0
      %490 = vmatprep.subr.bf16.mxu0 0
      %491 = vmatpush2.bf16.msra.mxu0 0
      %492 = vmatprep.subr.bf16.mxu0 0
      %493 = vmatpush2.bf16.msra.mxu0 0
      %494 = vmatprep.subr.bf16.mxu0 0
      %495 = vmatpush2.bf16.msra.mxu0 0
      %496 = vmatprep.subr.bf16.mxu0 0
      %497 = vmatpush2.bf16.msra.mxu0 0
      %498 = vmatprep.subr.bf16.mxu0 0
      %499 = vmatpush2.bf16.msra.mxu0 0
      %500 = vmatprep.mubr.bf16.mxu0 0
      %501 = vmatmul.mubr.bf16.gmra.mxu0 %v400
      %v502 = vpop.f32.mrf.mxu0
      %v503 = vadd.f32 0.0, %v502
      %v504 = vpop.f32.mrf.mxu0
      %v505 = vpop.f32.mrf.mxu0
      %v506 = vadd.f32 0.0, %v505
      %v507 = vpop.f32.mrf.mxu0
      %508 = vmatprep.mubr.bf16.mxu0 0
      %509 = vmatmul.mubr.bf16.gmra.mxu0 %v401
      %v510 = vpop.f32.mrf.mxu0
      %v511 = vadd.f32 0.0, %v510
      %v512 = vpop.f32.mrf.mxu0
      %v513 = vpop.f32.mrf.mxu0
      %v514 = vadd.f32 0.0, %v513
      %v515 = vpop.f32.mrf.mxu0
      %516 = vmatprep.mubr.bf16.mxu0 0
      %517 = vmatmul.mubr.bf16.gmra.mxu0 %v402
      %v518 = vpop.f32.mrf.mxu0
      %v519 = vadd.f32 0.0, %v518
      %v520 = vpop.f32.mrf.mxu0
      %v521 = vpop.f32.mrf.mxu0
      %v522 = vadd.f32 0.0, %v521
      %v523 = vpop.f32.mrf.mxu0
      %524 = vmatprep.mubr.bf16.mxu0 0
      %525 = vmatmul.mubr.bf16.gmra.mxu0 %v403
      %v526 = vpop.f32.mrf.mxu0
      %v527 = vadd.f32 0.0, %v526
      %v528 = vpop.f32.mrf.mxu0
      %v529 = vpop.f32.mrf.mxu0
      %v530 = vadd.f32 0.0, %v529
      %v531 = vpop.f32.mrf.mxu0
      %532 = vdwg.mxu0
      %v533 = vpack.c.bf16 %v506, %v503
      %v534 = vpack.c.bf16 %v514, %v511
      %v535 = vpack.c.bf16 %v522, %v519
      %v536 = vpack.c.bf16 %v530, %v527
      %v541 = vunpack.c.l.b16 %v533
      %v542 = vunpack.c.h.b16 %v533
      %v543 = vunpack.c.l.b16 %v534
      %v544 = vunpack.c.h.b16 %v534
      %v545 = vunpack.c.l.b16 %v535
      %v546 = vunpack.c.h.b16 %v535
      %v547 = vunpack.c.l.b16 %v536
      %v548 = vunpack.c.h.b16 %v536
      %v549 = vpack.c.b16 %v541, %v541
      %v550 = vpack.c.b16 %v542, %v542
      %v551 = vpack.c.b16 %v543, %v543
      %v552 = vpack.c.b16 %v544, %v544
      %v553 = vpack.c.b16 %v545, %v545
      %v554 = vpack.c.b16 %v546, %v546
      %v555 = vpack.c.b16 %v547, %v547
      %v556 = vpack.c.b16 %v548, %v548
      %565 = vst [vmem:[%s309] sm:$0xf] %v549
      %566 = vst [vmem:[%s309 + $0x4] sm:$0xf] %v550
      %567 = vst [vmem:[%s309 + $0x8] sm:$0xf] %v551
      %568 = vst [vmem:[%s309 + $0xc] sm:$0xf] %v552
      %569 = vst [vmem:[%s309 + $0x10] sm:$0xf] %v553
      %570 = vst [vmem:[%s309 + $0x14] sm:$0xf] %v554
      %571 = vst [vmem:[%s309 + $0x18] sm:$0xf] %v555
      %572 = vst [vmem:[%s309 + $0x1c] sm:$0xf] %v556
      %v573 = vld [vmem:[%s5] sm:$0x1]
      %v574 = vadd.f32 %v503, %v506
      %v575 = vadd.f32 %v574, %v511
      %v576 = vadd.f32 %v575, %v514
      %v577 = vadd.f32 %v576, %v519
      %v578 = vadd.f32 %v577, %v522
      %v579 = vadd.f32 %v578, %v527
      %v580 = vadd.f32 %v579, %v530
      %v581 = vrot.slane %v580, 4
      %v582 = vadd.f32 %v580, %v581
      %v583 = vrot.slane %v582, 2
      %v584 = vadd.f32 %v582, %v583
      %v585 = vrot.slane %v584, 1
      %v586 = vadd.f32 %v584, %v585
      %v587 = vadd.f32 %v573, %v586
      %588 = vst [vmem:[%s5] sm:$0x1] %v587
      %v589 = vld [vmem:[%s5 + $0x1] sm:$0x1]
      %v590 = vmul.f32 %v503, %v503
      %v591 = vmul.f32 %v506, %v506
      %v592 = vmul.f32 %v511, %v511
      %v593 = vmul.f32 %v514, %v514
      %v594 = vmul.f32 %v519, %v519
      %v595 = vmul.f32 %v522, %v522
      %v596 = vmul.f32 %v527, %v527
      %v597 = vmul.f32 %v530, %v530
      %v598 = vadd.f32 %v590, %v591
      %v599 = vadd.f32 %v598, %v592
      %v600 = vadd.f32 %v599, %v593
      %v601 = vadd.f32 %v600, %v594
      %v602 = vadd.f32 %v601, %v595
      %v603 = vadd.f32 %v602, %v596
      %v604 = vadd.f32 %v603, %v597
      %v605 = vrot.slane %v604, 4
      %v606 = vadd.f32 %v604, %v605
      %v607 = vrot.slane %v606, 2
      %v608 = vadd.f32 %v606, %v607
      %v609 = vrot.slane %v608, 1
      %v610 = vadd.f32 %v608, %v609
      %v611 = vadd.f32 %v589, %v610
      %612 = vst [vmem:[%s5 + $0x1] sm:$0x1] %v611
      %p613 = scmp.eq.s32.totalorder %s22, 1
      %p614 = pnand %p613, %p316
      %p615 = pneg %p614
      // Predicated region
      $region45: #{_lambda_.11} parent=35 // pred_check
        _
      $region46: #{_lambda_.11} parent=35 // pred_check_branch
        %617 = sbr.rel (%p614) target = $region48
      $region47: #{_lambda_.11} parent=35 // pred_region
        %v618 = vld [vmem:[%s5] sm:$0x1]
        %v619 = vld [vmem:[%s5 + $0x1] sm:$0x1]
        %v620 = vmul.f32 %v618, 0.0078125
        %v621 = vmul.f32 %v619, 0.0078125
        %v622 = vmul.f32 %v620, %v620
        %v623 = vsub.f32 %v621, %v622
        %v624 = vld [vmem:[%s3] sm:$0x1]
        %v625 = vadd.f32 %v623, 1e-05
        %v626 = vrsqrt.pop %v625
        %v627 = vmul.f32 %v624, %v626
        %v628 = vld [vmem:[%s3 + $0x1] sm:$0x1]
        %v629 = vmul.f32 %v620, %v627
        %v630 = vsub.f32 %v628, %v629
        %631 = vst [vmem:[%s5] sm:$0x1] %v627
        %632 = vst [vmem:[%s5 + $0x1] sm:$0x1] %v630
      $region48: #{_lambda_.11} parent=35 // pred_fallthru
        _
      %s633 = smul.u32 8, %s23
      %p634 = scmp.lt.s32.totalorder %s22, 1
      %s635 = scalar_select %p634, %s22, 1
      %p636 = scmp.lt.s32.totalorder %s633, 7
      %s637 = scalar_select %p636, %s633, 7
      %s638 = smul.addr %s635, 8
      %s639 = sadd.s32 %s637, %s638
      %s640 = smul.addr %s639, 4
      %s641 = scalar_lea.vmem %s4, %s640
      %p642 = scmp.lt.s32.totalorder %s22, 1
      %s643 = scalar_select %p642, %s22, 1
      %s644 = scalar_lea.vmem %s6, %s643
      // Predicated region
      $region49: #{_lambda_.11} parent=35 // pred_check
        %p645 = pneg %p146
      $region50: #{_lambda_.11} parent=35 // pred_check_branch
        %647 = sbr.rel (%p645) target = $region52
      $region51: #{_lambda_.11} parent=35 // pred_region
        %s648 = smul.u32 8, %s23
      $region52: #{_lambda_.11} parent=35 // pred_fallthru
        _
      // Predicated region
      $region53: #{_lambda_.11} parent=35 // pred_check
        %p649 = pneg %p167
      $region54: #{_lambda_.11} parent=35 // pred_check_branch
        %651 = sbr.rel (%p649) target = $region56
      $region55: #{_lambda_.11} parent=35 // pred_region
        _
      $region56: #{_lambda_.11} parent=35 // pred_fallthru
        _
      // Predicated region
      $region57: #{_lambda_.11} parent=35 // pred_check
        %p652 = pneg %p193
      $region58: #{_lambda_.11} parent=35 // pred_check_branch
        %654 = sbr.rel (%p652) target = $region60
      $region59: #{_lambda_.11} parent=35 // pred_region
        _
      $region60: #{_lambda_.11} parent=35 // pred_fallthru
        _
      // Predicated region
      $region61: #{_lambda_.11} parent=35 // pred_check
        %p655 = pneg %p167
      $region62: #{_lambda_.11} parent=35 // pred_check_branch
        %657 = sbr.rel (%p655) target = $region64
      $region63: #{_lambda_.11} parent=35 // pred_region
        _
      $region64: #{_lambda_.11} parent=35 // pred_fallthru
        _
    $region36: #{_lambda_.11} parent=5 // pred_fallthru
      _
    %p658 = scmp.le.s32.totalorder 2, %s13
    // Predicated region
    $region65: #{_lambda_.11} parent=5 // pred_check
      %p659 = pneg %p658
    $region66: #{_lambda_.11} parent=5 // pred_check_branch
      %661 = sbr.rel (%p659) target = $region68
    $region67: #{_lambda_.11} parent=5 // pred_region
      %s662 = ssub.s32 %s13, 2
      // Predicated region
      $region69: #{_lambda_.11} parent=67 // pred_check
        %p663 = pneg %p152
      $region70: #{_lambda_.11} parent=67 // pred_check_branch
        %665 = sbr.rel (%p663) target = $region72
      $region71: #{_lambda_.11} parent=67 // pred_region
        %s666 = smul.u32 8, %s25
        %p667 = scmp.lt.s32.totalorder %s24, 1
        %s668 = scalar_select %p667, %s24, 1
        %p669 = scmp.lt.s32.totalorder %s666, 7
        %s670 = scalar_select %p669, %s666, 7
        %s671 = smul.addr %s668, 8
        %s672 = sadd.s32 %s670, %s671
        %s673 = smul.addr %s672, 4
        %s674 = scalar_lea.vmem %s4, %s673
      $region72: #{_lambda_.11} parent=67 // pred_fallthru
        _
      // Predicated region
      $region73: #{_lambda_.11} parent=67 // pred_check
        %p675 = pneg %p199
      $region74: #{_lambda_.11} parent=67 // pred_check_branch
        %677 = sbr.rel (%p675) target = $region76
      $region75: #{_lambda_.11} parent=67 // pred_region
        %p678 = scmp.lt.s32.totalorder %s24, 1
        %s679 = scalar_select %p678, %s24, 1
        %s680 = scalar_lea.vmem %s6, %s679
      $region76: #{_lambda_.11} parent=67 // pred_fallthru
        _
    $region68: #{_lambda_.11} parent=5 // pred_fallthru
      _
  $region6: #{_lambda_.11} parent=0 // loop_footer
    %s17 = sadd.s32 1, %s13
  $region7: #{_lambda_.11} parent=0 // loop_footer_branch
    %12 = sbr.rel target = $region3
  $region8: #{_lambda_.11} parent=0 // loop_exit
    _

// kernel: _lambda_.9
$region0: #{_lambda_.9}
  #allocation0 [shape = 'u32[]', space=smem, size = 0x4, offset = 0x4, fixed_abs, tag = 'smem constant byte address 0x4 - core index']
  #allocation1 [shape = 'u32[144,128]{1,0:T(1,128)}', space=vmem, size = 0x12000, scoped, tag = 'internal scratch']
  %s0 = inlined_call_operand.vmem [shape: bf16[2,64,128], index: 0, kind: input, shape index: {}]
  %s1 = inlined_call_operand.vmem [shape: f32[2,2,128], index: 1, kind: input, shape index: {}]
  %s2 = inlined_call_operand.vmem [shape: bf16[1152,128], index: 2, kind: input, shape index: {}]
  %s3 = inlined_call_operand.vmem [shape: f32[2,128], index: 3, kind: input, shape index: {}]
  %s4 = inlined_call_operand.vmem [shape: bf16[2,64,128], index: 4, kind: output, shape index: {0}]
  %s5 = inlined_call_operand.vmem [shape: f32[2,128], index: 5, kind: output, shape index: {1}]
  %s6 = inlined_call_operand.vmem [shape: f32[2,1,128], index: 6, kind: output, shape index: {2}]
  %7 = xla_tuple %s4, %s5, %s6
  %s8 = sld [smem:[#allocation0]]
  $region73: #{_lambda_.9} parent=0
    _
  %s10 = ssub.s32 1, %s8
  %s11 = scalar_select 0, %s10, %s8
  loop: start=0, step=1, limit=4
  $region2: #{_lambda_.9} parent=0 // loop_pre_header
    _
  $region3: #{_lambda_.9} parent=0 // loop_header
    %s13 = sphi 0, %s17
    %p14 = scmp.ge.s32.totalorder %s13, 4
    %s23 = sphi 0, %s25
    %s26 = sphi 0, %s23
    %s27 = sphi 0, %s26
    %s43 = sphi 0, %s27
    %s49 = sphi 0, %s51
    %s52 = sphi 0, %s49
    %s53 = sphi 0, %s52
    %s69 = sphi 0, %s53
    %s73 = sphi 0, %s73
    %s75 = sphi 0, %s73
    %s76 = sphi 0, %s75
    %s90 = sphi 0, %s76
    %s94 = sphi 0, %s94
    %s96 = sphi 0, %s94
    %s97 = sphi 0, %s96
    %s111 = sphi 0, %s97
    %s117 = sphi 0, %s119
    %s120 = sphi 0, %s117
    %s121 = sphi 0, %s120
    %s137 = sphi 0, %s121
    %s141 = sphi 0, %s141
    %s143 = sphi 0, %s141
    %s144 = sphi 0, %s143
    %s158 = sphi 0, %s144
    %s164 = sphi 0, %s166
    %s167 = sphi 0, %s164
    %s168 = sphi 0, %s167
    %s184 = sphi 0, %s168
  $region4: #{_lambda_.9} parent=0 // loop_header_branch
    %16 = sbr.rel (%p14) target = $region8
  $region5: #{_lambda_.9} parent=0 // loop_body
    %s18 = ssub.s32 %s13, 1
    %s19 = ssub.s32 %s13, 2
    %s20 = sadd.s32 %s13, 1
    %s21 = ssub.s32 %s13, %s20
    %p22 = scmp.eq.s32.totalorder %s21, 0
    %s24 = sadd.s32 %s23, 1
    %s25 = scalar_select %p22, %s23, %s24
    %p28 = pneg %p22
    %p29 = scmp.eq.s32.totalorder %s13, 1
    %p30 = por %p28, %p29
    %p31 = scmp.ne.s32.totalorder %s23, %s26
    %p32 = scmp.eq.s32.totalorder %s13, 0
    %p33 = por %p31, %p32
    %p34 = scmp.ne.s32.totalorder %s23, %s26
    %p35 = scmp.eq.s32.totalorder %s18, 1
    %p36 = por %p34, %p35
    %p37 = scmp.ne.s32.totalorder %s26, %s27
    %p38 = scmp.eq.s32.totalorder %s18, 0
    %p39 = por %p37, %p38
    %p40 = scmp.ne.s32.totalorder %s26, %s27
    %p41 = scmp.eq.s32.totalorder %s19, 1
    %p42 = por %p40, %p41
    %p44 = scmp.ne.s32.totalorder %s27, %s43
    %p45 = scmp.eq.s32.totalorder %s19, 0
    %p46 = por %p44, %p45
    %s47 = ssub.s32 %s13, %s20
    %p48 = scmp.eq.s32.totalorder %s47, 0
    %s50 = sadd.s32 %s49, 1
    %s51 = scalar_select %p48, %s49, %s50
    %p54 = pneg %p48
    %p55 = scmp.eq.s32.totalorder %s13, 1
    %p56 = por %p54, %p55
    %p57 = scmp.ne.s32.totalorder %s49, %s52
    %p58 = scmp.eq.s32.totalorder %s13, 0
    %p59 = por %p57, %p58
    %p60 = scmp.ne.s32.totalorder %s49, %s52
    %p61 = scmp.eq.s32.totalorder %s18, 1
    %p62 = por %p60, %p61
    %p63 = scmp.ne.s32.totalorder %s52, %s53
    %p64 = scmp.eq.s32.totalorder %s18, 0
    %p65 = por %p63, %p64
    %p66 = scmp.ne.s32.totalorder %s52, %s53
    %p67 = scmp.eq.s32.totalorder %s19, 1
    %p68 = por %p66, %p67
    %p70 = scmp.ne.s32.totalorder %s53, %s69
    %p71 = scmp.eq.s32.totalorder %s19, 0
    %p72 = por %p70, %p71
    %s74 = sadd.s32 %s73, 1
    %p77 = scmp.eq.s32.totalorder %s13, 1
    %p78 = scmp.ne.s32.totalorder %s73, %s75
    %p79 = scmp.eq.s32.totalorder %s13, 0
    %p80 = por %p78, %p79
    %p81 = scmp.ne.s32.totalorder %s73, %s75
    %p82 = scmp.eq.s32.totalorder %s18, 1
    %p83 = por %p81, %p82
    %p84 = scmp.ne.s32.totalorder %s75, %s76
    %p85 = scmp.eq.s32.totalorder %s18, 0
    %p86 = por %p84, %p85
    %p87 = scmp.ne.s32.totalorder %s75, %s76
    %p88 = scmp.eq.s32.totalorder %s19, 1
    %p89 = por %p87, %p88
    %p91 = scmp.ne.s32.totalorder %s76, %s90
    %p92 = scmp.eq.s32.totalorder %s19, 0
    %p93 = por %p91, %p92
    %s95 = sadd.s32 %s94, 1
    %p98 = scmp.eq.s32.totalorder %s13, 1
    %p99 = scmp.ne.s32.totalorder %s94, %s96
    %p100 = scmp.eq.s32.totalorder %s13, 0
    %p101 = por %p99, %p100
    %p102 = scmp.ne.s32.totalorder %s94, %s96
    %p103 = scmp.eq.s32.totalorder %s18, 1
    %p104 = por %p102, %p103
    %p105 = scmp.ne.s32.totalorder %s96, %s97
    %p106 = scmp.eq.s32.totalorder %s18, 0
    %p107 = por %p105, %p106
    %p108 = scmp.ne.s32.totalorder %s96, %s97
    %p109 = scmp.eq.s32.totalorder %s19, 1
    %p110 = por %p108, %p109
    %p112 = scmp.ne.s32.totalorder %s97, %s111
    %p113 = scmp.eq.s32.totalorder %s19, 0
    %p114 = por %p112, %p113
    %s115 = ssub.s32 %s13, %s20
    %p116 = scmp.eq.s32.totalorder %s115, 0
    %s118 = sadd.s32 %s117, 1
    %s119 = scalar_select %p116, %s117, %s118
    %p122 = pneg %p116
    %p123 = scmp.eq.s32.totalorder %s13, 1
    %p124 = por %p122, %p123
    %p125 = scmp.ne.s32.totalorder %s117, %s120
    %p126 = scmp.eq.s32.totalorder %s13, 0
    %p127 = por %p125, %p126
    %p128 = scmp.ne.s32.totalorder %s117, %s120
    %p129 = scmp.eq.s32.totalorder %s18, 1
    %p130 = por %p128, %p129
    %p131 = scmp.ne.s32.totalorder %s120, %s121
    %p132 = scmp.eq.s32.totalorder %s18, 0
    %p133 = por %p131, %p132
    %p134 = scmp.ne.s32.totalorder %s120, %s121
    %p135 = scmp.eq.s32.totalorder %s19, 1
    %p136 = por %p134, %p135
    %p138 = scmp.ne.s32.totalorder %s121, %s137
    %p139 = scmp.eq.s32.totalorder %s19, 0
    %p140 = por %p138, %p139
    %s142 = sadd.s32 %s141, 1
    %p145 = scmp.eq.s32.totalorder %s13, 1
    %p146 = scmp.ne.s32.totalorder %s141, %s143
    %p147 = scmp.eq.s32.totalorder %s13, 0
    %p148 = por %p146, %p147
    %p149 = scmp.ne.s32.totalorder %s141, %s143
    %p150 = scmp.eq.s32.totalorder %s18, 1
    %p151 = por %p149, %p150
    %p152 = scmp.ne.s32.totalorder %s143, %s144
    %p153 = scmp.eq.s32.totalorder %s18, 0
    %p154 = por %p152, %p153
    %p155 = scmp.ne.s32.totalorder %s143, %s144
    %p156 = scmp.eq.s32.totalorder %s19, 1
    %p157 = por %p155, %p156
    %p159 = scmp.ne.s32.totalorder %s144, %s158
    %p160 = scmp.eq.s32.totalorder %s19, 0
    %p161 = por %p159, %p160
    %s162 = ssub.s32 %s13, %s20
    %p163 = scmp.eq.s32.totalorder %s162, 0
    %s165 = sadd.s32 %s164, 1
    %s166 = scalar_select %p163, %s164, %s165
    %p169 = pneg %p163
    %p170 = scmp.eq.s32.totalorder %s13, 1
    %p171 = por %p169, %p170
    %p172 = scmp.ne.s32.totalorder %s164, %s167
    %p173 = scmp.eq.s32.totalorder %s13, 0
    %p174 = por %p172, %p173
    %p175 = scmp.ne.s32.totalorder %s164, %s167
    %p176 = scmp.eq.s32.totalorder %s18, 1
    %p177 = por %p175, %p176
    %p178 = scmp.ne.s32.totalorder %s167, %s168
    %p179 = scmp.eq.s32.totalorder %s18, 0
    %p180 = por %p178, %p179
    %p181 = scmp.ne.s32.totalorder %s167, %s168
    %p182 = scmp.eq.s32.totalorder %s19, 1
    %p183 = por %p181, %p182
    %p185 = scmp.ne.s32.totalorder %s168, %s184
    %p186 = scmp.eq.s32.totalorder %s19, 0
    %p187 = por %p185, %p186
    %p188 = scmp.le.s32.totalorder 1, %s13
    %p189 = scmp.lt.s32.totalorder %s13, 3
    %p190 = pnand %p188, %p189
    %p191 = pneg %p190
    // Predicated region
    $region9: #{_lambda_.9} parent=5 // pred_check
      _
    $region10: #{_lambda_.9} parent=5 // pred_check_branch
      %193 = sbr.rel (%p190) target = $region12
    $region11: #{_lambda_.9} parent=5 // pred_region
      %s194 = ssub.s32 %s13, 1
      // Predicated region
      $region13: #{_lambda_.9} parent=11 // pred_check
        %p195 = pneg %p86
      $region14: #{_lambda_.9} parent=11 // pred_check_branch
        %197 = sbr.rel (%p195) target = $region16
      $region15: #{_lambda_.9} parent=11 // pred_region
        _
      $region16: #{_lambda_.9} parent=11 // pred_fallthru
        _
      // Predicated region
      $region17: #{_lambda_.9} parent=11 // pred_check
        %p198 = pneg %p107
      $region18: #{_lambda_.9} parent=11 // pred_check_branch
        %200 = sbr.rel (%p198) target = $region20
      $region19: #{_lambda_.9} parent=11 // pred_region
        _
      $region20: #{_lambda_.9} parent=11 // pred_fallthru
        _
    $region12: #{_lambda_.9} parent=5 // pred_fallthru
      _
    %p201 = scmp.lt.s32.totalorder %s13, 2
    // Predicated region
    $region21: #{_lambda_.9} parent=5 // pred_check
      %p202 = pneg %p201
    $region22: #{_lambda_.9} parent=5 // pred_check_branch
      %204 = sbr.rel (%p202) target = $region24
    $region23: #{_lambda_.9} parent=5 // pred_region
      // Predicated region
      $region25: #{_lambda_.9} parent=23 // pred_check
        %p205 = pneg %p33
      $region26: #{_lambda_.9} parent=23 // pred_check_branch
        %207 = sbr.rel (%p205) target = $region28
      $region27: #{_lambda_.9} parent=23 // pred_region
        %p208 = scmp.lt.s32.totalorder %s13, 1
        %s209 = scalar_select %p208, %s13, 1
        %s210 = smul.addr %s209, 8
        %s211 = smul.addr %s210, 4
        %s212 = scalar_lea.vmem %s0, %s211
      $region28: #{_lambda_.9} parent=23 // pred_fallthru
        _
      // Predicated region
      $region29: #{_lambda_.9} parent=23 // pred_check
        %p213 = pneg %p59
      $region30: #{_lambda_.9} parent=23 // pred_check_branch
        %215 = sbr.rel (%p213) target = $region32
      $region31: #{_lambda_.9} parent=23 // pred_region
        %p216 = scmp.lt.s32.totalorder %s13, 1
        %s217 = scalar_select %p216, %s13, 1
        %s218 = smul.addr %s217, 2
        %s219 = scalar_lea.vmem %s1, %s218
      $region32: #{_lambda_.9} parent=23 // pred_fallthru
        _
    $region24: #{_lambda_.9} parent=5 // pred_fallthru
      _
    %p220 = scmp.le.s32.totalorder 1, %s13
    %p221 = scmp.lt.s32.totalorder %s13, 3
    %p222 = pnand %p220, %p221
    %p223 = pneg %p222
    // Predicated region
    $region33: #{_lambda_.9} parent=5 // pred_check
      _
    $region34: #{_lambda_.9} parent=5 // pred_check_branch
      %225 = sbr.rel (%p222) target = $region36
    $region35: #{_lambda_.9} parent=5 // pred_region
      %s226 = ssub.s32 %s13, 1
      %p227 = scmp.lt.s32.totalorder %s18, 1
      %s228 = scalar_select %p227, %s18, 1
      %s229 = smul.addr %s228, 8
      %s230 = smul.addr %s229, 4
      %s231 = scalar_lea.vmem %s0, %s230
      %p232 = pneg %p39
      %p233 = pneg %p36
      %p234 = scmp.lt.s32.totalorder %s18, 1
      %s235 = scalar_select %p234, %s18, 1
      %s236 = smul.addr %s235, 2
      %s237 = scalar_lea.vmem %s1, %s236
      %p238 = pneg %p65
      %p239 = pneg %p62
      %p240 = pneg %p86
      %p241 = pneg %p83
      %p242 = pneg %p107
      %p243 = pneg %p104
      %p244 = pneg %p133
      %p245 = pneg %p130
      %p246 = scmp.lt.s32.totalorder %s18, 1
      %s247 = scalar_select %p246, %s18, 1
      %s248 = smul.addr %s247, 8
      %s249 = smul.addr %s248, 4
      %s250 = scalar_lea.vmem %s4, %s249
      %p251 = pneg %p154
      %p252 = pneg %p151
      %p253 = pneg %p180
      %p254 = pneg %p177
      %p255 = scmp.lt.s32.totalorder %s18, 1
      %s256 = scalar_select %p255, %s18, 1
      %s257 = scalar_lea.vmem %s6, %s256
      %p258 = scmp.lt.s32.totalorder %s18, 1
      %s259 = scalar_select %p258, %s18, 1
      %s260 = smul.addr %s259, 8
      %s261 = smul.addr %s260, 4
      %s262 = scalar_lea.vmem %s0, %s261
      %p263 = scmp.lt.s32.totalorder %s18, 1
      %s264 = scalar_select %p263, %s18, 1
      %s265 = smul.addr %s264, 2
      %s266 = scalar_lea.vmem %s1, %s265
      %p267 = scmp.lt.s32.totalorder %s18, 1
      %s268 = scalar_select %p267, %s18, 1
      %s269 = smul.addr %s268, 8
      %s270 = smul.addr %s269, 4
      %s271 = scalar_lea.vmem %s4, %s270
      %p272 = scmp.lt.s32.totalorder %s18, 1
      %s273 = scalar_select %p272, %s18, 1
      %s274 = scalar_lea.vmem %s6, %s273
      %p276 = scmp.eq.s32.totalorder %s18, 0
      // Predicated region
      $region37: #{_lambda_.9} parent=35 // pred_check
        %p277 = pneg %p276
      $region38: #{_lambda_.9} parent=35 // pred_check_branch
        %279 = sbr.rel (%p277) target = $region40
      $region39: #{_lambda_.9} parent=35 // pred_region
        %280 = vst [vmem:[%s5] sm:$0x3] 0.0
      $region40: #{_lambda_.9} parent=35 // pred_fallthru
        _
      %v281 = vld [vmem:[%s266] sm:$0x3]
      %v282 = vld [vmem:[%s262] sm:$0xf]
      %v283 = vld [vmem:[%s262 + $0x4] sm:$0xf]
      %v284 = vld [vmem:[%s262 + $0x8] sm:$0xf]
      %v285 = vld [vmem:[%s262 + $0xc] sm:$0xf]
      %v286 = vld [vmem:[%s262 + $0x10] sm:$0xf]
      %v287 = vld [vmem:[%s262 + $0x14] sm:$0xf]
      %v288 = vld [vmem:[%s262 + $0x18] sm:$0xf]
      %v289 = vld [vmem:[%s262 + $0x1c] sm:$0xf]
      %v290 = vunpack.c.l.bf16 %v282
      %v291 = vunpack.c.l.bf16 %v283
      %v292 = vunpack.c.l.bf16 %v284
      %v293 = vunpack.c.l.bf16 %v285
      %v294 = vunpack.c.l.bf16 %v286
      %v295 = vunpack.c.l.bf16 %v287
      %v296 = vunpack.c.l.bf16 %v288
      %v297 = vunpack.c.l.bf16 %v289
      %v298 = vlaneseq
      %v299 = vshrl.u32 %v298, 7
      %v300 = vsub.s32 0, %v299
      %v301 = vrot.slane %v281, %v300
      %v302 = vmul.f32 %v290, %v301
      %v303 = vmul.f32 %v291, %v301
      %v304 = vmul.f32 %v292, %v301
      %v305 = vmul.f32 %v293, %v301
      %v306 = vmul.f32 %v294, %v301
      %v307 = vmul.f32 %v295, %v301
      %v308 = vmul.f32 %v296, %v301
      %v309 = vmul.f32 %v297, %v301
      %v310 = vlaneseq
      %v311 = vshrl.u32 %v310, 7
      %v312 = vsub.s32 1, %v311
      %v313 = vrot.slane %v281, %v312
      %v314 = vadd.f32 %v302, %v313
      %v315 = vadd.f32 %v303, %v313
      %v316 = vadd.f32 %v304, %v313
      %v317 = vadd.f32 %v305, %v313
      %v318 = vadd.f32 %v306, %v313
      %v319 = vadd.f32 %v307, %v313
      %v320 = vadd.f32 %v308, %v313
      %v321 = vadd.f32 %v309, %v313
      %v322 = vmax.f32 %v314, 0.0
      %v323 = vmax.f32 %v315, 0.0
      %v324 = vmax.f32 %v316, 0.0
      %v325 = vmax.f32 %v317, 0.0
      %v326 = vmax.f32 %v318, 0.0
      %v327 = vmax.f32 %v319, 0.0
      %v328 = vmax.f32 %v320, 0.0
      %v329 = vmax.f32 %v321, 0.0
      %v330 = vand.u32 2147483647, %v322
      %v331 = vand.u32 2147483647, %v323
      %v332 = vand.u32 2147483647, %v324
      %v333 = vand.u32 2147483647, %v325
      %v334 = vand.u32 2147483647, %v326
      %v335 = vand.u32 2147483647, %v327
      %v336 = vand.u32 2147483647, %v328
      %v337 = vand.u32 2147483647, %v329
      %v338 = vadd.f32 %v330, %v331
      %v339 = vadd.f32 %v338, %v332
      %v340 = vadd.f32 %v339, %v333
      %v341 = vadd.f32 %v340, %v334
      %v342 = vadd.f32 %v341, %v335
      %v343 = vadd.f32 %v342, %v336
      %v344 = vadd.f32 %v343, %v337
      %v345 = vrot.slane %v344, 4
      %v346 = vadd.f32 %v344, %v345
      %v347 = vrot.slane %v346, 2
      %v348 = vadd.f32 %v346, %v347
      %v349 = vrot.slane %v348, 1
      %v350 = vadd.f32 %v348, %v349
      %v351 = vmul.f32 %v350, 0.015625
      %352 = vst [vmem:[%s274] sm:$0x1] %v351
      %v353 = vlaneseq
      %v354 = vshrl.u32 %v353, 7
      %v355 = vadd.s32 %v354, 8
      %v356 = vadd.s32 %v354, 16
      %v357 = vadd.s32 %v354, 24
      %v358 = vadd.s32 %v354, 32
      %v359 = vadd.s32 %v354, 40
      %v360 = vadd.s32 %v354, 48
      %v361 = vadd.s32 %v354, 56
      %vm362 = vcmp.lt.s32.totalorder %v354, 0
      %v363 = vsub.s32 0, %v354
      %v364 = vsel %vm362, %v363, %v354
      %v365 = vshrl.u32 %v364, 3
      %v366 = vand.u32 %v364, 7
      %v367 = vsub.s32 0, %v366
      %v368 = vsel %vm362, %v367, %v366
      %vm369 = vcmp.lt.s32.totalorder %v355, 0
      %v370 = vsub.s32 0, %v355
      %v371 = vsel %vm369, %v370, %v355
      %v372 = vshrl.u32 %v371, 3
      %v373 = vand.u32 %v371, 7
      %v374 = vsub.s32 0, %v373
      %v375 = vsel %vm369, %v374, %v373
      %vm376 = vcmp.lt.s32.totalorder %v356, 0
      %v377 = vsub.s32 0, %v356
      %v378 = vsel %vm376, %v377, %v356
      %v379 = vshrl.u32 %v378, 3
      %v380 = vand.u32 %v378, 7
      %v381 = vsub.s32 0, %v380
      %v382 = vsel %vm376, %v381, %v380
      %vm383 = vcmp.lt.s32.totalorder %v357, 0
      %v384 = vsub.s32 0, %v357
      %v385 = vsel %vm383, %v384, %v357
      %v386 = vshrl.u32 %v385, 3
      %v387 = vand.u32 %v385, 7
      %v388 = vsub.s32 0, %v387
      %v389 = vsel %vm383, %v388, %v387
      %vm390 = vcmp.lt.s32.totalorder %v358, 0
      %v391 = vsub.s32 0, %v358
      %v392 = vsel %vm390, %v391, %v358
      %v393 = vshrl.u32 %v392, 3
      %v394 = vand.u32 %v392, 7
      %v395 = vsub.s32 0, %v394
      %v396 = vsel %vm390, %v395, %v394
      %vm397 = vcmp.lt.s32.totalorder %v359, 0
      %v398 = vsub.s32 0, %v359
      %v399 = vsel %vm397, %v398, %v359
      %v400 = vshrl.u32 %v399, 3
      %v401 = vand.u32 %v399, 7
      %v402 = vsub.s32 0, %v401
      %v403 = vsel %vm397, %v402, %v401
      %vm404 = vcmp.lt.s32.totalorder %v360, 0
      %v405 = vsub.s32 0, %v360
      %v406 = vsel %vm404, %v405, %v360
      %v407 = vshrl.u32 %v406, 3
      %v408 = vand.u32 %v406, 7
      %v409 = vsub.s32 0, %v408
      %v410 = vsel %vm404, %v409, %v408
      %vm411 = vcmp.lt.s32.totalorder %v361, 0
      %v412 = vsub.s32 0, %v361
      %v413 = vsel %vm411, %v412, %v361
      %v414 = vshrl.u32 %v413, 3
      %v415 = vand.u32 %v413, 7
      %v416 = vsub.s32 0, %v415
      %v417 = vsel %vm411, %v416, %v415
      %vm418 = vcmp.ne.s32.totalorder %v368, 0
      %vm419 = vcmp.ne.s32.totalorder %v375, 0
      %vm420 = vcmp.ne.s32.totalorder %v382, 0
      %vm421 = vcmp.ne.s32.totalorder %v389, 0
      %vm422 = vcmp.ne.s32.totalorder %v396, 0
      %vm423 = vcmp.ne.s32.totalorder %v403, 0
      %vm424 = vcmp.ne.s32.totalorder %v410, 0
      %vm425 = vcmp.ne.s32.totalorder %v417, 0
      %vm426 = vcmp.lt.s32.totalorder %v368, 0
      %vm427 = vcmp.lt.s32.totalorder %v375, 0
      %vm428 = vcmp.lt.s32.totalorder %v382, 0
      %vm429 = vcmp.lt.s32.totalorder %v389, 0
      %vm430 = vcmp.lt.s32.totalorder %v396, 0
      %vm431 = vcmp.lt.s32.totalorder %v403, 0
      %vm432 = vcmp.lt.s32.totalorder %v410, 0
      %vm433 = vcmp.lt.s32.totalorder %v417, 0
      %vm434 = vmand %vm426, %vm418
      %vm435 = vmand %vm427, %vm419
      %vm436 = vmand %vm428, %vm420
      %vm437 = vmand %vm429, %vm421
      %vm438 = vmand %vm430, %vm422
      %vm439 = vmand %vm431, %vm423
      %vm440 = vmand %vm432, %vm424
      %vm441 = vmand %vm433, %vm425
      %v442 = vadd.s32 %v368, 8
      %v443 = vadd.s32 %v375, 8
      %v444 = vadd.s32 %v382, 8
      %v445 = vadd.s32 %v389, 8
      %v446 = vadd.s32 %v396, 8
      %v447 = vadd.s32 %v403, 8
      %v448 = vadd.s32 %v410, 8
      %v449 = vadd.s32 %v417, 8
      %v450 = vsel %vm434, %v442, %v368
      %v451 = vsel %vm435, %v443, %v375
      %v452 = vsel %vm436, %v444, %v382
      %v453 = vsel %vm437, %v445, %v389
      %v454 = vsel %vm438, %v446, %v396
      %v455 = vsel %vm439, %v447, %v403
      %v456 = vsel %vm440, %v448, %v410
      %v457 = vsel %vm441, %v449, %v417
      %v458 = vrot.slane %v322, 7
      %v459 = vrot.slane %v323, 7
      %v460 = vrot.slane %v324, 7
      %v461 = vrot.slane %v325, 7
      %v462 = vrot.slane %v326, 7
      %v463 = vrot.slane %v327, 7
      %v464 = vrot.slane %v328, 7
      %v465 = vrot.slane %v329, 7
      %vm466 = vcmp.lt.s32.totalorder %v354, 1
      %v467 = vsel %vm466, %v464, %v465
      %v468 = vsel %vm466, %v463, %v464
      %v469 = vsel %vm466, %v462, %v463
      %v470 = vsel %vm466, %v461, %v462
      %v471 = vsel %vm466, %v460, %v461
      %v472 = vsel %vm466, %v459, %v460
      %v473 = vsel %vm466, %v458, %v459
      %v474 = vsel %vm466, %v465, %v458
      %vm475 = vcmp.ge.s32.totalorder %v354, 8
      %vm476 = vcmp.ge.s32.totalorder %v355, 8
      %vm477 = vcmp.ge.s32.totalorder %v356, 8
      %vm478 = vcmp.ge.s32.totalorder %v357, 8
      %vm479 = vcmp.ge.s32.totalorder %v358, 8
      %vm480 = vcmp.ge.s32.totalorder %v359, 8
      %vm481 = vcmp.ge.s32.totalorder %v360, 8
      %vm482 = vcmp.ge.s32.totalorder %v361, 8
      %vm483 = vcmp.ge.s32.totalorder %v450, 1
      %vm484 = vcmp.ge.s32.totalorder %v451, 1
      %vm485 = vcmp.ge.s32.totalorder %v452, 1
      %vm486 = vcmp.ge.s32.totalorder %v453, 1
      %vm487 = vcmp.ge.s32.totalorder %v454, 1
      %vm488 = vcmp.ge.s32.totalorder %v455, 1
      %vm489 = vcmp.ge.s32.totalorder %v456, 1
      %vm490 = vcmp.ge.s32.totalorder %v457, 1
      %vm491 = vmand %vm475, %vm483
      %vm492 = vmand %vm476, %vm484
      %vm493 = vmand %vm477, %vm485
      %vm494 = vmand %vm478, %vm486
      %vm495 = vmand %vm479, %vm487
      %vm496 = vmand %vm480, %vm488
      %vm497 = vmand %vm481, %vm489
      %vm498 = vmand %vm482, %vm490
      %v499 = vsel %vm491, 1, 0
      %v500 = vsel %vm492, 1, 0
      %v501 = vsel %vm493, 1, 0
      %v502 = vsel %vm494, 1, 0
      %v503 = vsel %vm495, 1, 0
      %v504 = vsel %vm496, 1, 0
      %v505 = vsel %vm497, 1, 0
      %v506 = vsel %vm498, 1, 0
      %vm507 = vcmp.eq.s32.totalorder %v499, 1
      %vm508 = vcmp.eq.s32.totalorder %v500, 1
      %vm509 = vcmp.eq.s32.totalorder %v501, 1
      %vm510 = vcmp.eq.s32.totalorder %v502, 1
      %vm511 = vcmp.eq.s32.totalorder %v503, 1
      %vm512 = vcmp.eq.s32.totalorder %v504, 1
      %vm513 = vcmp.eq.s32.totalorder %v505, 1
      %vm514 = vcmp.eq.s32.totalorder %v506, 1
      %v515 = vsel %vm507, %v467, 0.0
      %v516 = vsel %vm508, %v474, 0.0
      %v517 = vsel %vm509, %v473, 0.0
      %v518 = vsel %vm510, %v472, 0.0
      %v519 = vsel %vm511, %v471, 0.0
      %v520 = vsel %vm512, %v470, 0.0
      %v521 = vsel %vm513, %v469, 0.0
      %v522 = vsel %vm514, %v468, 0.0
      %v523 = vld [vmem:[%s2] sm:$0xf]
      %v524 = vld [vmem:[%s2 + $0x4] sm:$0xf]
      %v525 = vld [vmem:[%s2 + $0x8] sm:$0xf]
      %v526 = vld [vmem:[%s2 + $0xc] sm:$0xf]
      %v527 = vld [vmem:[%s2 + $0x10] sm:$0xf]
      %v528 = vld [vmem:[%s2 + $0x14] sm:$0xf]
      %v529 = vld [vmem:[%s2 + $0x18] sm:$0xf]
      %v530 = vld [vmem:[%s2 + $0x1c] sm:$0xf]
      %v531 = vld [vmem:[%s2 + $0x20] sm:$0xf]
      %v532 = vld [vmem:[%s2 + $0x24] sm:$0xf]
      %v533 = vld [vmem:[%s2 + $0x28] sm:$0xf]
      %v534 = vld [vmem:[%s2 + $0x2c] sm:$0xf]
      %v535 = vld [vmem:[%s2 + $0x30] sm:$0xf]
      %v536 = vld [vmem:[%s2 + $0x34] sm:$0xf]
      %v537 = vld [vmem:[%s2 + $0x38] sm:$0xf]
      %v538 = vld [vmem:[%s2 + $0x3c] sm:$0xf]
      %v539 = vpack.c.bf16 %v516, %v515
      %v540 = vpack.c.bf16 %v518, %v517
      %v541 = vpack.c.bf16 %v520, %v519
      %v542 = vpack.c.bf16 %v522, %v521
      %v543 = vsel %vm475, 1, 0
      %v544 = vsel %vm476, 1, 0
      %v545 = vsel %vm477, 1, 0
      %v546 = vsel %vm478, 1, 0
      %v547 = vsel %vm479, 1, 0
      %v548 = vsel %vm480, 1, 0
      %v549 = vsel %vm481, 1, 0
      %v550 = vsel %vm482, 1, 0
      %vm551 = vcmp.eq.s32.totalorder %v543, 1
      %vm552 = vcmp.eq.s32.totalorder %v544, 1
      %vm553 = vcmp.eq.s32.totalorder %v545, 1
      %vm554 = vcmp.eq.s32.totalorder %v546, 1
      %vm555 = vcmp.eq.s32.totalorder %v547, 1
      %vm556 = vcmp.eq.s32.totalorder %v548, 1
      %vm557 = vcmp.eq.s32.totalorder %v549, 1
      %vm558 = vcmp.eq.s32.totalorder %v550, 1
      %v559 = vsel %vm551, %v329, 0.0
      %v560 = vsel %vm552, %v322, 0.0
      %v561 = vsel %vm553, %v323, 0.0
      %v562 = vsel %vm554, %v324, 0.0
      %v563 = vsel %vm555, %v325, 0.0
      %v564 = vsel %vm556, %v326, 0.0
      %v565 = vsel %vm557, %v327, 0.0
      %v566 = vsel %vm558, %v328, 0.0
      %v567 = vld [vmem:[%s2 + $0x40] sm:$0xf]
      %v568 = vld [vmem:[%s2 + $0x44] sm:$0xf]
      %v569 = vld [vmem:[%s2 + $0x48] sm:$0xf]
      %v570 = vld [vmem:[%s2 + $0x4c] sm:$0xf]
      %v571 = vld [vmem:[%s2 + $0x50] sm:$0xf]
      %v572 = vld [vmem:[%s2 + $0x54] sm:$0xf]
      %v573 = vld [vmem:[%s2 + $0x58] sm:$0xf]
      %v574 = vld [vmem:[%s2 + $0x5c] sm:$0xf]
      %v575 = vld [vmem:[%s2 + $0x60] sm:$0xf]
      %v576 = vld [vmem:[%s2 + $0x64] sm:$0xf]
      %v577 = vld [vmem:[%s2 + $0x68] sm:$0xf]
      %v578 = vld [vmem:[%s2 + $0x6c] sm:$0xf]
      %v579 = vld [vmem:[%s2 + $0x70] sm:$0xf]
      %v580 = vld [vmem:[%s2 + $0x74] sm:$0xf]
      %v581 = vld [vmem:[%s2 + $0x78] sm:$0xf]
      %v582 = vld [vmem:[%s2 + $0x7c] sm:$0xf]
      %v583 = vpack.c.bf16 %v560, %v559
      %v584 = vpack.c.bf16 %v562, %v561
      %v585 = vpack.c.bf16 %v564, %v563
      %v586 = vpack.c.bf16 %v566, %v565
      %v603 = vunpack.c.l.b16 %v567
      %v604 = vunpack.c.l.b16 %v568
      %v605 = vunpack.c.l.b16 %v569
      %v606 = vunpack.c.l.b16 %v570
      %v607 = vunpack.c.l.b16 %v571
      %v608 = vunpack.c.l.b16 %v572
      %v609 = vunpack.c.l.b16 %v573
      %v610 = vunpack.c.l.b16 %v574
      %v611 = vunpack.c.l.b16 %v575
      %v612 = vunpack.c.l.b16 %v576
      %v613 = vunpack.c.l.b16 %v577
      %v614 = vunpack.c.l.b16 %v578
      %v615 = vunpack.c.l.b16 %v579
      %v616 = vunpack.c.l.b16 %v580
      %v617 = vunpack.c.l.b16 %v581
      %v618 = vunpack.c.l.b16 %v582
      %v619 = vpack.c.b16 %v604, %v603
      %v620 = vpack.c.b16 %v606, %v605
      %v621 = vpack.c.b16 %v608, %v607
      %v622 = vpack.c.b16 %v610, %v609
      %v623 = vpack.c.b16 %v612, %v611
      %v624 = vpack.c.b16 %v614, %v613
      %v625 = vpack.c.b16 %v616, %v615
      %v626 = vpack.c.b16 %v618, %v617
      %635 = vmatprep.subr.bf16.mxu0 0
      %636 = vmatpush1.bf16.msra.mxu0 %v626
      %637 = vmatprep.subr.bf16.mxu0 0
      %638 = vmatpush1.bf16.msra.mxu0 %v625
      %639 = vmatprep.subr.bf16.mxu0 0
      %640 = vmatpush1.bf16.msra.mxu0 %v624
      %641 = vmatprep.subr.bf16.mxu0 0
      %642 = vmatpush1.bf16.msra.mxu0 %v623
      %643 = vmatprep.subr.bf16.mxu0 0
      %644 = vmatpush1.bf16.msra.mxu0 %v622
      %645 = vmatprep.subr.bf16.mxu0 0
      %646 = vmatpush1.bf16.msra.mxu0 %v621
      %647 = vmatprep.subr.bf16.mxu0 0
      %648 = vmatpush1.bf16.msra.mxu0 %v620
      %649 = vmatprep.subr.bf16.mxu0 0
      %650 = vmatpush1.bf16.msra.mxu0 %v619
      %651 = vmatprep.subr.bf16.mxu0 0
      %652 = vmatpush2.bf16.msra.mxu0 0
      %653 = vmatprep.subr.bf16.mxu0 0
      %654 = vmatpush2.bf16.msra.mxu0 0
      %655 = vmatprep.subr.bf16.mxu0 0
      %656 = vmatpush2.bf16.msra.mxu0 0
      %657 = vmatprep.subr.bf16.mxu0 0
      %658 = vmatpush2.bf16.msra.mxu0 0
      %659 = vmatprep.subr.bf16.mxu0 0
      %660 = vmatpush2.bf16.msra.mxu0 0
      %661 = vmatprep.subr.bf16.mxu0 0
      %662 = vmatpush2.bf16.msra.mxu0 0
      %663 = vmatprep.subr.bf16.mxu0 0
      %664 = vmatpush2.bf16.msra.mxu0 0
      %665 = vmatprep.subr.bf16.mxu0 0
      %666 = vmatpush2.bf16.msra.mxu0 0
      %667 = vmatprep.mubr.bf16.mxu0 0
      %668 = vmatmul.mubr.bf16.gmra.mxu0 %v583
      %v669 = vpop.f32.mrf.mxu0
      %v670 = vadd.f32 0.0, %v669
      %v671 = vpop.f32.mrf.mxu0
      %v672 = vpop.f32.mrf.mxu0
      %v673 = vadd.f32 0.0, %v672
      %v674 = vpop.f32.mrf.mxu0
      %675 = vmatprep.mubr.bf16.mxu0 0
      %676 = vmatmul.mubr.bf16.gmra.mxu0 %v584
      %v677 = vpop.f32.mrf.mxu0
      %v678 = vadd.f32 0.0, %v677
      %v679 = vpop.f32.mrf.mxu0
      %v680 = vpop.f32.mrf.mxu0
      %v681 = vadd.f32 0.0, %v680
      %v682 = vpop.f32.mrf.mxu0
      %683 = vmatprep.mubr.bf16.mxu0 0
      %684 = vmatmul.mubr.bf16.gmra.mxu0 %v585
      %v685 = vpop.f32.mrf.mxu0
      %v686 = vadd.f32 0.0, %v685
      %v687 = vpop.f32.mrf.mxu0
      %v688 = vpop.f32.mrf.mxu0
      %v689 = vadd.f32 0.0, %v688
      %v690 = vpop.f32.mrf.mxu0
      %691 = vmatprep.mubr.bf16.mxu0 0
      %692 = vmatmul.mubr.bf16.gmra.mxu0 %v586
      %v693 = vpop.f32.mrf.mxu0
      %v694 = vadd.f32 0.0, %v693
      %v695 = vpop.f32.mrf.mxu0
      %v696 = vpop.f32.mrf.mxu0
      %v697 = vadd.f32 0.0, %v696
      %v698 = vpop.f32.mrf.mxu0
      %699 = vdwg.mxu0
      %v716 = vunpack.c.l.b16 %v523
      %v717 = vunpack.c.l.b16 %v524
      %v718 = vunpack.c.l.b16 %v525
      %v719 = vunpack.c.l.b16 %v526
      %v720 = vunpack.c.l.b16 %v527
      %v721 = vunpack.c.l.b16 %v528
      %v722 = vunpack.c.l.b16 %v529
      %v723 = vunpack.c.l.b16 %v530
      %v724 = vunpack.c.l.b16 %v531
      %v725 = vunpack.c.l.b16 %v532
      %v726 = vunpack.c.l.b16 %v533
      %v727 = vunpack.c.l.b16 %v534
      %v728 = vunpack.c.l.b16 %v535
      %v729 = vunpack.c.l.b16 %v536
      %v730 = vunpack.c.l.b16 %v537
      %v731 = vunpack.c.l.b16 %v538
      %v732 = vpack.c.b16 %v717, %v716
      %v733 = vpack.c.b16 %v719, %v718
      %v734 = vpack.c.b16 %v721, %v720
      %v735 = vpack.c.b16 %v723, %v722
      %v736 = vpack.c.b16 %v725, %v724
      %v737 = vpack.c.b16 %v727, %v726
      %v738 = vpack.c.b16 %v729, %v728
      %v739 = vpack.c.b16 %v731, %v730
      %748 = vmatprep.subr.bf16.mxu0 0
      %749 = vmatpush1.bf16.msra.mxu0 %v739
      %750 = vmatprep.subr.bf16.mxu0 0
      %751 = vmatpush1.bf16.msra.mxu0 %v738
      %752 = vmatprep.subr.bf16.mxu0 0
      %753 = vmatpush1.bf16.msra.mxu0 %v737
      %754 = vmatprep.subr.bf16.mxu0 0
      %755 = vmatpush1.bf16.msra.mxu0 %v736
      %756 = vmatprep.subr.bf16.mxu0 0
      %757 = vmatpush1.bf16.msra.mxu0 %v735
      %758 = vmatprep.subr.bf16.mxu0 0
      %759 = vmatpush1.bf16.msra.mxu0 %v734
      %760 = vmatprep.subr.bf16.mxu0 0
      %761 = vmatpush1.bf16.msra.mxu0 %v733
      %762 = vmatprep.subr.bf16.mxu0 0
      %763 = vmatpush1.bf16.msra.mxu0 %v732
      %764 = vmatprep.subr.bf16.mxu0 0
      %765 = vmatpush2.bf16.msra.mxu0 0
      %766 = vmatprep.subr.bf16.mxu0 0
      %767 = vmatpush2.bf16.msra.mxu0 0
      %768 = vmatprep.subr.bf16.mxu0 0
      %769 = vmatpush2.bf16.msra.mxu0 0
      %770 = vmatprep.subr.bf16.mxu0 0
      %771 = vmatpush2.bf16.msra.mxu0 0
      %772 = vmatprep.subr.bf16.mxu0 0
      %773 = vmatpush2.bf16.msra.mxu0 0
      %774 = vmatprep.subr.bf16.mxu0 0
      %775 = vmatpush2.bf16.msra.mxu0 0
      %776 = vmatprep.subr.bf16.mxu0 0
      %777 = vmatpush2.bf16.msra.mxu0 0
      %778 = vmatprep.subr.bf16.mxu0 0
      %779 = vmatpush2.bf16.msra.mxu0 0
      %780 = vmatprep.mubr.bf16.mxu0 0
      %781 = vmatmul.mubr.bf16.gmra.mxu0 %v539
      %v782 = vpop.f32.mrf.mxu0
      %v783 = vadd.f32 %v670, %v782
      %v784 = vpop.f32.mrf.mxu0
      %v785 = vpop.f32.mrf.mxu0
      %v786 = vadd.f32 %v673, %v785
      %v787 = vpop.f32.mrf.mxu0
      %788 = vmatprep.mubr.bf16.mxu0 0
      %789 = vmatmul.mubr.bf16.gmra.mxu0 %v540
      %v790 = vpop.f32.mrf.mxu0
      %v791 = vadd.f32 %v678, %v790
      %v792 = vpop.f32.mrf.mxu0
      %v793 = vpop.f32.mrf.mxu0
      %v794 = vadd.f32 %v681, %v793
      %v795 = vpop.f32.mrf.mxu0
      %796 = vmatprep.mubr.bf16.mxu0 0
      %797 = vmatmul.mubr.bf16.gmra.mxu0 %v541
      %v798 = vpop.f32.mrf.mxu0
      %v799 = vadd.f32 %v686, %v798
      %v800 = vpop.f32.mrf.mxu0
      %v801 = vpop.f32.mrf.mxu0
      %v802 = vadd.f32 %v689, %v801
      %v803 = vpop.f32.mrf.mxu0
      %804 = vmatprep.mubr.bf16.mxu0 0
      %805 = vmatmul.mubr.bf16.gmra.mxu0 %v542
      %v806 = vpop.f32.mrf.mxu0
      %v807 = vadd.f32 %v694, %v806
      %v808 = vpop.f32.mrf.mxu0
      %v809 = vpop.f32.mrf.mxu0
      %v810 = vadd.f32 %v697, %v809
      %v811 = vpop.f32.mrf.mxu0
      %812 = vdwg.mxu0
      %v813 = vrot.slane %v322, 1
      %v814 = vrot.slane %v323, 1
      %v815 = vrot.slane %v324, 1
      %v816 = vrot.slane %v325, 1
      %v817 = vrot.slane %v326, 1
      %v818 = vrot.slane %v327, 1
      %v819 = vrot.slane %v328, 1
      %v820 = vrot.slane %v329, 1
      %vm821 = vcmp.lt.s32.totalorder %v354, 7
      %v822 = vsel %vm821, %v819, %v820
      %v823 = vsel %vm821, %v818, %v819
      %v824 = vsel %vm821, %v817, %v818
      %v825 = vsel %vm821, %v816, %v817
      %v826 = vsel %vm821, %v815, %v816
      %v827 = vsel %vm821, %v814, %v815
      %v828 = vsel %vm821, %v813, %v814
      %v829 = vsel %vm821, %v820, %v813
      %vm830 = vcmp.lt.s32.totalorder %v450, 7
      %vm831 = vcmp.lt.s32.totalorder %v451, 7
      %vm832 = vcmp.lt.s32.totalorder %v452, 7
      %vm833 = vcmp.lt.s32.totalorder %v453, 7
      %vm834 = vcmp.lt.s32.totalorder %v454, 7
      %vm835 = vcmp.lt.s32.totalorder %v455, 7
      %vm836 = vcmp.lt.s32.totalorder %v456, 7
      %vm837 = vcmp.lt.s32.totalorder %v457, 7
      %vm838 = vmand %vm475, %vm830
      %vm839 = vmand %vm476, %vm831
      %vm840 = vmand %vm477, %vm832
      %vm841 = vmand %vm478, %vm833
      %vm842 = vmand %vm479, %vm834
      %vm843 = vmand %vm480, %vm835
      %vm844 = vmand %vm481, %vm836
      %vm845 = vmand %vm482, %vm837
      %v846 = vsel %vm838, 1, 0
      %v847 = vsel %vm839, 1, 0
      %v848 = vsel %vm840, 1, 0
      %v849 = vsel %vm841, 1, 0
      %v850 = vsel %vm842, 1, 0
      %v851 = vsel %vm843, 1, 0
      %v852 = vsel %vm844, 1, 0
      %v853 = vsel %vm845, 1, 0
      %vm854 = vcmp.eq.s32.totalorder %v846, 1
      %vm855 = vcmp.eq.s32.totalorder %v847, 1
      %vm856 = vcmp.eq.s32.totalorder %v848, 1
      %vm857 = vcmp.eq.s32.totalorder %v849, 1
      %vm858 = vcmp.eq.s32.totalorder %v850, 1
      %vm859 = vcmp.eq.s32.totalorder %v851, 1
      %vm860 = vcmp.eq.s32.totalorder %v852, 1
      %vm861 = vcmp.eq.s32.totalorder %v853, 1
      %v862 = vsel %vm854, %v829, 0.0
      %v863 = vsel %vm855, %v828, 0.0
      %v864 = vsel %vm856, %v827, 0.0
      %v865 = vsel %vm857, %v826, 0.0
      %v866 = vsel %vm858, %v825, 0.0
      %v867 = vsel %vm859, %v824, 0.0
      %v868 = vsel %vm860, %v823, 0.0
      %v869 = vsel %vm861, %v822, 0.0
      %v870 = vld [vmem:[%s2 + $0x80] sm:$0xf]
      %v871 = vld [vmem:[%s2 + $0x84] sm:$0xf]
      %v872 = vld [vmem:[%s2 + $0x88] sm:$0xf]
      %v873 = vld [vmem:[%s2 + $0x8c] sm:$0xf]
      %v874 = vld [vmem:[%s2 + $0x90] sm:$0xf]
      %v875 = vld [vmem:[%s2 + $0x94] sm:$0xf]
      %v876 = vld [vmem:[%s2 + $0x98] sm:$0xf]
      %v877 = vld [vmem:[%s2 + $0x9c] sm:$0xf]
      %v878 = vld [vmem:[%s2 + $0xa0] sm:$0xf]
      %v879 = vld [vmem:[%s2 + $0xa4] sm:$0xf]
      %v880 = vld [vmem:[%s2 + $0xa8] sm:$0xf]
      %v881 = vld [vmem:[%s2 + $0xac] sm:$0xf]
      %v882 = vld [vmem:[%s2 + $0xb0] sm:$0xf]
      %v883 = vld [vmem:[%s2 + $0xb4] sm:$0xf]
      %v884 = vld [vmem:[%s2 + $0xb8] sm:$0xf]
      %v885 = vld [vmem:[%s2 + $0xbc] sm:$0xf]
      %v886 = vpack.c.bf16 %v863, %v862
      %v887 = vpack.c.bf16 %v865, %v864
      %v888 = vpack.c.bf16 %v867, %v866
      %v889 = vpack.c.bf16 %v869, %v868
      %v906 = vunpack.c.l.b16 %v870
      %v907 = vunpack.c.l.b16 %v871
      %v908 = vunpack.c.l.b16 %v872
      %v909 = vunpack.c.l.b16 %v873
      %v910 = vunpack.c.l.b16 %v874
      %v911 = vunpack.c.l.b16 %v875
      %v912 = vunpack.c.l.b16 %v876
      %v913 = vunpack.c.l.b16 %v877
      %v914 = vunpack.c.l.b16 %v878
      %v915 = vunpack.c.l.b16 %v879
      %v916 = vunpack.c.l.b16 %v880
      %v917 = vunpack.c.l.b16 %v881
      %v918 = vunpack.c.l.b16 %v882
      %v919 = vunpack.c.l.b16 %v883
      %v920 = vunpack.c.l.b16 %v884
      %v921 = vunpack.c.l.b16 %v885
      %v922 = vpack.c.b16 %v907, %v906
      %v923 = vpack.c.b16 %v909, %v908
      %v924 = vpack.c.b16 %v911, %v910
      %v925 = vpack.c.b16 %v913, %v912
      %v926 = vpack.c.b16 %v915, %v914
      %v927 = vpack.c.b16 %v917, %v916
      %v928 = vpack.c.b16 %v919, %v918
      %v929 = vpack.c.b16 %v921, %v920
      %938 = vmatprep.subr.bf16.mxu0 0
      %939 = vmatpush1.bf16.msra.mxu0 %v929
      %940 = vmatprep.subr.bf16.mxu0 0
      %941 = vmatpush1.bf16.msra.mxu0 %v928
      %942 = vmatprep.subr.bf16.mxu0 0
      %943 = vmatpush1.bf16.msra.mxu0 %v927
      %944 = vmatprep.subr.bf16.mxu0 0
      %945 = vmatpush1.bf16.msra.mxu0 %v926
      %946 = vmatprep.subr.bf16.mxu0 0
      %947 = vmatpush1.bf16.msra.mxu0 %v925
      %948 = vmatprep.subr.bf16.mxu0 0
      %949 = vmatpush1.bf16.msra.mxu0 %v924
      %950 = vmatprep.subr.bf16.mxu0 0
      %951 = vmatpush1.bf16.msra.mxu0 %v923
      %952 = vmatprep.subr.bf16.mxu0 0
      %953 = vmatpush1.bf16.msra.mxu0 %v922
      %954 = vmatprep.subr.bf16.mxu0 0
      %955 = vmatpush2.bf16.msra.mxu0 0
      %956 = vmatprep.subr.bf16.mxu0 0
      %957 = vmatpush2.bf16.msra.mxu0 0
      %958 = vmatprep.subr.bf16.mxu0 0
      %959 = vmatpush2.bf16.msra.mxu0 0
      %960 = vmatprep.subr.bf16.mxu0 0
      %961 = vmatpush2.bf16.msra.mxu0 0
      %962 = vmatprep.subr.bf16.mxu0 0
      %963 = vmatpush2.bf16.msra.mxu0 0
      %964 = vmatprep.subr.bf16.mxu0 0
      %965 = vmatpush2.bf16.msra.mxu0 0
      %966 = vmatprep.subr.bf16.mxu0 0
      %967 = vmatpush2.bf16.msra.mxu0 0
      %968 = vmatprep.subr.bf16.mxu0 0
      %969 = vmatpush2.bf16.msra.mxu0 0
      %970 = vmatprep.mubr.bf16.mxu0 0
      %971 = vmatmul.mubr.bf16.gmra.mxu0 %v886
      %v972 = vpop.f32.mrf.mxu0
      %v973 = vadd.f32 0.0, %v972
      %v974 = vpop.f32.mrf.mxu0
      %v975 = vpop.f32.mrf.mxu0
      %v976 = vadd.f32 0.0, %v975
      %v977 = vpop.f32.mrf.mxu0
      %978 = vmatprep.mubr.bf16.mxu0 0
      %979 = vmatmul.mubr.bf16.gmra.mxu0 %v887
      %v980 = vpop.f32.mrf.mxu0
      %v981 = vadd.f32 0.0, %v980
      %v982 = vpop.f32.mrf.mxu0
      %v983 = vpop.f32.mrf.mxu0
      %v984 = vadd.f32 0.0, %v983
      %v985 = vpop.f32.mrf.mxu0
      %986 = vmatprep.mubr.bf16.mxu0 0
      %987 = vmatmul.mubr.bf16.gmra.mxu0 %v888
      %v988 = vpop.f32.mrf.mxu0
      %v989 = vadd.f32 0.0, %v988
      %v990 = vpop.f32.mrf.mxu0
      %v991 = vpop.f32.mrf.mxu0
      %v992 = vadd.f32 0.0, %v991
      %v993 = vpop.f32.mrf.mxu0
      %994 = vmatprep.mubr.bf16.mxu0 0
      %995 = vmatmul.mubr.bf16.gmra.mxu0 %v889
      %v996 = vpop.f32.mrf.mxu0
      %v997 = vadd.f32 0.0, %v996
      %v998 = vpop.f32.mrf.mxu0
      %v999 = vpop.f32.mrf.mxu0
      %v1000 = vadd.f32 0.0, %v999
      %v1001 = vpop.f32.mrf.mxu0
      %1002 = vdwg.mxu0
      %v1003 = vadd.f32 %v783, %v973
      %v1004 = vadd.f32 %v786, %v976
      %v1005 = vadd.f32 %v791, %v981
      %v1006 = vadd.f32 %v794, %v984
      %v1007 = vadd.f32 %v799, %v989
      %v1008 = vadd.f32 %v802, %v992
      %v1009 = vadd.f32 %v807, %v997
      %v1010 = vadd.f32 %v810, %v1000
      %v1011 = vsel %vm483, 1, 0
      %v1012 = vsel %vm484, 1, 0
      %v1013 = vsel %vm485, 1, 0
      %v1014 = vsel %vm486, 1, 0
      %v1015 = vsel %vm487, 1, 0
      %v1016 = vsel %vm488, 1, 0
      %v1017 = vsel %vm489, 1, 0
      %v1018 = vsel %vm490, 1, 0
      %vm1019 = vcmp.eq.s32.totalorder %v1011, 1
      %vm1020 = vcmp.eq.s32.totalorder %v1012, 1
      %vm1021 = vcmp.eq.s32.totalorder %v1013, 1
      %vm1022 = vcmp.eq.s32.totalorder %v1014, 1
      %vm1023 = vcmp.eq.s32.totalorder %v1015, 1
      %vm1024 = vcmp.eq.s32.totalorder %v1016, 1
      %vm1025 = vcmp.eq.s32.totalorder %v1017, 1
      %vm1026 = vcmp.eq.s32.totalorder %v1018, 1
      %v1027 = vsel %vm1019, %v474, 0.0
      %v1028 = vsel %vm1020, %v473, 0.0
      %v1029 = vsel %vm1021, %v472, 0.0
      %v1030 = vsel %vm1022, %v471, 0.0
      %v1031 = vsel %vm1023, %v470, 0.0
      %v1032 = vsel %vm1024, %v469, 0.0
      %v1033 = vsel %vm1025, %v468, 0.0
      %v1034 = vsel %vm1026, %v467, 0.0
      %v1035 = vld [vmem:[%s2 + $0xc0] sm:$0xf]
      %v1036 = vld [vmem:[%s2 + $0xc4] sm:$0xf]
      %v1037 = vld [vmem:[%s2 + $0xc8] sm:$0xf]
      %v1038 = vld [vmem:[%s2 + $0xcc] sm:$0xf]
      %v1039 = vld [vmem:[%s2 + $0xd0] sm:$0xf]
      %v1040 = vld [vmem:[%s2 + $0xd4] sm:$0xf]
      %v1041 = vld [vmem:[%s2 + $0xd8] sm:$0xf]
      %v1042 = vld [vmem:[%s2 + $0xdc] sm:$0xf]
      %v1043 = vld [vmem:[%s2 + $0xe0] sm:$0xf]
      %v1044 = vld [vmem:[%s2 + $0xe4] sm:$0xf]
      %v1045 = vld [vmem:[%s2 + $0xe8] sm:$0xf]
      %v1046 = vld [vmem:[%s2 + $0xec] sm:$0xf]
      %v1047 = vld [vmem:[%s2 + $0xf0] sm:$0xf]
      %v1048 = vld [vmem:[%s2 + $0xf4] sm:$0xf]
      %v1049 = vld [vmem:[%s2 + $0xf8] sm:$0xf]
      %v1050 = vld [vmem:[%s2 + $0xfc] sm:$0xf]
      %v1051 = vpack.c.bf16 %v1028, %v1027
      %v1052 = vpack.c.bf16 %v1030, %v1029
      %v1053 = vpack.c.bf16 %v1032, %v1031
      %v1054 = vpack.c.bf16 %v1034, %v1033
      %v1071 = vunpack.c.l.b16 %v1035
      %v1072 = vunpack.c.l.b16 %v1036
      %v1073 = vunpack.c.l.b16 %v1037
      %v1074 = vunpack.c.l.b16 %v1038
      %v1075 = vunpack.c.l.b16 %v1039
      %v1076 = vunpack.c.l.b16 %v1040
      %v1077 = vunpack.c.l.b16 %v1041
      %v1078 = vunpack.c.l.b16 %v1042
      %v1079 = vunpack.c.l.b16 %v1043
      %v1080 = vunpack.c.l.b16 %v1044
      %v1081 = vunpack.c.l.b16 %v1045
      %v1082 = vunpack.c.l.b16 %v1046
      %v1083 = vunpack.c.l.b16 %v1047
      %v1084 = vunpack.c.l.b16 %v1048
      %v1085 = vunpack.c.l.b16 %v1049
      %v1086 = vunpack.c.l.b16 %v1050
      %v1087 = vpack.c.b16 %v1072, %v1071
      %v1088 = vpack.c.b16 %v1074, %v1073
      %v1089 = vpack.c.b16 %v1076, %v1075
      %v1090 = vpack.c.b16 %v1078, %v1077
      %v1091 = vpack.c.b16 %v1080, %v1079
      %v1092 = vpack.c.b16 %v1082, %v1081
      %v1093 = vpack.c.b16 %v1084, %v1083
      %v1094 = vpack.c.b16 %v1086, %v1085
      %1103 = vmatprep.subr.bf16.mxu0 0
      %1104 = vmatpush1.bf16.msra.mxu0 %v1094
      %1105 = vmatprep.subr.bf16.mxu0 0
      %1106 = vmatpush1.bf16.msra.mxu0 %v1093
      %1107 = vmatprep.subr.bf16.mxu0 0
      %1108 = vmatpush1.bf16.msra.mxu0 %v1092
      %1109 = vmatprep.subr.bf16.mxu0 0
      %1110 = vmatpush1.bf16.msra.mxu0 %v1091
      %1111 = vmatprep.subr.bf16.mxu0 0
      %1112 = vmatpush1.bf16.msra.mxu0 %v1090
      %1113 = vmatprep.subr.bf16.mxu0 0
      %1114 = vmatpush1.bf16.msra.mxu0 %v1089
      %1115 = vmatprep.subr.bf16.mxu0 0
      %1116 = vmatpush1.bf16.msra.mxu0 %v1088
      %1117 = vmatprep.subr.bf16.mxu0 0
      %1118 = vmatpush1.bf16.msra.mxu0 %v1087
      %1119 = vmatprep.subr.bf16.mxu0 0
      %1120 = vmatpush2.bf16.msra.mxu0 0
      %1121 = vmatprep.subr.bf16.mxu0 0
      %1122 = vmatpush2.bf16.msra.mxu0 0
      %1123 = vmatprep.subr.bf16.mxu0 0
      %1124 = vmatpush2.bf16.msra.mxu0 0
      %1125 = vmatprep.subr.bf16.mxu0 0
      %1126 = vmatpush2.bf16.msra.mxu0 0
      %1127 = vmatprep.subr.bf16.mxu0 0
      %1128 = vmatpush2.bf16.msra.mxu0 0
      %1129 = vmatprep.subr.bf16.mxu0 0
      %1130 = vmatpush2.bf16.msra.mxu0 0
      %1131 = vmatprep.subr.bf16.mxu0 0
      %1132 = vmatpush2.bf16.msra.mxu0 0
      %1133 = vmatprep.subr.bf16.mxu0 0
      %1134 = vmatpush2.bf16.msra.mxu0 0
      %1135 = vmatprep.mubr.bf16.mxu0 0
      %1136 = vmatmul.mubr.bf16.gmra.mxu0 %v1051
      %v1137 = vpop.f32.mrf.mxu0
      %v1138 = vadd.f32 0.0, %v1137
      %v1139 = vpop.f32.mrf.mxu0
      %v1140 = vpop.f32.mrf.mxu0
      %v1141 = vadd.f32 0.0, %v1140
      %v1142 = vpop.f32.mrf.mxu0
      %1143 = vmatprep.mubr.bf16.mxu0 0
      %1144 = vmatmul.mubr.bf16.gmra.mxu0 %v1052
      %v1145 = vpop.f32.mrf.mxu0
      %v1146 = vadd.f32 0.0, %v1145
      %v1147 = vpop.f32.mrf.mxu0
      %v1148 = vpop.f32.mrf.mxu0
      %v1149 = vadd.f32 0.0, %v1148
      %v1150 = vpop.f32.mrf.mxu0
      %1151 = vmatprep.mubr.bf16.mxu0 0
      %1152 = vmatmul.mubr.bf16.gmra.mxu0 %v1053
      %v1153 = vpop.f32.mrf.mxu0
      %v1154 = vadd.f32 0.0, %v1153
      %v1155 = vpop.f32.mrf.mxu0
      %v1156 = vpop.f32.mrf.mxu0
      %v1157 = vadd.f32 0.0, %v1156
      %v1158 = vpop.f32.mrf.mxu0
      %1159 = vmatprep.mubr.bf16.mxu0 0
      %1160 = vmatmul.mubr.bf16.gmra.mxu0 %v1054
      %v1161 = vpop.f32.mrf.mxu0
      %v1162 = vadd.f32 0.0, %v1161
      %v1163 = vpop.f32.mrf.mxu0
      %v1164 = vpop.f32.mrf.mxu0
      %v1165 = vadd.f32 0.0, %v1164
      %v1166 = vpop.f32.mrf.mxu0
      %1167 = vdwg.mxu0
      %v1168 = vadd.f32 %v1003, %v1138
      %v1169 = vadd.f32 %v1004, %v1141
      %v1170 = vadd.f32 %v1005, %v1146
      %v1171 = vadd.f32 %v1006, %v1149
      %v1172 = vadd.f32 %v1007, %v1154
      %v1173 = vadd.f32 %v1008, %v1157
      %v1174 = vadd.f32 %v1009, %v1162
      %v1175 = vadd.f32 %v1010, %v1165
      %v1176 = vld [vmem:[%s2 + $0x100] sm:$0xf]
      %v1177 = vld [vmem:[%s2 + $0x104] sm:$0xf]
      %v1178 = vld [vmem:[%s2 + $0x108] sm:$0xf]
      %v1179 = vld [vmem:[%s2 + $0x10c] sm:$0xf]
      %v1180 = vld [vmem:[%s2 + $0x110] sm:$0xf]
      %v1181 = vld [vmem:[%s2 + $0x114] sm:$0xf]
      %v1182 = vld [vmem:[%s2 + $0x118] sm:$0xf]
      %v1183 = vld [vmem:[%s2 + $0x11c] sm:$0xf]
      %v1184 = vld [vmem:[%s2 + $0x120] sm:$0xf]
      %v1185 = vld [vmem:[%s2 + $0x124] sm:$0xf]
      %v1186 = vld [vmem:[%s2 + $0x128] sm:$0xf]
      %v1187 = vld [vmem:[%s2 + $0x12c] sm:$0xf]
      %v1188 = vld [vmem:[%s2 + $0x130] sm:$0xf]
      %v1189 = vld [vmem:[%s2 + $0x134] sm:$0xf]
      %v1190 = vld [vmem:[%s2 + $0x138] sm:$0xf]
      %v1191 = vld [vmem:[%s2 + $0x13c] sm:$0xf]
      %v1192 = vpack.c.bf16 %v323, %v322
      %v1193 = vpack.c.bf16 %v325, %v324
      %v1194 = vpack.c.bf16 %v327, %v326
      %v1195 = vpack.c.bf16 %v329, %v328
      %v1212 = vunpack.c.l.b16 %v1176
      %v1213 = vunpack.c.l.b16 %v1177
      %v1214 = vunpack.c.l.b16 %v1178
      %v1215 = vunpack.c.l.b16 %v1179
      %v1216 = vunpack.c.l.b16 %v1180
      %v1217 = vunpack.c.l.b16 %v1181
      %v1218 = vunpack.c.l.b16 %v1182
      %v1219 = vunpack.c.l.b16 %v1183
      %v1220 = vunpack.c.l.b16 %v1184
      %v1221 = vunpack.c.l.b16 %v1185
      %v1222 = vunpack.c.l.b16 %v1186
      %v1223 = vunpack.c.l.b16 %v1187
      %v1224 = vunpack.c.l.b16 %v1188
      %v1225 = vunpack.c.l.b16 %v1189
      %v1226 = vunpack.c.l.b16 %v1190
      %v1227 = vunpack.c.l.b16 %v1191
      %v1228 = vpack.c.b16 %v1213, %v1212
      %v1229 = vpack.c.b16 %v1215, %v1214
      %v1230 = vpack.c.b16 %v1217, %v1216
      %v1231 = vpack.c.b16 %v1219, %v1218
      %v1232 = vpack.c.b16 %v1221, %v1220
      %v1233 = vpack.c.b16 %v1223, %v1222
      %v1234 = vpack.c.b16 %v1225, %v1224
      %v1235 = vpack.c.b16 %v1227, %v1226
      %1244 = vmatprep.subr.bf16.mxu0 0
      %1245 = vmatpush1.bf16.msra.mxu0 %v1235
      %1246 = vmatprep.subr.bf16.mxu0 0
      %1247 = vmatpush1.bf16.msra.mxu0 %v1234
      %1248 = vmatprep.subr.bf16.mxu0 0
      %1249 = vmatpush1.bf16.msra.mxu0 %v1233
      %1250 = vmatprep.subr.bf16.mxu0 0
      %1251 = vmatpush1.bf16.msra.mxu0 %v1232
      %1252 = vmatprep.subr.bf16.mxu0 0
      %1253 = vmatpush1.bf16.msra.mxu0 %v1231
      %1254 = vmatprep.subr.bf16.mxu0 0
      %1255 = vmatpush1.bf16.msra.mxu0 %v1230
      %1256 = vmatprep.subr.bf16.mxu0 0
      %1257 = vmatpush1.bf16.msra.mxu0 %v1229
      %1258 = vmatprep.subr.bf16.mxu0 0
      %1259 = vmatpush1.bf16.msra.mxu0 %v1228
      %1260 = vmatprep.subr.bf16.mxu0 0
      %1261 = vmatpush2.bf16.msra.mxu0 0
      %1262 = vmatprep.subr.bf16.mxu0 0
      %1263 = vmatpush2.bf16.msra.mxu0 0
      %1264 = vmatprep.subr.bf16.mxu0 0
      %1265 = vmatpush2.bf16.msra.mxu0 0
      %1266 = vmatprep.subr.bf16.mxu0 0
      %1267 = vmatpush2.bf16.msra.mxu0 0
      %1268 = vmatprep.subr.bf16.mxu0 0
      %1269 = vmatpush2.bf16.msra.mxu0 0
      %1270 = vmatprep.subr.bf16.mxu0 0
      %1271 = vmatpush2.bf16.msra.mxu0 0
      %1272 = vmatprep.subr.bf16.mxu0 0
      %1273 = vmatpush2.bf16.msra.mxu0 0
      %1274 = vmatprep.subr.bf16.mxu0 0
      %1275 = vmatpush2.bf16.msra.mxu0 0
      %1276 = vmatprep.mubr.bf16.mxu0 0
      %1277 = vmatmul.mubr.bf16.gmra.mxu0 %v1192
      %v1278 = vpop.f32.mrf.mxu0
      %v1279 = vadd.f32 0.0, %v1278
      %v1280 = vpop.f32.mrf.mxu0
      %v1281 = vpop.f32.mrf.mxu0
      %v1282 = vadd.f32 0.0, %v1281
      %v1283 = vpop.f32.mrf.mxu0
      %1284 = vmatprep.mubr.bf16.mxu0 0
      %1285 = vmatmul.mubr.bf16.gmra.mxu0 %v1193
      %v1286 = vpop.f32.mrf.mxu0
      %v1287 = vadd.f32 0.0, %v1286
      %v1288 = vpop.f32.mrf.mxu0
      %v1289 = vpop.f32.mrf.mxu0
      %v1290 = vadd.f32 0.0, %v1289
      %v1291 = vpop.f32.mrf.mxu0
      %1292 = vmatprep.mubr.bf16.mxu0 0
      %1293 = vmatmul.mubr.bf16.gmra.mxu0 %v1194
      %v1294 = vpop.f32.mrf.mxu0
      %v1295 = vadd.f32 0.0, %v1294
      %v1296 = vpop.f32.mrf.mxu0
      %v1297 = vpop.f32.mrf.mxu0
      %v1298 = vadd.f32 0.0, %v1297
      %v1299 = vpop.f32.mrf.mxu0
      %1300 = vmatprep.mubr.bf16.mxu0 0
      %1301 = vmatmul.mubr.bf16.gmra.mxu0 %v1195
      %v1302 = vpop.f32.mrf.mxu0
      %v1303 = vadd.f32 0.0, %v1302
      %v1304 = vpop.f32.mrf.mxu0
      %v1305 = vpop.f32.mrf.mxu0
      %v1306 = vadd.f32 0.0, %v1305
      %v1307 = vpop.f32.mrf.mxu0
      %1308 = vdwg.mxu0
      %v1309 = vadd.f32 %v1168, %v1279
      %v1310 = vadd.f32 %v1169, %v1282
      %v1311 = vadd.f32 %v1170, %v1287
      %v1312 = vadd.f32 %v1171, %v1290
      %v1313 = vadd.f32 %v1172, %v1295
      %v1314 = vadd.f32 %v1173, %v1298
      %v1315 = vadd.f32 %v1174, %v1303
      %v1316 = vadd.f32 %v1175, %v1306
      %v1317 = vsel %vm830, 1, 0
      %v1318 = vsel %vm831, 1, 0
      %v1319 = vsel %vm832, 1, 0
      %v1320 = vsel %vm833, 1, 0
      %v1321 = vsel %vm834, 1, 0
      %v1322 = vsel %vm835, 1, 0
      %v1323 = vsel %vm836, 1, 0
      %v1324 = vsel %vm837, 1, 0
      %vm1325 = vcmp.eq.s32.totalorder %v1317, 1
      %vm1326 = vcmp.eq.s32.totalorder %v1318, 1
      %vm1327 = vcmp.eq.s32.totalorder %v1319, 1
      %vm1328 = vcmp.eq.s32.totalorder %v1320, 1
      %vm1329 = vcmp.eq.s32.totalorder %v1321, 1
      %vm1330 = vcmp.eq.s32.totalorder %v1322, 1
      %vm1331 = vcmp.eq.s32.totalorder %v1323, 1
      %vm1332 = vcmp.eq.s32.totalorder %v1324, 1
      %v1333 = vsel %vm1325, %v828, 0.0
      %v1334 = vsel %vm1326, %v827, 0.0
      %v1335 = vsel %vm1327, %v826, 0.0
      %v1336 = vsel %vm1328, %v825, 0.0
      %v1337 = vsel %vm1329, %v824, 0.0
      %v1338 = vsel %vm1330, %v823, 0.0
      %v1339 = vsel %vm1331, %v822, 0.0
      %v1340 = vsel %vm1332, %v829, 0.0
      %v1341 = vld [vmem:[%s2 + $0x140] sm:$0xf]
      %v1342 = vld [vmem:[%s2 + $0x144] sm:$0xf]
      %v1343 = vld [vmem:[%s2 + $0x148] sm:$0xf]
      %v1344 = vld [vmem:[%s2 + $0x14c] sm:$0xf]
      %v1345 = vld [vmem:[%s2 + $0x150] sm:$0xf]
      %v1346 = vld [vmem:[%s2 + $0x154] sm:$0xf]
      %v1347 = vld [vmem:[%s2 + $0x158] sm:$0xf]
      %v1348 = vld [vmem:[%s2 + $0x15c] sm:$0xf]
      %v1349 = vld [vmem:[%s2 + $0x160] sm:$0xf]
      %v1350 = vld [vmem:[%s2 + $0x164] sm:$0xf]
      %v1351 = vld [vmem:[%s2 + $0x168] sm:$0xf]
      %v1352 = vld [vmem:[%s2 + $0x16c] sm:$0xf]
      %v1353 = vld [vmem:[%s2 + $0x170] sm:$0xf]
      %v1354 = vld [vmem:[%s2 + $0x174] sm:$0xf]
      %v1355 = vld [vmem:[%s2 + $0x178] sm:$0xf]
      %v1356 = vld [vmem:[%s2 + $0x17c] sm:$0xf]
      %v1357 = vpack.c.bf16 %v1334, %v1333
      %v1358 = vpack.c.bf16 %v1336, %v1335
      %v1359 = vpack.c.bf16 %v1338, %v1337
      %v1360 = vpack.c.bf16 %v1340, %v1339
      %v1377 = vunpack.c.l.b16 %v1341
      %v1378 = vunpack.c.l.b16 %v1342
      %v1379 = vunpack.c.l.b16 %v1343
      %v1380 = vunpack.c.l.b16 %v1344
      %v1381 = vunpack.c.l.b16 %v1345
      %v1382 = vunpack.c.l.b16 %v1346
      %v1383 = vunpack.c.l.b16 %v1347
      %v1384 = vunpack.c.l.b16 %v1348
      %v1385 = vunpack.c.l.b16 %v1349
      %v1386 = vunpack.c.l.b16 %v1350
      %v1387 = vunpack.c.l.b16 %v1351
      %v1388 = vunpack.c.l.b16 %v1352
      %v1389 = vunpack.c.l.b16 %v1353
      %v1390 = vunpack.c.l.b16 %v1354
      %v1391 = vunpack.c.l.b16 %v1355
      %v1392 = vunpack.c.l.b16 %v1356
      %v1393 = vpack.c.b16 %v1378, %v1377
      %v1394 = vpack.c.b16 %v1380, %v1379
      %v1395 = vpack.c.b16 %v1382, %v1381
      %v1396 = vpack.c.b16 %v1384, %v1383
      %v1397 = vpack.c.b16 %v1386, %v1385
      %v1398 = vpack.c.b16 %v1388, %v1387
      %v1399 = vpack.c.b16 %v1390, %v1389
      %v1400 = vpack.c.b16 %v1392, %v1391
      %1409 = vmatprep.subr.bf16.mxu0 0
      %1410 = vmatpush1.bf16.msra.mxu0 %v1400
      %1411 = vmatprep.subr.bf16.mxu0 0
      %1412 = vmatpush1.bf16.msra.mxu0 %v1399
      %1413 = vmatprep.subr.bf16.mxu0 0
      %1414 = vmatpush1.bf16.msra.mxu0 %v1398
      %1415 = vmatprep.subr.bf16.mxu0 0
      %1416 = vmatpush1.bf16.msra.mxu0 %v1397
      %1417 = vmatprep.subr.bf16.mxu0 0
      %1418 = vmatpush1.bf16.msra.mxu0 %v1396
      %1419 = vmatprep.subr.bf16.mxu0 0
      %1420 = vmatpush1.bf16.msra.mxu0 %v1395
      %1421 = vmatprep.subr.bf16.mxu0 0
      %1422 = vmatpush1.bf16.msra.mxu0 %v1394
      %1423 = vmatprep.subr.bf16.mxu0 0
      %1424 = vmatpush1.bf16.msra.mxu0 %v1393
      %1425 = vmatprep.subr.bf16.mxu0 0
      %1426 = vmatpush2.bf16.msra.mxu0 0
      %1427 = vmatprep.subr.bf16.mxu0 0
      %1428 = vmatpush2.bf16.msra.mxu0 0
      %1429 = vmatprep.subr.bf16.mxu0 0
      %1430 = vmatpush2.bf16.msra.mxu0 0
      %1431 = vmatprep.subr.bf16.mxu0 0
      %1432 = vmatpush2.bf16.msra.mxu0 0
      %1433 = vmatprep.subr.bf16.mxu0 0
      %1434 = vmatpush2.bf16.msra.mxu0 0
      %1435 = vmatprep.subr.bf16.mxu0 0
      %1436 = vmatpush2.bf16.msra.mxu0 0
      %1437 = vmatprep.subr.bf16.mxu0 0
      %1438 = vmatpush2.bf16.msra.mxu0 0
      %1439 = vmatprep.subr.bf16.mxu0 0
      %1440 = vmatpush2.bf16.msra.mxu0 0
      %1441 = vmatprep.mubr.bf16.mxu0 0
      %1442 = vmatmul.mubr.bf16.gmra.mxu0 %v1357
      %v1443 = vpop.f32.mrf.mxu0
      %v1444 = vadd.f32 0.0, %v1443
      %v1445 = vpop.f32.mrf.mxu0
      %v1446 = vpop.f32.mrf.mxu0
      %v1447 = vadd.f32 0.0, %v1446
      %v1448 = vpop.f32.mrf.mxu0
      %1449 = vmatprep.mubr.bf16.mxu0 0
      %1450 = vmatmul.mubr.bf16.gmra.mxu0 %v1358
      %v1451 = vpop.f32.mrf.mxu0
      %v1452 = vadd.f32 0.0, %v1451
      %v1453 = vpop.f32.mrf.mxu0
      %v1454 = vpop.f32.mrf.mxu0
      %v1455 = vadd.f32 0.0, %v1454
      %v1456 = vpop.f32.mrf.mxu0
      %1457 = vmatprep.mubr.bf16.mxu0 0
      %1458 = vmatmul.mubr.bf16.gmra.mxu0 %v1359
      %v1459 = vpop.f32.mrf.mxu0
      %v1460 = vadd.f32 0.0, %v1459
      %v1461 = vpop.f32.mrf.mxu0
      %v1462 = vpop.f32.mrf.mxu0
      %v1463 = vadd.f32 0.0, %v1462
      %v1464 = vpop.f32.mrf.mxu0
      %1465 = vmatprep.mubr.bf16.mxu0 0
      %1466 = vmatmul.mubr.bf16.gmra.mxu0 %v1360
      %v1467 = vpop.f32.mrf.mxu0
      %v1468 = vadd.f32 0.0, %v1467
      %v1469 = vpop.f32.mrf.mxu0
      %v1470 = vpop.f32.mrf.mxu0
      %v1471 = vadd.f32 0.0, %v1470
      %v1472 = vpop.f32.mrf.mxu0
      %1473 = vdwg.mxu0
      %v1474 = vadd.f32 %v1309, %v1444
      %v1475 = vadd.f32 %v1310, %v1447
      %v1476 = vadd.f32 %v1311, %v1452
      %v1477 = vadd.f32 %v1312, %v1455
      %v1478 = vadd.f32 %v1313, %v1460
      %v1479 = vadd.f32 %v1314, %v1463
      %v1480 = vadd.f32 %v1315, %v1468
      %v1481 = vadd.f32 %v1316, %v1471
      %vm1482 = vcmp.lt.s32.totalorder %v354, 56
      %vm1483 = vcmp.lt.s32.totalorder %v355, 56
      %vm1484 = vcmp.lt.s32.totalorder %v356, 56
      %vm1485 = vcmp.lt.s32.totalorder %v357, 56
      %vm1486 = vcmp.lt.s32.totalorder %v358, 56
      %vm1487 = vcmp.lt.s32.totalorder %v359, 56
      %vm1488 = vcmp.lt.s32.totalorder %v360, 56
      %vm1489 = vcmp.lt.s32.totalorder %v361, 56
      %vm1490 = vmand %vm1482, %vm483
      %vm1491 = vmand %vm1483, %vm484
      %vm1492 = vmand %vm1484, %vm485
      %vm1493 = vmand %vm1485, %vm486
      %vm1494 = vmand %vm1486, %vm487
      %vm1495 = vmand %vm1487, %vm488
      %vm1496 = vmand %vm1488, %vm489
      %vm1497 = vmand %vm1489, %vm490
      %v1498 = vsel %vm1490, 1, 0
      %v1499 = vsel %vm1491, 1, 0
      %v1500 = vsel %vm1492, 1, 0
      %v1501 = vsel %vm1493, 1, 0
      %v1502 = vsel %vm1494, 1, 0
      %v1503 = vsel %vm1495, 1, 0
      %v1504 = vsel %vm1496, 1, 0
      %v1505 = vsel %vm1497, 1, 0
      %vm1506 = vcmp.eq.s32.totalorder %v1498, 1
      %vm1507 = vcmp.eq.s32.totalorder %v1499, 1
      %vm1508 = vcmp.eq.s32.totalorder %v1500, 1
      %vm1509 = vcmp.eq.s32.totalorder %v1501, 1
      %vm1510 = vcmp.eq.s32.totalorder %v1502, 1
      %vm1511 = vcmp.eq.s32.totalorder %v1503, 1
      %vm1512 = vcmp.eq.s32.totalorder %v1504, 1
      %vm1513 = vcmp.eq.s32.totalorder %v1505, 1
      %v1514 = vsel %vm1506, %v473, 0.0
      %v1515 = vsel %vm1507, %v472, 0.0
      %v1516 = vsel %vm1508, %v471, 0.0
      %v1517 = vsel %vm1509, %v470, 0.0
      %v1518 = vsel %vm1510, %v469, 0.0
      %v1519 = vsel %vm1511, %v468, 0.0
      %v1520 = vsel %vm1512, %v467, 0.0
      %v1521 = vsel %vm1513, %v474, 0.0
      %v1522 = vld [vmem:[%s2 + $0x180] sm:$0xf]
      %v1523 = vld [vmem:[%s2 + $0x184] sm:$0xf]
      %v1524 = vld [vmem:[%s2 + $0x188] sm:$0xf]
      %v1525 = vld [vmem:[%s2 + $0x18c] sm:$0xf]
      %v1526 = vld [vmem:[%s2 + $0x190] sm:$0xf]
      %v1527 = vld [vmem:[%s2 + $0x194] sm:$0xf]
      %v1528 = vld [vmem:[%s2 + $0x198] sm:$0xf]
      %v1529 = vld [vmem:[%s2 + $0x19c] sm:$0xf]
      %v1530 = vld [vmem:[%s2 + $0x1a0] sm:$0xf]
      %v1531 = vld [vmem:[%s2 + $0x1a4] sm:$0xf]
      %v1532 = vld [vmem:[%s2 + $0x1a8] sm:$0xf]
      %v1533 = vld [vmem:[%s2 + $0x1ac] sm:$0xf]
      %v1534 = vld [vmem:[%s2 + $0x1b0] sm:$0xf]
      %v1535 = vld [vmem:[%s2 + $0x1b4] sm:$0xf]
      %v1536 = vld [vmem:[%s2 + $0x1b8] sm:$0xf]
      %v1537 = vld [vmem:[%s2 + $0x1bc] sm:$0xf]
      %v1538 = vpack.c.bf16 %v1515, %v1514
      %v1539 = vpack.c.bf16 %v1517, %v1516
      %v1540 = vpack.c.bf16 %v1519, %v1518
      %v1541 = vpack.c.bf16 %v1521, %v1520
      %v1558 = vunpack.c.l.b16 %v1522
      %v1559 = vunpack.c.l.b16 %v1523
      %v1560 = vunpack.c.l.b16 %v1524
      %v1561 = vunpack.c.l.b16 %v1525
      %v1562 = vunpack.c.l.b16 %v1526
      %v1563 = vunpack.c.l.b16 %v1527
      %v1564 = vunpack.c.l.b16 %v1528
      %v1565 = vunpack.c.l.b16 %v1529
      %v1566 = vunpack.c.l.b16 %v1530
      %v1567 = vunpack.c.l.b16 %v1531
      %v1568 = vunpack.c.l.b16 %v1532
      %v1569 = vunpack.c.l.b16 %v1533
      %v1570 = vunpack.c.l.b16 %v1534
      %v1571 = vunpack.c.l.b16 %v1535
      %v1572 = vunpack.c.l.b16 %v1536
      %v1573 = vunpack.c.l.b16 %v1537
      %v1574 = vpack.c.b16 %v1559, %v1558
      %v1575 = vpack.c.b16 %v1561, %v1560
      %v1576 = vpack.c.b16 %v1563, %v1562
      %v1577 = vpack.c.b16 %v1565, %v1564
      %v1578 = vpack.c.b16 %v1567, %v1566
      %v1579 = vpack.c.b16 %v1569, %v1568
      %v1580 = vpack.c.b16 %v1571, %v1570
      %v1581 = vpack.c.b16 %v1573, %v1572
      %1590 = vmatprep.subr.bf16.mxu0 0
      %1591 = vmatpush1.bf16.msra.mxu0 %v1581
      %1592 = vmatprep.subr.bf16.mxu0 0
      %1593 = vmatpush1.bf16.msra.mxu0 %v1580
      %1594 = vmatprep.subr.bf16.mxu0 0
      %1595 = vmatpush1.bf16.msra.mxu0 %v1579
      %1596 = vmatprep.subr.bf16.mxu0 0
      %1597 = vmatpush1.bf16.msra.mxu0 %v1578
      %1598 = vmatprep.subr.bf16.mxu0 0
      %1599 = vmatpush1.bf16.msra.mxu0 %v1577
      %1600 = vmatprep.subr.bf16.mxu0 0
      %1601 = vmatpush1.bf16.msra.mxu0 %v1576
      %1602 = vmatprep.subr.bf16.mxu0 0
      %1603 = vmatpush1.bf16.msra.mxu0 %v1575
      %1604 = vmatprep.subr.bf16.mxu0 0
      %1605 = vmatpush1.bf16.msra.mxu0 %v1574
      %1606 = vmatprep.subr.bf16.mxu0 0
      %1607 = vmatpush2.bf16.msra.mxu0 0
      %1608 = vmatprep.subr.bf16.mxu0 0
      %1609 = vmatpush2.bf16.msra.mxu0 0
      %1610 = vmatprep.subr.bf16.mxu0 0
      %1611 = vmatpush2.bf16.msra.mxu0 0
      %1612 = vmatprep.subr.bf16.mxu0 0
      %1613 = vmatpush2.bf16.msra.mxu0 0
      %1614 = vmatprep.subr.bf16.mxu0 0
      %1615 = vmatpush2.bf16.msra.mxu0 0
      %1616 = vmatprep.subr.bf16.mxu0 0
      %1617 = vmatpush2.bf16.msra.mxu0 0
      %1618 = vmatprep.subr.bf16.mxu0 0
      %1619 = vmatpush2.bf16.msra.mxu0 0
      %1620 = vmatprep.subr.bf16.mxu0 0
      %1621 = vmatpush2.bf16.msra.mxu0 0
      %1622 = vmatprep.mubr.bf16.mxu0 0
      %1623 = vmatmul.mubr.bf16.gmra.mxu0 %v1538
      %v1624 = vpop.f32.mrf.mxu0
      %v1625 = vadd.f32 0.0, %v1624
      %v1626 = vpop.f32.mrf.mxu0
      %v1627 = vpop.f32.mrf.mxu0
      %v1628 = vadd.f32 0.0, %v1627
      %v1629 = vpop.f32.mrf.mxu0
      %1630 = vmatprep.mubr.bf16.mxu0 0
      %1631 = vmatmul.mubr.bf16.gmra.mxu0 %v1539
      %v1632 = vpop.f32.mrf.mxu0
      %v1633 = vadd.f32 0.0, %v1632
      %v1634 = vpop.f32.mrf.mxu0
      %v1635 = vpop.f32.mrf.mxu0
      %v1636 = vadd.f32 0.0, %v1635
      %v1637 = vpop.f32.mrf.mxu0
      %1638 = vmatprep.mubr.bf16.mxu0 0
      %1639 = vmatmul.mubr.bf16.gmra.mxu0 %v1540
      %v1640 = vpop.f32.mrf.mxu0
      %v1641 = vadd.f32 0.0, %v1640
      %v1642 = vpop.f32.mrf.mxu0
      %v1643 = vpop.f32.mrf.mxu0
      %v1644 = vadd.f32 0.0, %v1643
      %v1645 = vpop.f32.mrf.mxu0
      %1646 = vmatprep.mubr.bf16.mxu0 0
      %1647 = vmatmul.mubr.bf16.gmra.mxu0 %v1541
      %v1648 = vpop.f32.mrf.mxu0
      %v1649 = vadd.f32 0.0, %v1648
      %v1650 = vpop.f32.mrf.mxu0
      %v1651 = vpop.f32.mrf.mxu0
      %v1652 = vadd.f32 0.0, %v1651
      %v1653 = vpop.f32.mrf.mxu0
      %1654 = vdwg.mxu0
      %v1655 = vadd.f32 %v1474, %v1625
      %v1656 = vadd.f32 %v1475, %v1628
      %v1657 = vadd.f32 %v1476, %v1633
      %v1658 = vadd.f32 %v1477, %v1636
      %v1659 = vadd.f32 %v1478, %v1641
      %v1660 = vadd.f32 %v1479, %v1644
      %v1661 = vadd.f32 %v1480, %v1649
      %v1662 = vadd.f32 %v1481, %v1652
      %v1663 = vsel %vm1482, 1, 0
      %v1664 = vsel %vm1483, 1, 0
      %v1665 = vsel %vm1484, 1, 0
      %v1666 = vsel %vm1485, 1, 0
      %v1667 = vsel %vm1486, 1, 0
      %v1668 = vsel %vm1487, 1, 0
      %v1669 = vsel %vm1488, 1, 0
      %v1670 = vsel %vm1489, 1, 0
      %vm1671 = vcmp.eq.s32.totalorder %v1663, 1
      %vm1672 = vcmp.eq.s32.totalorder %v1664, 1
      %vm1673 = vcmp.eq.s32.totalorder %v1665, 1
      %vm1674 = vcmp.eq.s32.totalorder %v1666, 1
      %vm1675 = vcmp.eq.s32.totalorder %v1667, 1
      %vm1676 = vcmp.eq.s32.totalorder %v1668, 1
      %vm1677 = vcmp.eq.s32.totalorder %v1669, 1
      %vm1678 = vcmp.eq.s32.totalorder %v1670, 1
      %v1679 = vsel %vm1671, %v323, 0.0
      %v1680 = vsel %vm1672, %v324, 0.0
      %v1681 = vsel %vm1673, %v325, 0.0
      %v1682 = vsel %vm1674, %v326, 0.0
      %v1683 = vsel %vm1675, %v327, 0.0
      %v1684 = vsel %vm1676, %v328, 0.0
      %v1685 = vsel %vm1677, %v329, 0.0
      %v1686 = vsel %vm1678, %v322, 0.0
      %v1687 = vld [vmem:[%s2 + $0x1c0] sm:$0xf]
      %v1688 = vld [vmem:[%s2 + $0x1c4] sm:$0xf]
      %v1689 = vld [vmem:[%s2 + $0x1c8] sm:$0xf]
      %v1690 = vld [vmem:[%s2 + $0x1cc] sm:$0xf]
      %v1691 = vld [vmem:[%s2 + $0x1d0] sm:$0xf]
      %v1692 = vld [vmem:[%s2 + $0x1d4] sm:$0xf]
      %v1693 = vld [vmem:[%s2 + $0x1d8] sm:$0xf]
      %v1694 = vld [vmem:[%s2 + $0x1dc] sm:$0xf]
      %v1695 = vld [vmem:[%s2 + $0x1e0] sm:$0xf]
      %v1696 = vld [vmem:[%s2 + $0x1e4] sm:$0xf]
      %v1697 = vld [vmem:[%s2 + $0x1e8] sm:$0xf]
      %v1698 = vld [vmem:[%s2 + $0x1ec] sm:$0xf]
      %v1699 = vld [vmem:[%s2 + $0x1f0] sm:$0xf]
      %v1700 = vld [vmem:[%s2 + $0x1f4] sm:$0xf]
      %v1701 = vld [vmem:[%s2 + $0x1f8] sm:$0xf]
      %v1702 = vld [vmem:[%s2 + $0x1fc] sm:$0xf]
      %v1703 = vpack.c.bf16 %v1680, %v1679
      %v1704 = vpack.c.bf16 %v1682, %v1681
      %v1705 = vpack.c.bf16 %v1684, %v1683
      %v1706 = vpack.c.bf16 %v1686, %v1685
      %v1723 = vunpack.c.l.b16 %v1687
      %v1724 = vunpack.c.l.b16 %v1688
      %v1725 = vunpack.c.l.b16 %v1689
      %v1726 = vunpack.c.l.b16 %v1690
      %v1727 = vunpack.c.l.b16 %v1691
      %v1728 = vunpack.c.l.b16 %v1692
      %v1729 = vunpack.c.l.b16 %v1693
      %v1730 = vunpack.c.l.b16 %v1694
      %v1731 = vunpack.c.l.b16 %v1695
      %v1732 = vunpack.c.l.b16 %v1696
      %v1733 = vunpack.c.l.b16 %v1697
      %v1734 = vunpack.c.l.b16 %v1698
      %v1735 = vunpack.c.l.b16 %v1699
      %v1736 = vunpack.c.l.b16 %v1700
      %v1737 = vunpack.c.l.b16 %v1701
      %v1738 = vunpack.c.l.b16 %v1702
      %v1739 = vpack.c.b16 %v1724, %v1723
      %v1740 = vpack.c.b16 %v1726, %v1725
      %v1741 = vpack.c.b16 %v1728, %v1727
      %v1742 = vpack.c.b16 %v1730, %v1729
      %v1743 = vpack.c.b16 %v1732, %v1731
      %v1744 = vpack.c.b16 %v1734, %v1733
      %v1745 = vpack.c.b16 %v1736, %v1735
      %v1746 = vpack.c.b16 %v1738, %v1737
      %1755 = vmatprep.subr.bf16.mxu0 0
      %1756 = vmatpush1.bf16.msra.mxu0 %v1746
      %1757 = vmatprep.subr.bf16.mxu0 0
      %1758 = vmatpush1.bf16.msra.mxu0 %v1745
      %1759 = vmatprep.subr.bf16.mxu0 0
      %1760 = vmatpush1.bf16.msra.mxu0 %v1744
      %1761 = vmatprep.subr.bf16.mxu0 0
      %1762 = vmatpush1.bf16.msra.mxu0 %v1743
      %1763 = vmatprep.subr.bf16.mxu0 0
      %1764 = vmatpush1.bf16.msra.mxu0 %v1742
      %1765 = vmatprep.subr.bf16.mxu0 0
      %1766 = vmatpush1.bf16.msra.mxu0 %v1741
      %1767 = vmatprep.subr.bf16.mxu0 0
      %1768 = vmatpush1.bf16.msra.mxu0 %v1740
      %1769 = vmatprep.subr.bf16.mxu0 0
      %1770 = vmatpush1.bf16.msra.mxu0 %v1739
      %1771 = vmatprep.subr.bf16.mxu0 0
      %1772 = vmatpush2.bf16.msra.mxu0 0
      %1773 = vmatprep.subr.bf16.mxu0 0
      %1774 = vmatpush2.bf16.msra.mxu0 0
      %1775 = vmatprep.subr.bf16.mxu0 0
      %1776 = vmatpush2.bf16.msra.mxu0 0
      %1777 = vmatprep.subr.bf16.mxu0 0
      %1778 = vmatpush2.bf16.msra.mxu0 0
      %1779 = vmatprep.subr.bf16.mxu0 0
      %1780 = vmatpush2.bf16.msra.mxu0 0
      %1781 = vmatprep.subr.bf16.mxu0 0
      %1782 = vmatpush2.bf16.msra.mxu0 0
      %1783 = vmatprep.subr.bf16.mxu0 0
      %1784 = vmatpush2.bf16.msra.mxu0 0
      %1785 = vmatprep.subr.bf16.mxu0 0
      %1786 = vmatpush2.bf16.msra.mxu0 0
      %1787 = vmatprep.mubr.bf16.mxu0 0
      %1788 = vmatmul.mubr.bf16.gmra.mxu0 %v1703
      %v1789 = vpop.f32.mrf.mxu0
      %v1790 = vadd.f32 0.0, %v1789
      %v1791 = vpop.f32.mrf.mxu0
      %v1792 = vpop.f32.mrf.mxu0
      %v1793 = vadd.f32 0.0, %v1792
      %v1794 = vpop.f32.mrf.mxu0
      %1795 = vmatprep.mubr.bf16.mxu0 0
      %1796 = vmatmul.mubr.bf16.gmra.mxu0 %v1704
      %v1797 = vpop.f32.mrf.mxu0
      %v1798 = vadd.f32 0.0, %v1797
      %v1799 = vpop.f32.mrf.mxu0
      %v1800 = vpop.f32.mrf.mxu0
      %v1801 = vadd.f32 0.0, %v1800
      %v1802 = vpop.f32.mrf.mxu0
      %1803 = vmatprep.mubr.bf16.mxu0 0
      %1804 = vmatmul.mubr.bf16.gmra.mxu0 %v1705
      %v1805 = vpop.f32.mrf.mxu0
      %v1806 = vadd.f32 0.0, %v1805
      %v1807 = vpop.f32.mrf.mxu0
      %v1808 = vpop.f32.mrf.mxu0
      %v1809 = vadd.f32 0.0, %v1808
      %v1810 = vpop.f32.mrf.mxu0
      %1811 = vmatprep.mubr.bf16.mxu0 0
      %1812 = vmatmul.mubr.bf16.gmra.mxu0 %v1706
      %v1813 = vpop.f32.mrf.mxu0
      %v1814 = vadd.f32 0.0, %v1813
      %v1815 = vpop.f32.mrf.mxu0
      %v1816 = vpop.f32.mrf.mxu0
      %v1817 = vadd.f32 0.0, %v1816
      %v1818 = vpop.f32.mrf.mxu0
      %1819 = vdwg.mxu0
      %v1820 = vadd.f32 %v1655, %v1790
      %v1821 = vadd.f32 %v1656, %v1793
      %v1822 = vadd.f32 %v1657, %v1798
      %v1823 = vadd.f32 %v1658, %v1801
      %v1824 = vadd.f32 %v1659, %v1806
      %v1825 = vadd.f32 %v1660, %v1809
      %v1826 = vadd.f32 %v1661, %v1814
      %v1827 = vadd.f32 %v1662, %v1817
      %vm1828 = vmand %vm1482, %vm830
      %vm1829 = vmand %vm1483, %vm831
      %vm1830 = vmand %vm1484, %vm832
      %vm1831 = vmand %vm1485, %vm833
      %vm1832 = vmand %vm1486, %vm834
      %vm1833 = vmand %vm1487, %vm835
      %vm1834 = vmand %vm1488, %vm836
      %vm1835 = vmand %vm1489, %vm837
      %v1836 = vsel %vm1828, 1, 0
      %v1837 = vsel %vm1829, 1, 0
      %v1838 = vsel %vm1830, 1, 0
      %v1839 = vsel %vm1831, 1, 0
      %v1840 = vsel %vm1832, 1, 0
      %v1841 = vsel %vm1833, 1, 0
      %v1842 = vsel %vm1834, 1, 0
      %v1843 = vsel %vm1835, 1, 0
      %vm1844 = vcmp.eq.s32.totalorder %v1836, 1
      %vm1845 = vcmp.eq.s32.totalorder %v1837, 1
      %vm1846 = vcmp.eq.s32.totalorder %v1838, 1
      %vm1847 = vcmp.eq.s32.totalorder %v1839, 1
      %vm1848 = vcmp.eq.s32.totalorder %v1840, 1
      %vm1849 = vcmp.eq.s32.totalorder %v1841, 1
      %vm1850 = vcmp.eq.s32.totalorder %v1842, 1
      %vm1851 = vcmp.eq.s32.totalorder %v1843, 1
      %v1852 = vsel %vm1844, %v827, 0.0
      %v1853 = vsel %vm1845, %v826, 0.0
      %v1854 = vsel %vm1846, %v825, 0.0
      %v1855 = vsel %vm1847, %v824, 0.0
      %v1856 = vsel %vm1848, %v823, 0.0
      %v1857 = vsel %vm1849, %v822, 0.0
      %v1858 = vsel %vm1850, %v829, 0.0
      %v1859 = vsel %vm1851, %v828, 0.0
      %v1860 = vld [vmem:[%s2 + $0x200] sm:$0xf]
      %v1861 = vld [vmem:[%s2 + $0x204] sm:$0xf]
      %v1862 = vld [vmem:[%s2 + $0x208] sm:$0xf]
      %v1863 = vld [vmem:[%s2 + $0x20c] sm:$0xf]
      %v1864 = vld [vmem:[%s2 + $0x210] sm:$0xf]
      %v1865 = vld [vmem:[%s2 + $0x214] sm:$0xf]
      %v1866 = vld [vmem:[%s2 + $0x218] sm:$0xf]
      %v1867 = vld [vmem:[%s2 + $0x21c] sm:$0xf]
      %v1868 = vld [vmem:[%s2 + $0x220] sm:$0xf]
      %v1869 = vld [vmem:[%s2 + $0x224] sm:$0xf]
      %v1870 = vld [vmem:[%s2 + $0x228] sm:$0xf]
      %v1871 = vld [vmem:[%s2 + $0x22c] sm:$0xf]
      %v1872 = vld [vmem:[%s2 + $0x230] sm:$0xf]
      %v1873 = vld [vmem:[%s2 + $0x234] sm:$0xf]
      %v1874 = vld [vmem:[%s2 + $0x238] sm:$0xf]
      %v1875 = vld [vmem:[%s2 + $0x23c] sm:$0xf]
      %v1876 = vpack.c.bf16 %v1853, %v1852
      %v1877 = vpack.c.bf16 %v1855, %v1854
      %v1878 = vpack.c.bf16 %v1857, %v1856
      %v1879 = vpack.c.bf16 %v1859, %v1858
      %v1896 = vunpack.c.l.b16 %v1860
      %v1897 = vunpack.c.l.b16 %v1861
      %v1898 = vunpack.c.l.b16 %v1862
      %v1899 = vunpack.c.l.b16 %v1863
      %v1900 = vunpack.c.l.b16 %v1864
      %v1901 = vunpack.c.l.b16 %v1865
      %v1902 = vunpack.c.l.b16 %v1866
      %v1903 = vunpack.c.l.b16 %v1867
      %v1904 = vunpack.c.l.b16 %v1868
      %v1905 = vunpack.c.l.b16 %v1869
      %v1906 = vunpack.c.l.b16 %v1870
      %v1907 = vunpack.c.l.b16 %v1871
      %v1908 = vunpack.c.l.b16 %v1872
      %v1909 = vunpack.c.l.b16 %v1873
      %v1910 = vunpack.c.l.b16 %v1874
      %v1911 = vunpack.c.l.b16 %v1875
      %v1912 = vpack.c.b16 %v1897, %v1896
      %v1913 = vpack.c.b16 %v1899, %v1898
      %v1914 = vpack.c.b16 %v1901, %v1900
      %v1915 = vpack.c.b16 %v1903, %v1902
      %v1916 = vpack.c.b16 %v1905, %v1904
      %v1917 = vpack.c.b16 %v1907, %v1906
      %v1918 = vpack.c.b16 %v1909, %v1908
      %v1919 = vpack.c.b16 %v1911, %v1910
      %1928 = vmatprep.subr.bf16.mxu0 0
      %1929 = vmatpush1.bf16.msra.mxu0 %v1919
      %1930 = vmatprep.subr.bf16.mxu0 0
      %1931 = vmatpush1.bf16.msra.mxu0 %v1918
      %1932 = vmatprep.subr.bf16.mxu0 0
      %1933 = vmatpush1.bf16.msra.mxu0 %v1917
      %1934 = vmatprep.subr.bf16.mxu0 0
      %1935 = vmatpush1.bf16.msra.mxu0 %v1916
      %1936 = vmatprep.subr.bf16.mxu0 0
      %1937 = vmatpush1.bf16.msra.mxu0 %v1915
      %1938 = vmatprep.subr.bf16.mxu0 0
      %1939 = vmatpush1.bf16.msra.mxu0 %v1914
      %1940 = vmatprep.subr.bf16.mxu0 0
      %1941 = vmatpush1.bf16.msra.mxu0 %v1913
      %1942 = vmatprep.subr.bf16.mxu0 0
      %1943 = vmatpush1.bf16.msra.mxu0 %v1912
      %1944 = vmatprep.subr.bf16.mxu0 0
      %1945 = vmatpush2.bf16.msra.mxu0 0
      %1946 = vmatprep.subr.bf16.mxu0 0
      %1947 = vmatpush2.bf16.msra.mxu0 0
      %1948 = vmatprep.subr.bf16.mxu0 0
      %1949 = vmatpush2.bf16.msra.mxu0 0
      %1950 = vmatprep.subr.bf16.mxu0 0
      %1951 = vmatpush2.bf16.msra.mxu0 0
      %1952 = vmatprep.subr.bf16.mxu0 0
      %1953 = vmatpush2.bf16.msra.mxu0 0
      %1954 = vmatprep.subr.bf16.mxu0 0
      %1955 = vmatpush2.bf16.msra.mxu0 0
      %1956 = vmatprep.subr.bf16.mxu0 0
      %1957 = vmatpush2.bf16.msra.mxu0 0
      %1958 = vmatprep.subr.bf16.mxu0 0
      %1959 = vmatpush2.bf16.msra.mxu0 0
      %1960 = vmatprep.mubr.bf16.mxu0 0
      %1961 = vmatmul.mubr.bf16.gmra.mxu0 %v1876
      %v1962 = vpop.f32.mrf.mxu0
      %v1963 = vadd.f32 0.0, %v1962
      %v1964 = vpop.f32.mrf.mxu0
      %v1965 = vpop.f32.mrf.mxu0
      %v1966 = vadd.f32 0.0, %v1965
      %v1967 = vpop.f32.mrf.mxu0
      %1968 = vmatprep.mubr.bf16.mxu0 0
      %1969 = vmatmul.mubr.bf16.gmra.mxu0 %v1877
      %v1970 = vpop.f32.mrf.mxu0
      %v1971 = vadd.f32 0.0, %v1970
      %v1972 = vpop.f32.mrf.mxu0
      %v1973 = vpop.f32.mrf.mxu0
      %v1974 = vadd.f32 0.0, %v1973
      %v1975 = vpop.f32.mrf.mxu0
      %1976 = vmatprep.mubr.bf16.mxu0 0
      %1977 = vmatmul.mubr.bf16.gmra.mxu0 %v1878
      %v1978 = vpop.f32.mrf.mxu0
      %v1979 = vadd.f32 0.0, %v1978
      %v1980 = vpop.f32.mrf.mxu0
      %v1981 = vpop.f32.mrf.mxu0
      %v1982 = vadd.f32 0.0, %v1981
      %v1983 = vpop.f32.mrf.mxu0
      %1984 = vmatprep.mubr.bf16.mxu0 0
      %1985 = vmatmul.mubr.bf16.gmra.mxu0 %v1879
      %v1986 = vpop.f32.mrf.mxu0
      %v1987 = vadd.f32 0.0, %v1986
      %v1988 = vpop.f32.mrf.mxu0
      %v1989 = vpop.f32.mrf.mxu0
      %v1990 = vadd.f32 0.0, %v1989
      %v1991 = vpop.f32.mrf.mxu0
      %1992 = vdwg.mxu0
      %v1993 = vadd.f32 %v1820, %v1963
      %v1994 = vadd.f32 %v1821, %v1966
      %v1995 = vadd.f32 %v1822, %v1971
      %v1996 = vadd.f32 %v1823, %v1974
      %v1997 = vadd.f32 %v1824, %v1979
      %v1998 = vadd.f32 %v1825, %v1982
      %v1999 = vadd.f32 %v1826, %v1987
      %v2000 = vadd.f32 %v1827, %v1990
      %v2001 = vpack.c.bf16 %v1994, %v1993
      %v2002 = vpack.c.bf16 %v1996, %v1995
      %v2003 = vpack.c.bf16 %v1998, %v1997
      %v2004 = vpack.c.bf16 %v2000, %v1999
      %v2009 = vunpack.c.l.b16 %v2001
      %v2010 = vunpack.c.h.b16 %v2001
      %v2011 = vunpack.c.l.b16 %v2002
      %v2012 = vunpack.c.h.b16 %v2002
      %v2013 = vunpack.c.l.b16 %v2003
      %v2014 = vunpack.c.h.b16 %v2003
      %v2015 = vunpack.c.l.b16 %v2004
      %v2016 = vunpack.c.h.b16 %v2004
      %v2017 = vpack.c.b16 %v2009, %v2009
      %v2018 = vpack.c.b16 %v2010, %v2010
      %v2019 = vpack.c.b16 %v2011, %v2011
      %v2020 = vpack.c.b16 %v2012, %v2012
      %v2021 = vpack.c.b16 %v2013, %v2013
      %v2022 = vpack.c.b16 %v2014, %v2014
      %v2023 = vpack.c.b16 %v2015, %v2015
      %v2024 = vpack.c.b16 %v2016, %v2016
      %2033 = vst [vmem:[%s271] sm:$0xf] %v2017
      %2034 = vst [vmem:[%s271 + $0x4] sm:$0xf] %v2018
      %2035 = vst [vmem:[%s271 + $0x8] sm:$0xf] %v2019
      %2036 = vst [vmem:[%s271 + $0xc] sm:$0xf] %v2020
      %2037 = vst [vmem:[%s271 + $0x10] sm:$0xf] %v2021
      %2038 = vst [vmem:[%s271 + $0x14] sm:$0xf] %v2022
      %2039 = vst [vmem:[%s271 + $0x18] sm:$0xf] %v2023
      %2040 = vst [vmem:[%s271 + $0x1c] sm:$0xf] %v2024
      %v2041 = vld [vmem:[%s5] sm:$0x1]
      %v2042 = vadd.f32 %v1993, %v1994
      %v2043 = vadd.f32 %v2042, %v1995
      %v2044 = vadd.f32 %v2043, %v1996
      %v2045 = vadd.f32 %v2044, %v1997
      %v2046 = vadd.f32 %v2045, %v1998
      %v2047 = vadd.f32 %v2046, %v1999
      %v2048 = vadd.f32 %v2047, %v2000
      %v2049 = vrot.slane %v2048, 4
      %v2050 = vadd.f32 %v2048, %v2049
      %v2051 = vrot.slane %v2050, 2
      %v2052 = vadd.f32 %v2050, %v2051
      %v2053 = vrot.slane %v2052, 1
      %v2054 = vadd.f32 %v2052, %v2053
      %v2055 = vadd.f32 %v2041, %v2054
      %2056 = vst [vmem:[%s5] sm:$0x1] %v2055
      %v2057 = vld [vmem:[%s5 + $0x1] sm:$0x1]
      %v2058 = vmul.f32 %v1993, %v1993
      %v2059 = vmul.f32 %v1994, %v1994
      %v2060 = vmul.f32 %v1995, %v1995
      %v2061 = vmul.f32 %v1996, %v1996
      %v2062 = vmul.f32 %v1997, %v1997
      %v2063 = vmul.f32 %v1998, %v1998
      %v2064 = vmul.f32 %v1999, %v1999
      %v2065 = vmul.f32 %v2000, %v2000
      %v2066 = vadd.f32 %v2058, %v2059
      %v2067 = vadd.f32 %v2066, %v2060
      %v2068 = vadd.f32 %v2067, %v2061
      %v2069 = vadd.f32 %v2068, %v2062
      %v2070 = vadd.f32 %v2069, %v2063
      %v2071 = vadd.f32 %v2070, %v2064
      %v2072 = vadd.f32 %v2071, %v2065
      %v2073 = vrot.slane %v2072, 4
      %v2074 = vadd.f32 %v2072, %v2073
      %v2075 = vrot.slane %v2074, 2
      %v2076 = vadd.f32 %v2074, %v2075
      %v2077 = vrot.slane %v2076, 1
      %v2078 = vadd.f32 %v2076, %v2077
      %v2079 = vadd.f32 %v2057, %v2078
      %2080 = vst [vmem:[%s5 + $0x1] sm:$0x1] %v2079
      %p2081 = scmp.eq.s32.totalorder %s18, 1
      // Predicated region
      $region41: #{_lambda_.9} parent=35 // pred_check
        %p2082 = pneg %p2081
      $region42: #{_lambda_.9} parent=35 // pred_check_branch
        %2084 = sbr.rel (%p2082) target = $region44
      $region43: #{_lambda_.9} parent=35 // pred_region
        %v2085 = vld [vmem:[%s5] sm:$0x1]
        %v2086 = vld [vmem:[%s5 + $0x1] sm:$0x1]
        %v2087 = vmul.f32 %v2085, 0.0078125
        %v2088 = vmul.f32 %v2086, 0.0078125
        %v2089 = vmul.f32 %v2087, %v2087
        %v2090 = vsub.f32 %v2088, %v2089
        %v2091 = vld [vmem:[%s3] sm:$0x1]
        %v2092 = vadd.f32 %v2090, 1e-05
        %v2093 = vrsqrt.pop %v2092
        %v2094 = vmul.f32 %v2091, %v2093
        %v2095 = vld [vmem:[%s3 + $0x1] sm:$0x1]
        %v2096 = vmul.f32 %v2087, %v2094
        %v2097 = vsub.f32 %v2095, %v2096
        %2098 = vst [vmem:[%s5] sm:$0x1] %v2094
        %2099 = vst [vmem:[%s5 + $0x1] sm:$0x1] %v2097
      $region44: #{_lambda_.9} parent=35 // pred_fallthru
        _
      %p2100 = scmp.lt.s32.totalorder %s18, 1
      %s2101 = scalar_select %p2100, %s18, 1
      %s2102 = smul.addr %s2101, 8
      %s2103 = smul.addr %s2102, 4
      %s2104 = scalar_lea.vmem %s4, %s2103
      %p2105 = scmp.lt.s32.totalorder %s18, 1
      %s2106 = scalar_select %p2105, %s18, 1
      %s2107 = scalar_lea.vmem %s6, %s2106
      // Predicated region
      $region45: #{_lambda_.9} parent=35 // pred_check
        %p2108 = pneg %p130
      $region46: #{_lambda_.9} parent=35 // pred_check_branch
        %2110 = sbr.rel (%p2108) target = $region48
      $region47: #{_lambda_.9} parent=35 // pred_region
        _
      $region48: #{_lambda_.9} parent=35 // pred_fallthru
        _
      // Predicated region
      $region49: #{_lambda_.9} parent=35 // pred_check
        %p2111 = pneg %p151
      $region50: #{_lambda_.9} parent=35 // pred_check_branch
        %2113 = sbr.rel (%p2111) target = $region52
      $region51: #{_lambda_.9} parent=35 // pred_region
        _
      $region52: #{_lambda_.9} parent=35 // pred_fallthru
        _
      // Predicated region
      $region53: #{_lambda_.9} parent=35 // pred_check
        %p2114 = pneg %p177
      $region54: #{_lambda_.9} parent=35 // pred_check_branch
        %2116 = sbr.rel (%p2114) target = $region56
      $region55: #{_lambda_.9} parent=35 // pred_region
        _
      $region56: #{_lambda_.9} parent=35 // pred_fallthru
        _
      // Predicated region
      $region57: #{_lambda_.9} parent=35 // pred_check
        %p2117 = pneg %p151
      $region58: #{_lambda_.9} parent=35 // pred_check_branch
        %2119 = sbr.rel (%p2117) target = $region60
      $region59: #{_lambda_.9} parent=35 // pred_region
        _
      $region60: #{_lambda_.9} parent=35 // pred_fallthru
        _
    $region36: #{_lambda_.9} parent=5 // pred_fallthru
      _
    %p2120 = scmp.le.s32.totalorder 2, %s13
    // Predicated region
    $region61: #{_lambda_.9} parent=5 // pred_check
      %p2121 = pneg %p2120
    $region62: #{_lambda_.9} parent=5 // pred_check_branch
      %2123 = sbr.rel (%p2121) target = $region64
    $region63: #{_lambda_.9} parent=5 // pred_region
      %s2124 = ssub.s32 %s13, 2
      // Predicated region
      $region65: #{_lambda_.9} parent=63 // pred_check
        %p2125 = pneg %p136
      $region66: #{_lambda_.9} parent=63 // pred_check_branch
        %2127 = sbr.rel (%p2125) target = $region68
      $region67: #{_lambda_.9} parent=63 // pred_region
        %p2128 = scmp.lt.s32.totalorder %s19, 1
        %s2129 = scalar_select %p2128, %s19, 1
        %s2130 = smul.addr %s2129, 8
        %s2131 = smul.addr %s2130, 4
        %s2132 = scalar_lea.vmem %s4, %s2131
      $region68: #{_lambda_.9} parent=63 // pred_fallthru
        _
      // Predicated region
      $region69: #{_lambda_.9} parent=63 // pred_check
        %p2133 = pneg %p183
      $region70: #{_lambda_.9} parent=63 // pred_check_branch
        %2135 = sbr.rel (%p2133) target = $region72
      $region71: #{_lambda_.9} parent=63 // pred_region
        %p2136 = scmp.lt.s32.totalorder %s19, 1
        %s2137 = scalar_select %p2136, %s19, 1
        %s2138 = scalar_lea.vmem %s6, %s2137
      $region72: #{_lambda_.9} parent=63 // pred_fallthru
        _
    $region64: #{_lambda_.9} parent=5 // pred_fallthru
      _
  $region6: #{_lambda_.9} parent=0 // loop_footer
    %s17 = sadd.s32 1, %s13
  $region7: #{_lambda_.9} parent=0 // loop_footer_branch
    %12 = sbr.rel target = $region3
  $region8: #{_lambda_.9} parent=0 // loop_exit
    _

// kernel: _lambda_.13
$region0: #{_lambda_.13}
  #allocation0 [shape = 'u32[]', space=smem, size = 0x4, offset = 0x4, fixed_abs, tag = 'smem constant byte address 0x4 - core index']
  #allocation1 [shape = 'u32[144,128]{1,0:T(1,128)}', space=vmem, size = 0x12000, scoped, tag = 'internal scratch']
  %s0 = inlined_call_operand.vmem [shape: bf16[2,64,128], index: 0, kind: input, shape index: {}]
  %s1 = inlined_call_operand.vmem [shape: f32[2,2,128], index: 1, kind: input, shape index: {}]
  %s2 = inlined_call_operand.vmem [shape: f32[2,64,128], index: 2, kind: input, shape index: {}]
  %s3 = inlined_call_operand.vmem [shape: f32[2,64,128], index: 3, kind: output, shape index: {}]
  %s4 = sld [smem:[#allocation0]]
  $region45: #{_lambda_.13} parent=0
    _
  %s6 = ssub.s32 1, %s4
  %s7 = scalar_select 0, %s6, %s4
  loop: start=0, step=1, limit=4
  $region2: #{_lambda_.13} parent=0 // loop_pre_header
    _
  $region3: #{_lambda_.13} parent=0 // loop_header
    %s9 = sphi 0, %s13
    %p10 = scmp.ge.s32.totalorder %s9, 4
    %s16 = sphi 0, %s28
    %s17 = sphi 0, %s24
    %s18 = sphi 0, %s16
    %s19 = sphi 0, %s17
    %s20 = sphi 0, %s18
    %s21 = sphi 0, %s19
    %s33 = sphi 0, %s35
    %s36 = sphi 0, %s33
    %s37 = sphi 0, %s36
    %s53 = sphi 0, %s37
    %s59 = sphi 0, %s61
    %s62 = sphi 0, %s59
    %s63 = sphi 0, %s62
    %s79 = sphi 0, %s63
    %s87 = sphi 0, %s89
    %s90 = sphi 0, %s87
    %s91 = sphi 0, %s90
    %s107 = sphi 0, %s91
    %s115 = sphi 0, %s117
    %s118 = sphi 0, %s115
    %s119 = sphi 0, %s118
    %s135 = sphi 0, %s119
  $region4: #{_lambda_.13} parent=0 // loop_header_branch
    %12 = sbr.rel (%p10) target = $region8
  $region5: #{_lambda_.13} parent=0 // loop_body
    %s14 = ssub.s32 %s9, 1
    %s15 = ssub.s32 %s9, 2
    %s22 = sadd.s32 1, %s17
    %p23 = scmp.ge.s32.totalorder %s22, 1
    %s24 = scalar_select %p23, 0, %s22
    %s25 = sadd.s32 1, %s16
    %s26 = scalar_select %p23, %s25, %s16
    %p27 = scmp.ge.s32.totalorder %s26, 2
    %s28 = scalar_select %p27, 0, %s26
    %s29 = ssub.s32 %s16, %s28
    %s30 = ssub.s32 %s17, %s24
    %s31 = sor.u32 %s29, %s30
    %p32 = scmp.eq.s32.totalorder %s31, 0
    %s34 = sadd.s32 %s33, 1
    %s35 = scalar_select %p32, %s33, %s34
    %p38 = pneg %p32
    %p39 = scmp.eq.s32.totalorder %s9, 1
    %p40 = por %p38, %p39
    %p41 = scmp.ne.s32.totalorder %s33, %s36
    %p42 = scmp.eq.s32.totalorder %s9, 0
    %p43 = por %p41, %p42
    %p44 = scmp.ne.s32.totalorder %s33, %s36
    %p45 = scmp.eq.s32.totalorder %s14, 1
    %p46 = por %p44, %p45
    %p47 = scmp.ne.s32.totalorder %s36, %s37
    %p48 = scmp.eq.s32.totalorder %s14, 0
    %p49 = por %p47, %p48
    %p50 = scmp.ne.s32.totalorder %s36, %s37
    %p51 = scmp.eq.s32.totalorder %s15, 1
    %p52 = por %p50, %p51
    %p54 = scmp.ne.s32.totalorder %s37, %s53
    %p55 = scmp.eq.s32.totalorder %s15, 0
    %p56 = por %p54, %p55
    %s57 = ssub.s32 %s16, %s28
    %p58 = scmp.eq.s32.totalorder %s57, 0
    %s60 = sadd.s32 %s59, 1
    %s61 = scalar_select %p58, %s59, %s60
    %p64 = pneg %p58
    %p65 = scmp.eq.s32.totalorder %s9, 1
    %p66 = por %p64, %p65
    %p67 = scmp.ne.s32.totalorder %s59, %s62
    %p68 = scmp.eq.s32.totalorder %s9, 0
    %p69 = por %p67, %p68
    %p70 = scmp.ne.s32.totalorder %s59, %s62
    %p71 = scmp.eq.s32.totalorder %s14, 1
    %p72 = por %p70, %p71
    %p73 = scmp.ne.s32.totalorder %s62, %s63
    %p74 = scmp.eq.s32.totalorder %s14, 0
    %p75 = por %p73, %p74
    %p76 = scmp.ne.s32.totalorder %s62, %s63
    %p77 = scmp.eq.s32.totalorder %s15, 1
    %p78 = por %p76, %p77
    %p80 = scmp.ne.s32.totalorder %s63, %s79
    %p81 = scmp.eq.s32.totalorder %s15, 0
    %p82 = por %p80, %p81
    %s83 = ssub.s32 %s16, %s28
    %s84 = ssub.s32 %s17, %s24
    %s85 = sor.u32 %s83, %s84
    %p86 = scmp.eq.s32.totalorder %s85, 0
    %s88 = sadd.s32 %s87, 1
    %s89 = scalar_select %p86, %s87, %s88
    %p92 = pneg %p86
    %p93 = scmp.eq.s32.totalorder %s9, 1
    %p94 = por %p92, %p93
    %p95 = scmp.ne.s32.totalorder %s87, %s90
    %p96 = scmp.eq.s32.totalorder %s9, 0
    %p97 = por %p95, %p96
    %p98 = scmp.ne.s32.totalorder %s87, %s90
    %p99 = scmp.eq.s32.totalorder %s14, 1
    %p100 = por %p98, %p99
    %p101 = scmp.ne.s32.totalorder %s90, %s91
    %p102 = scmp.eq.s32.totalorder %s14, 0
    %p103 = por %p101, %p102
    %p104 = scmp.ne.s32.totalorder %s90, %s91
    %p105 = scmp.eq.s32.totalorder %s15, 1
    %p106 = por %p104, %p105
    %p108 = scmp.ne.s32.totalorder %s91, %s107
    %p109 = scmp.eq.s32.totalorder %s15, 0
    %p110 = por %p108, %p109
    %s111 = ssub.s32 %s16, %s28
    %s112 = ssub.s32 %s17, %s24
    %s113 = sor.u32 %s111, %s112
    %p114 = scmp.eq.s32.totalorder %s113, 0
    %s116 = sadd.s32 %s115, 1
    %s117 = scalar_select %p114, %s115, %s116
    %p120 = pneg %p114
    %p121 = scmp.eq.s32.totalorder %s9, 1
    %p122 = por %p120, %p121
    %p123 = scmp.ne.s32.totalorder %s115, %s118
    %p124 = scmp.eq.s32.totalorder %s9, 0
    %p125 = por %p123, %p124
    %p126 = scmp.ne.s32.totalorder %s115, %s118
    %p127 = scmp.eq.s32.totalorder %s14, 1
    %p128 = por %p126, %p127
    %p129 = scmp.ne.s32.totalorder %s118, %s119
    %p130 = scmp.eq.s32.totalorder %s14, 0
    %p131 = por %p129, %p130
    %p132 = scmp.ne.s32.totalorder %s118, %s119
    %p133 = scmp.eq.s32.totalorder %s15, 1
    %p134 = por %p132, %p133
    %p136 = scmp.ne.s32.totalorder %s119, %s135
    %p137 = scmp.eq.s32.totalorder %s15, 0
    %p138 = por %p136, %p137
    %p139 = scmp.le.s32.totalorder 1, %s9
    %p140 = scmp.lt.s32.totalorder %s9, 3
    %p141 = pnand %p139, %p140
    %p142 = pneg %p141
    // Predicated region
    $region9: #{_lambda_.13} parent=5 // pred_check
      _
    $region10: #{_lambda_.13} parent=5 // pred_check_branch
      %144 = sbr.rel (%p141) target = $region12
    $region11: #{_lambda_.13} parent=5 // pred_region
      %s145 = ssub.s32 %s9, 1
    $region12: #{_lambda_.13} parent=5 // pred_fallthru
      _
    %p146 = scmp.lt.s32.totalorder %s9, 2
    // Predicated region
    $region13: #{_lambda_.13} parent=5 // pred_check
      %p147 = pneg %p146
    $region14: #{_lambda_.13} parent=5 // pred_check_branch
      %149 = sbr.rel (%p147) target = $region16
    $region15: #{_lambda_.13} parent=5 // pred_region
      // Predicated region
      $region17: #{_lambda_.13} parent=15 // pred_check
        %p150 = pneg %p43
      $region18: #{_lambda_.13} parent=15 // pred_check_branch
        %152 = sbr.rel (%p150) target = $region20
      $region19: #{_lambda_.13} parent=15 // pred_region
        %s153 = smul.u32 8, %s17
        %p154 = scmp.lt.s32.totalorder %s16, 1
        %s155 = scalar_select %p154, %s16, 1
        %p156 = scmp.lt.s32.totalorder %s153, 7
        %s157 = scalar_select %p156, %s153, 7
        %s158 = smul.addr %s155, 8
        %s159 = sadd.s32 %s157, %s158
        %s160 = smul.addr %s159, 4
        %s161 = scalar_lea.vmem %s0, %s160
        %s162 = smul.u32 8, %s17
      $region20: #{_lambda_.13} parent=15 // pred_fallthru
        _
      // Predicated region
      $region21: #{_lambda_.13} parent=15 // pred_check
        %p163 = pneg %p69
      $region22: #{_lambda_.13} parent=15 // pred_check_branch
        %165 = sbr.rel (%p163) target = $region24
      $region23: #{_lambda_.13} parent=15 // pred_region
        %p166 = scmp.lt.s32.totalorder %s16, 1
        %s167 = scalar_select %p166, %s16, 1
        %s168 = smul.addr %s167, 2
        %s169 = scalar_lea.vmem %s1, %s168
      $region24: #{_lambda_.13} parent=15 // pred_fallthru
        _
      // Predicated region
      $region25: #{_lambda_.13} parent=15 // pred_check
        %p170 = pneg %p97
      $region26: #{_lambda_.13} parent=15 // pred_check_branch
        %172 = sbr.rel (%p170) target = $region28
      $region27: #{_lambda_.13} parent=15 // pred_region
        %s173 = smul.u32 8, %s17
        %p174 = scmp.lt.s32.totalorder %s16, 1
        %s175 = scalar_select %p174, %s16, 1
        %p176 = scmp.lt.s32.totalorder %s173, 7
        %s177 = scalar_select %p176, %s173, 7
        %s178 = smul.addr %s175, 8
        %s179 = sadd.s32 %s177, %s178
        %s180 = smul.addr %s179, 8
        %s181 = scalar_lea.vmem %s2, %s180
        %s182 = smul.u32 8, %s17
      $region28: #{_lambda_.13} parent=15 // pred_fallthru
        _
    $region16: #{_lambda_.13} parent=5 // pred_fallthru
      _
    %p183 = scmp.le.s32.totalorder 1, %s9
    %p184 = scmp.lt.s32.totalorder %s9, 3
    %p185 = pnand %p183, %p184
    %p186 = pneg %p185
    // Predicated region
    $region29: #{_lambda_.13} parent=5 // pred_check
      _
    $region30: #{_lambda_.13} parent=5 // pred_check_branch
      %188 = sbr.rel (%p185) target = $region32
    $region31: #{_lambda_.13} parent=5 // pred_region
      %s189 = ssub.s32 %s9, 1
      %s190 = smul.u32 8, %s19
      %p191 = scmp.lt.s32.totalorder %s18, 1
      %s192 = scalar_select %p191, %s18, 1
      %p193 = scmp.lt.s32.totalorder %s190, 7
      %s194 = scalar_select %p193, %s190, 7
      %s195 = smul.addr %s192, 8
      %s196 = sadd.s32 %s194, %s195
      %s197 = smul.addr %s196, 4
      %s198 = scalar_lea.vmem %s0, %s197
      %p199 = pneg %p49
      %p200 = pneg %p46
      %p201 = scmp.lt.s32.totalorder %s18, 1
      %s202 = scalar_select %p201, %s18, 1
      %s203 = smul.addr %s202, 2
      %s204 = scalar_lea.vmem %s1, %s203
      %p205 = pneg %p75
      %p206 = pneg %p72
      %s207 = smul.u32 8, %s19
      %p208 = scmp.lt.s32.totalorder %s18, 1
      %s209 = scalar_select %p208, %s18, 1
      %p210 = scmp.lt.s32.totalorder %s207, 7
      %s211 = scalar_select %p210, %s207, 7
      %s212 = smul.addr %s209, 8
      %s213 = sadd.s32 %s211, %s212
      %s214 = smul.addr %s213, 8
      %s215 = scalar_lea.vmem %s2, %s214
      %p216 = pneg %p103
      %p217 = pneg %p100
      %p218 = pneg %p131
      %p219 = pneg %p128
      %s220 = smul.u32 8, %s19
      %p221 = scmp.lt.s32.totalorder %s18, 1
      %s222 = scalar_select %p221, %s18, 1
      %p223 = scmp.lt.s32.totalorder %s220, 7
      %s224 = scalar_select %p223, %s220, 7
      %s225 = smul.addr %s222, 8
      %s226 = sadd.s32 %s224, %s225
      %s227 = smul.addr %s226, 8
      %s228 = scalar_lea.vmem %s3, %s227
      %s229 = smul.u32 8, %s19
      %p230 = scmp.lt.s32.totalorder %s18, 1
      %s231 = scalar_select %p230, %s18, 1
      %p232 = scmp.lt.s32.totalorder %s229, 7
      %s233 = scalar_select %p232, %s229, 7
      %s234 = smul.addr %s231, 8
      %s235 = sadd.s32 %s233, %s234
      %s236 = smul.addr %s235, 4
      %s237 = scalar_lea.vmem %s0, %s236
      %s238 = smul.u32 8, %s19
      %p239 = scmp.lt.s32.totalorder %s18, 1
      %s240 = scalar_select %p239, %s18, 1
      %s241 = smul.addr %s240, 2
      %s242 = scalar_lea.vmem %s1, %s241
      %s243 = smul.u32 8, %s19
      %p244 = scmp.lt.s32.totalorder %s18, 1
      %s245 = scalar_select %p244, %s18, 1
      %p246 = scmp.lt.s32.totalorder %s243, 7
      %s247 = scalar_select %p246, %s243, 7
      %s248 = smul.addr %s245, 8
      %s249 = sadd.s32 %s247, %s248
      %s250 = smul.addr %s249, 8
      %s251 = scalar_lea.vmem %s2, %s250
      %s252 = smul.u32 8, %s19
      %s253 = smul.u32 8, %s19
      %p254 = scmp.lt.s32.totalorder %s18, 1
      %s255 = scalar_select %p254, %s18, 1
      %p256 = scmp.lt.s32.totalorder %s253, 7
      %s257 = scalar_select %p256, %s253, 7
      %s258 = smul.addr %s255, 8
      %s259 = sadd.s32 %s257, %s258
      %s260 = smul.addr %s259, 8
      %s261 = scalar_lea.vmem %s3, %s260
      %s262 = smul.u32 8, %s19
      %v263 = vld [vmem:[%s242] sm:$0x3]
      %v264 = vld [vmem:[%s237] sm:$0xf]
      %v265 = vld [vmem:[%s237 + $0x4] sm:$0xf]
      %v266 = vld [vmem:[%s237 + $0x8] sm:$0xf]
      %v267 = vld [vmem:[%s237 + $0xc] sm:$0xf]
      %v268 = vld [vmem:[%s237 + $0x10] sm:$0xf]
      %v269 = vld [vmem:[%s237 + $0x14] sm:$0xf]
      %v270 = vld [vmem:[%s237 + $0x18] sm:$0xf]
      %v271 = vld [vmem:[%s237 + $0x1c] sm:$0xf]
      %v272 = vunpack.c.l.bf16 %v264
      %v273 = vunpack.c.l.bf16 %v265
      %v274 = vunpack.c.l.bf16 %v266
      %v275 = vunpack.c.l.bf16 %v267
      %v276 = vunpack.c.l.bf16 %v268
      %v277 = vunpack.c.l.bf16 %v269
      %v278 = vunpack.c.l.bf16 %v270
      %v279 = vunpack.c.l.bf16 %v271
      %v280 = vlaneseq
      %v281 = vshrl.u32 %v280, 7
      %v282 = vsub.s32 0, %v281
      %v283 = vrot.slane %v263, %v282
      %v284 = vmul.f32 %v272, %v283
      %v285 = vmul.f32 %v273, %v283
      %v286 = vmul.f32 %v274, %v283
      %v287 = vmul.f32 %v275, %v283
      %v288 = vmul.f32 %v276, %v283
      %v289 = vmul.f32 %v277, %v283
      %v290 = vmul.f32 %v278, %v283
      %v291 = vmul.f32 %v279, %v283
      %v292 = vlaneseq
      %v293 = vshrl.u32 %v292, 7
      %v294 = vsub.s32 1, %v293
      %v295 = vrot.slane %v263, %v294
      %v296 = vadd.f32 %v284, %v295
      %v297 = vadd.f32 %v285, %v295
      %v298 = vadd.f32 %v286, %v295
      %v299 = vadd.f32 %v287, %v295
      %v300 = vadd.f32 %v288, %v295
      %v301 = vadd.f32 %v289, %v295
      %v302 = vadd.f32 %v290, %v295
      %v303 = vadd.f32 %v291, %v295
      %v304 = vld [vmem:[%s251] sm:$0xff]
      %v305 = vld [vmem:[%s251 + $0x8] sm:$0xff]
      %v306 = vld [vmem:[%s251 + $0x10] sm:$0xff]
      %v307 = vld [vmem:[%s251 + $0x18] sm:$0xff]
      %v308 = vld [vmem:[%s251 + $0x20] sm:$0xff]
      %v309 = vld [vmem:[%s251 + $0x28] sm:$0xff]
      %v310 = vld [vmem:[%s251 + $0x30] sm:$0xff]
      %v311 = vld [vmem:[%s251 + $0x38] sm:$0xff]
      %v312 = vadd.f32 %v296, %v304
      %v313 = vadd.f32 %v297, %v305
      %v314 = vadd.f32 %v298, %v306
      %v315 = vadd.f32 %v299, %v307
      %v316 = vadd.f32 %v300, %v308
      %v317 = vadd.f32 %v301, %v309
      %v318 = vadd.f32 %v302, %v310
      %v319 = vadd.f32 %v303, %v311
      %320 = vst [vmem:[%s261] sm:$0xff] %v312
      %321 = vst [vmem:[%s261 + $0x8] sm:$0xff] %v313
      %322 = vst [vmem:[%s261 + $0x10] sm:$0xff] %v314
      %323 = vst [vmem:[%s261 + $0x18] sm:$0xff] %v315
      %324 = vst [vmem:[%s261 + $0x20] sm:$0xff] %v316
      %325 = vst [vmem:[%s261 + $0x28] sm:$0xff] %v317
      %326 = vst [vmem:[%s261 + $0x30] sm:$0xff] %v318
      %327 = vst [vmem:[%s261 + $0x38] sm:$0xff] %v319
      %s328 = smul.u32 8, %s19
      %p329 = scmp.lt.s32.totalorder %s18, 1
      %s330 = scalar_select %p329, %s18, 1
      %p331 = scmp.lt.s32.totalorder %s328, 7
      %s332 = scalar_select %p331, %s328, 7
      %s333 = smul.addr %s330, 8
      %s334 = sadd.s32 %s332, %s333
      %s335 = smul.addr %s334, 8
      %s336 = scalar_lea.vmem %s3, %s335
      // Predicated region
      $region33: #{_lambda_.13} parent=31 // pred_check
        %p337 = pneg %p128
      $region34: #{_lambda_.13} parent=31 // pred_check_branch
        %339 = sbr.rel (%p337) target = $region36
      $region35: #{_lambda_.13} parent=31 // pred_region
        %s340 = smul.u32 8, %s19
      $region36: #{_lambda_.13} parent=31 // pred_fallthru
        _
    $region32: #{_lambda_.13} parent=5 // pred_fallthru
      _
    %p341 = scmp.le.s32.totalorder 2, %s9
    // Predicated region
    $region37: #{_lambda_.13} parent=5 // pred_check
      %p342 = pneg %p341
    $region38: #{_lambda_.13} parent=5 // pred_check_branch
      %344 = sbr.rel (%p342) target = $region40
    $region39: #{_lambda_.13} parent=5 // pred_region
      %s345 = ssub.s32 %s9, 2
      // Predicated region
      $region41: #{_lambda_.13} parent=39 // pred_check
        %p346 = pneg %p134
      $region42: #{_lambda_.13} parent=39 // pred_check_branch
        %348 = sbr.rel (%p346) target = $region44
      $region43: #{_lambda_.13} parent=39 // pred_region
        %s349 = smul.u32 8, %s21
        %p350 = scmp.lt.s32.totalorder %s20, 1
        %s351 = scalar_select %p350, %s20, 1
        %p352 = scmp.lt.s32.totalorder %s349, 7
        %s353 = scalar_select %p352, %s349, 7
        %s354 = smul.addr %s351, 8
        %s355 = sadd.s32 %s353, %s354
        %s356 = smul.addr %s355, 8
        %s357 = scalar_lea.vmem %s3, %s356
      $region44: #{_lambda_.13} parent=39 // pred_fallthru
        _
    $region40: #{_lambda_.13} parent=5 // pred_fallthru
      _
  $region6: #{_lambda_.13} parent=0 // loop_footer
    %s13 = sadd.s32 1, %s9
  $region7: #{_lambda_.13} parent=0 // loop_footer_branch
    %8 = sbr.rel target = $region3
  $region8: #{_lambda_.13} parent=0 // loop_exit
    _

</llo_original>
